<compile_context>
chip_gen: v5e
topology: v5e:2x2
jax: 0.10.0
libtpu: 0.0.40
codegen_flags: <defaults>
</compile_context>

<pallas_src>
import jax
import jax.numpy as jnp
from jax.experimental import pallas as pl
from jax.experimental.pallas import tpu as pltpu


def _ceil_to(x, m):
    return (x + m - 1) // m * m


# ----------------------------- Fused kernel ---------------------------------
def fused_kernel(x_ref, w1_ref, b1_ref, w3_ref, b3_ref,
                 w5_ref, b5_ref, w6_ref, b6_ref,
                 o_ref, feat_ref, acc_ref):
    # x_ref   : (4, 4, N, TB)  [pq half-res sub-pos, rs full-res sub-pos, n, batch-lane]
    # w1_ref  : SMEM (6,)      b1_ref: SMEM (6,)     (conv1, 1x1, 1->6)
    # w3_ref  : SMEM (16, 6)   b3_ref: SMEM (16,)    (conv3, 1x1, 6->16)
    # w5_ref  : (H1, Kt)       dense5 weight slab, natural torch (out, in) layout
    # b5_ref  : (H1, 1)        w6_ref: (A, H1)       b6_ref: (A, 1)
    # o_ref   : (A, TB)        transposed output block
    # feat_ref: (CT, Kt, TB)   pooled features, K-major / batch on lanes   [scratch]
    # acc_ref : (H1, TB)       dense5 accumulator                          [scratch]
    ct = pl.program_id(1)
    N = x_ref.shape[2]
    cb = feat_ref.shape[1] // N          # feature-map channels per K slab

    @pl.when(ct == 0)
    def _():
        # ---- front-end (pure VPU): conv1 -> pool2 -> conv3 -> pool4 ----
        x = x_ref[...]                                   # (4, 4, N, TB)
        xmax = jnp.max(x, axis=1)                        # (4, N, TB) over 2x2 full-res
        xmin = jnp.min(x, axis=1)                        # (4, N, TB)
        # maxpool2(conv1(x)) exactly: b1 + max(w1*max(x), w1*min(x))  (affine, 1 in-chan)
        p2 = [jnp.maximum(w1_ref[m] * xmax, w1_ref[m] * xmin) + b1_ref[m]
              for m in range(6)]                         # 6 x (4, N, TB)
        for c in range(16):                              # conv3: 6 scalar MACs / out chan
            z = w3_ref[c, 0] * p2[0]
            for m in range(1, 6):
                z = z + w3_ref[c, m] * p2[m]
            z = z + b3_ref[c]
            # pool4: max over the 4 half-res sub-positions; row (c%cb)*N + n of
            # slab c//cb is flat (torch NCHW) feature index c*N + n.
            feat_ref[c // cb, pl.ds((c % cb) * N, N), :] = jnp.max(z, axis=0)
        acc_ref[...] = jnp.zeros_like(acc_ref)

    # ---- dense5 partial sum for this K slab: single MXU matmul ----
    #   acc (H1, TB) += w5_slab (H1, Kt) @ feat_slab (Kt, TB)
    acc_ref[...] += jnp.dot(w5_ref[...], feat_ref[ct],
                            preferred_element_type=jnp.float32)

    # ---- epilogue: bias + ReLU + dense6 (out^T = w6 @ h + b6) ----
    @pl.when(ct == pl.num_programs(1) - 1)
    def _():
        h = jnp.maximum(acc_ref[...] + b5_ref[...], 0.0)              # (H1, TB)
        o_ref[...] = (jnp.dot(w6_ref[...], h,
                              preferred_element_type=jnp.float32)
                      + b6_ref[...]).astype(o_ref.dtype)              # (A, TB)


# ----------------------------- Tile selection & compiler params -------------
def _vmem_capacity_bytes():
    try:
        return int(pltpu.get_tpu_info().vmem_capacity_bytes)
    except Exception:
        return 64 << 20   # conservative (v7x per-core physical VMEM)


def _pick_cb(N, H1):
    """Feature-map channels per dense5 K-slab (Kt = cb*N).

    Uses padded (8,128)-tile accounting for the double-buffered w5 slab and a
    per-generation budget (8 MiB on 64-MiB-VMEM chips, 24 MiB on 128-MiB ones).
    Kt must be a multiple of 128 unless cb == 16 (single full-width slab).
    """
    cap = _vmem_capacity_bytes()
    budget = (8 << 20) if cap <= (64 << 20) else (24 << 20)
    valid = [c for c in (16, 8, 4, 2, 1) if c == 16 or (c * N) % 128 == 0]
    for c in valid:
        slab = 2 * 4 * _ceil_to(H1, 8) * _ceil_to(c * N, 128)   # double-buffered
        if slab <= budget:
            return c
    return valid[-1]


def _pick_tb(B):
    """Batch-tile (lane) width: must equal B or be a multiple of 128."""
    if B <= 128:
        return B
    for cand in (256, 128):
        if B % cand == 0:
            return cand
    return B


def _mosaic_params(N, H1, A, cb, tb, CT):
    lanes_tb = _ceil_to(tb, 128)
    Kt = cb * N
    x_blk = 2 * 16 * _ceil_to(N, 8) * lanes_tb * 4                 # (4,4,N,tb) dbl-buf
    w5_blk = 2 * _ceil_to(H1, 8) * _ceil_to(Kt, 128) * 4           # dbl-buf
    feat = CT * _ceil_to(Kt, 8) * lanes_tb * 4
    acc = _ceil_to(H1, 8) * lanes_tb * 4
    small = 2 * 4 * (_ceil_to(H1, 8) * 128 + _ceil_to(A, 8) * 128
                     + _ceil_to(A, 8) * _ceil_to(H1, 128)
                     + _ceil_to(A, 8) * lanes_tb)
    tmp = 40 * _ceil_to(N, 8) * lanes_tb * 4                       # front-end temporaries
    need = x_blk + w5_blk + feat + acc + small + tmp
    cap = _vmem_capacity_bytes()
    limit = int(min(cap * 7 // 8, max(32 << 20, need + need // 2)))
    return pltpu.CompilerParams(
        dimension_semantics=("parallel", "arbitrary"),
        vmem_limit_bytes=limit)


# ----------------------------- Forward (glue + fused kernel) ----------------
def model_forward(x_nchw, params, cb=None, tb=None):
    w1, b1, w3, b3, w5, b5, w6, b6 = params
    B, C, H, W = x_nchw.shape
    assert C == 1 and H % 4 == 0 and W % 4 == 0
    Hq, Wq = H // 4, W // 4
    N = Hq * Wq
    H1, F = w5.shape
    A = w6.shape[0]
    assert F == 16 * N

    if tb is None:
        tb = _pick_tb(B)
    assert B % tb == 0 and (tb == B or tb % 128 == 0)
    BT = B // tb

    if cb is None:
        cb = _pick_cb(N, H1)
    assert 16 % cb == 0 and (cb == 16 or (cb * N) % 128 == 0)
    CT = 16 // cb
    Kt = cb * N

    # NCHW -> (pq, rs, N, B): full-res pixel (4i+2p+r, 4j+2q+s) goes to
    #   [2p+q, 2r+s, i*Wq+j, b]; the batch sits on the lane axis.
    x = x_nchw[:, 0].reshape(B, Hq, 2, 2, Wq, 2, 2)       # (b, i, p, r, j, q, s)
    x_r = x.transpose(2, 5, 3, 6, 1, 4, 0).reshape(4, 4, N, B)

    # Weights stay in their natural torch layouts (no per-call HBM transposes).
    w1_s = w1.reshape(6)
    b1_s = b1.reshape(6)
    w3_s = w3.reshape(16, 6)
    b3_s = b3.reshape(16)
    b5_k = b5.reshape(H1, 1)
    b6_k = b6.reshape(A, 1)

    smem = pltpu.MemorySpace.SMEM
    out_t = pl.pallas_call(
        fused_kernel,
        out_shape=jax.ShapeDtypeStruct((A, B), jnp.float32),
        grid_spec=pltpu.PrefetchScalarGridSpec(
            num_scalar_prefetch=0,
            grid=(BT, CT),
            in_specs=[
                pl.BlockSpec((4, 4, N, tb), lambda bt, ct: (0, 0, 0, bt)),
                pl.BlockSpec((6,), lambda bt, ct: (0,), memory_space=smem),
                pl.BlockSpec((6,), lambda bt, ct: (0,), memory_space=smem),
                pl.BlockSpec((16, 6), lambda bt, ct: (0, 0), memory_space=smem),
                pl.BlockSpec((16,), lambda bt, ct: (0,), memory_space=smem),
                pl.BlockSpec((H1, Kt), lambda bt, ct: (0, ct)),   # w5 slab (lane-dense Kt)
                pl.BlockSpec((H1, 1), lambda bt, ct: (0, 0)),
                pl.BlockSpec((A, H1), lambda bt, ct: (0, 0)),
                pl.BlockSpec((A, 1), lambda bt, ct: (0, 0)),
            ],
            out_specs=pl.BlockSpec((A, tb), lambda bt, ct: (0, bt)),
            scratch_shapes=[
                pltpu.VMEM((CT, Kt, tb), jnp.float32),   # pooled features (K-major)
                pltpu.VMEM((H1, tb), jnp.float32),       # dense5 accumulator
            ],
        ),
        compiler_params=_mosaic_params(N, H1, A, cb, tb, CT),
    )(x_r, w1_s, b1_s, w3_s, b3_s, w5, b5_k, w6, b6_k)
    return out_t.T   # (B, A); tiny transpose outside the kernel


# ----------------------------- Pure-JAX reference ----------------------------
def reference_forward(x_nchw, params):
    w1, b1, w3, b3, w5, b5, w6, b6 = params
    B, _, H, W = x_nchw.shape
    z = x_nchw[:, :1] * w1.reshape(1, 6, 1, 1) + b1.reshape(1, 6, 1, 1)     # conv1
    z = z.reshape(B, 6, H // 2, 2, W // 2, 2).max(axis=(3, 5))              # pool2
    z = jnp.einsum('bchw,oc->bohw', z, w3.reshape(16, 6)) + b3.reshape(1, 16, 1, 1)
    z = z.reshape(B, 16, H // 4, 2, W // 4, 2).max(axis=(3, 5))             # pool4
    z = z.reshape(B, -1)
    z = jnp.maximum(z @ w5.T + b5, 0.0)
    z = z @ w6.T + b6
    return z


# ----------------------------- Deterministic parameter init ------------------
def init_params(key, H, W, num_articles):
    assert num_articles >= 2
    F = 16 * (H // 4) * (W // 4)
    H1 = num_articles // 2   # original uses num_articles / 2 (float); use int div
    ks = jax.random.split(key, 8)

    def u(k, shape, fan_in):
        bound = 1.0 / float(fan_in) ** 0.5
        return jax.random.uniform(k, shape, jnp.float32, -bound, bound)

    w1 = u(ks[0], (6, 1, 1, 1), 1)
    b1 = u(ks[1], (6,), 1)
    w3 = u(ks[2], (16, 6, 1, 1), 6)
    b3 = u(ks[3], (16,), 6)
    w5 = u(ks[4], (H1, F), F)
    b5 = u(ks[5], (H1,), F)
    w6 = u(ks[6], (num_articles, H1), H1)
    b6 = u(ks[7], (num_articles,), H1)
    return (w1, b1, w3, b3, w5, b5, w6, b6)


if __name__ == "__main__":
    def run_case(B, H, W, num_articles, cb=None, seed=0):
        key = jax.random.PRNGKey(seed)
        kx, kp = jax.random.split(key)
        x = jax.random.normal(kx, (B, 1, H, W), jnp.float32)
        params = init_params(kp, H, W, num_articles)
        out = jax.jit(lambda xx, pp: model_forward(xx, pp, cb=cb))(x, params)
        out = jax.block_until_ready(out)
        ref = reference_forward(x, params)
        assert out.shape == (B, num_articles)
        assert jnp.allclose(out, ref, rtol=1e-4, atol=1e-4), (out, ref)

    # Primary demo (auto tiling -> single K slab at this tiny size).
    run_case(2, 16, 16, 8, cb=None, seed=0)
    # Forced smaller K slabs to exercise the multi-step K accumulation path.
    run_case(3, 32, 32, 16, cb=4, seed=1)
    # Kt = 128-wide slabs, odd H1, batch 4.
    run_case(4, 16, 16, 6, cb=8, seed=2)
    print("KERNEL_OK")
</pallas_src>

<mosaic_0001>
module attributes {stable_mosaic.version = 11 : i64} {
  func.func @fused_kernel(%arg0: i32, %arg1: i32, %arg2: memref<4x4x16x2xf32, #tpu.memory_space<vmem>>, %arg3: memref<6xf32, #tpu.memory_space<smem>>, %arg4: memref<6xf32, #tpu.memory_space<smem>>, %arg5: memref<16x6xf32, #tpu.memory_space<smem>>, %arg6: memref<16xf32, #tpu.memory_space<smem>>, %arg7: memref<4x256xf32, #tpu.memory_space<vmem>>, %arg8: memref<4x1xf32, #tpu.memory_space<vmem>>, %arg9: memref<8x4xf32, #tpu.memory_space<vmem>>, %arg10: memref<8x1xf32, #tpu.memory_space<vmem>>, %arg11: memref<8x2xf32, #tpu.memory_space<vmem>>, %arg12: memref<1x256x2xf32, #tpu.memory_space<vmem>>, %arg13: memref<4x2xf32, #tpu.memory_space<vmem>>) attributes {dimension_semantics = [#tpu.dimension_semantics<parallel>, #tpu.dimension_semantics<arbitrary>], iteration_bounds = array<i64: 1, 1>, scalar_prefetch = 0 : i64, scratch_operands = 2 : i64, tpu.core_type = #tpu.core_type<tc>, window_params = [{transform_indices = @transform_0, window_bounds = array<i64: 4, 4, 16, 2>}, {transform_indices = @transform_1, window_bounds = array<i64: 6>}, {transform_indices = @transform_2, window_bounds = array<i64: 6>}, {transform_indices = @transform_3, window_bounds = array<i64: 16, 6>}, {transform_indices = @transform_4, window_bounds = array<i64: 16>}, {transform_indices = @transform_5, window_bounds = array<i64: 4, 256>}, {pipeline_mode = #tpu.pipeline_mode<synchronous>, transform_indices = @transform_6, window_bounds = array<i64: 4, 1>}, {pipeline_mode = #tpu.pipeline_mode<synchronous>, transform_indices = @transform_7, window_bounds = array<i64: 8, 4>}, {pipeline_mode = #tpu.pipeline_mode<synchronous>, transform_indices = @transform_8, window_bounds = array<i64: 8, 1>}, {transform_indices = @transform_9, window_bounds = array<i64: 8, 2>}]} {
    %c0_i32 = arith.constant 0 : i32
    %0 = arith.cmpi eq, %arg1, %c0_i32 : i32
    %1 = arith.extui %0 : i1 to i32
    %c0_i32_0 = arith.constant 0 : i32
    %2 = arith.cmpi ne, %1, %c0_i32_0 : i32
    scf.if %2 {
      %c0_10 = arith.constant 0 : index
      %c0_11 = arith.constant 0 : index
      %c0_12 = arith.constant 0 : index
      %c0_13 = arith.constant 0 : index
      %14 = vector.load %arg2[%c0_10, %c0_11, %c0_12, %c0_13] : memref<4x4x16x2xf32, #tpu.memory_space<vmem>>, vector<4x4x16x2xf32>
      %cst_14 = arith.constant dense<0xFF800000> : vector<4x16x2xf32>
      %15 = vector.multi_reduction <maximumf>, %14, %cst_14 [1] : vector<4x4x16x2xf32> to vector<4x16x2xf32>
      %cst_15 = arith.constant dense<0x7F800000> : vector<4x16x2xf32>
      %16 = vector.multi_reduction <minimumf>, %14, %cst_15 [1] : vector<4x4x16x2xf32> to vector<4x16x2xf32>
      %c0_16 = arith.constant 0 : index
      %17 = memref.load %arg3[%c0_16] : memref<6xf32, #tpu.memory_space<smem>>
      %18 = vector.broadcast %17 : f32 to vector<4x16x2xf32>
      %19 = arith.mulf %18, %15 : vector<4x16x2xf32>
      %c0_17 = arith.constant 0 : index
      %20 = memref.load %arg3[%c0_17] : memref<6xf32, #tpu.memory_space<smem>>
      %21 = vector.broadcast %20 : f32 to vector<4x16x2xf32>
      %22 = arith.mulf %21, %16 : vector<4x16x2xf32>
      %23 = arith.maximumf %19, %22 : vector<4x16x2xf32>
      %c0_18 = arith.constant 0 : index
      %24 = memref.load %arg4[%c0_18] : memref<6xf32, #tpu.memory_space<smem>>
      %25 = vector.broadcast %24 : f32 to vector<4x16x2xf32>
      %26 = arith.addf %23, %25 : vector<4x16x2xf32>
      %c1 = arith.constant 1 : index
      %27 = memref.load %arg3[%c1] : memref<6xf32, #tpu.memory_space<smem>>
      %28 = vector.broadcast %27 : f32 to vector<4x16x2xf32>
      %29 = arith.mulf %28, %15 : vector<4x16x2xf32>
      %c1_19 = arith.constant 1 : index
      %30 = memref.load %arg3[%c1_19] : memref<6xf32, #tpu.memory_space<smem>>
      %31 = vector.broadcast %30 : f32 to vector<4x16x2xf32>
      %32 = arith.mulf %31, %16 : vector<4x16x2xf32>
      %33 = arith.maximumf %29, %32 : vector<4x16x2xf32>
      %c1_20 = arith.constant 1 : index
      %34 = memref.load %arg4[%c1_20] : memref<6xf32, #tpu.memory_space<smem>>
      %35 = vector.broadcast %34 : f32 to vector<4x16x2xf32>
      %36 = arith.addf %33, %35 : vector<4x16x2xf32>
      %c2 = arith.constant 2 : index
      %37 = memref.load %arg3[%c2] : memref<6xf32, #tpu.memory_space<smem>>
      %38 = vector.broadcast %37 : f32 to vector<4x16x2xf32>
      %39 = arith.mulf %38, %15 : vector<4x16x2xf32>
      %c2_21 = arith.constant 2 : index
      %40 = memref.load %arg3[%c2_21] : memref<6xf32, #tpu.memory_space<smem>>
      %41 = vector.broadcast %40 : f32 to vector<4x16x2xf32>
      %42 = arith.mulf %41, %16 : vector<4x16x2xf32>
      %43 = arith.maximumf %39, %42 : vector<4x16x2xf32>
      %c2_22 = arith.constant 2 : index
      %44 = memref.load %arg4[%c2_22] : memref<6xf32, #tpu.memory_space<smem>>
      %45 = vector.broadcast %44 : f32 to vector<4x16x2xf32>
      %46 = arith.addf %43, %45 : vector<4x16x2xf32>
      %c3 = arith.constant 3 : index
      %47 = memref.load %arg3[%c3] : memref<6xf32, #tpu.memory_space<smem>>
      %48 = vector.broadcast %47 : f32 to vector<4x16x2xf32>
      %49 = arith.mulf %48, %15 : vector<4x16x2xf32>
      %c3_23 = arith.constant 3 : index
      %50 = memref.load %arg3[%c3_23] : memref<6xf32, #tpu.memory_space<smem>>
      %51 = vector.broadcast %50 : f32 to vector<4x16x2xf32>
      %52 = arith.mulf %51, %16 : vector<4x16x2xf32>
      %53 = arith.maximumf %49, %52 : vector<4x16x2xf32>
      %c3_24 = arith.constant 3 : index
      %54 = memref.load %arg4[%c3_24] : memref<6xf32, #tpu.memory_space<smem>>
      %55 = vector.broadcast %54 : f32 to vector<4x16x2xf32>
      %56 = arith.addf %53, %55 : vector<4x16x2xf32>
      %c4 = arith.constant 4 : index
      %57 = memref.load %arg3[%c4] : memref<6xf32, #tpu.memory_space<smem>>
      %58 = vector.broadcast %57 : f32 to vector<4x16x2xf32>
      %59 = arith.mulf %58, %15 : vector<4x16x2xf32>
      %c4_25 = arith.constant 4 : index
      %60 = memref.load %arg3[%c4_25] : memref<6xf32, #tpu.memory_space<smem>>
      %61 = vector.broadcast %60 : f32 to vector<4x16x2xf32>
      %62 = arith.mulf %61, %16 : vector<4x16x2xf32>
      %63 = arith.maximumf %59, %62 : vector<4x16x2xf32>
      %c4_26 = arith.constant 4 : index
      %64 = memref.load %arg4[%c4_26] : memref<6xf32, #tpu.memory_space<smem>>
      %65 = vector.broadcast %64 : f32 to vector<4x16x2xf32>
      %66 = arith.addf %63, %65 : vector<4x16x2xf32>
      %c5 = arith.constant 5 : index
      %67 = memref.load %arg3[%c5] : memref<6xf32, #tpu.memory_space<smem>>
      %68 = vector.broadcast %67 : f32 to vector<4x16x2xf32>
      %69 = arith.mulf %68, %15 : vector<4x16x2xf32>
      %c5_27 = arith.constant 5 : index
      %70 = memref.load %arg3[%c5_27] : memref<6xf32, #tpu.memory_space<smem>>
      %71 = vector.broadcast %70 : f32 to vector<4x16x2xf32>
      %72 = arith.mulf %71, %16 : vector<4x16x2xf32>
      %73 = arith.maximumf %69, %72 : vector<4x16x2xf32>
      %c5_28 = arith.constant 5 : index
      %74 = memref.load %arg4[%c5_28] : memref<6xf32, #tpu.memory_space<smem>>
      %75 = vector.broadcast %74 : f32 to vector<4x16x2xf32>
      %76 = arith.addf %73, %75 : vector<4x16x2xf32>
      %c0_29 = arith.constant 0 : index
      %c0_30 = arith.constant 0 : index
      %77 = memref.load %arg5[%c0_29, %c0_30] : memref<16x6xf32, #tpu.memory_space<smem>>
      %78 = vector.broadcast %77 : f32 to vector<4x16x2xf32>
      %79 = arith.mulf %78, %26 : vector<4x16x2xf32>
      %c0_31 = arith.constant 0 : index
      %c1_32 = arith.constant 1 : index
      %80 = memref.load %arg5[%c0_31, %c1_32] : memref<16x6xf32, #tpu.memory_space<smem>>
      %81 = vector.broadcast %80 : f32 to vector<4x16x2xf32>
      %82 = arith.mulf %81, %36 : vector<4x16x2xf32>
      %83 = arith.addf %79, %82 : vector<4x16x2xf32>
      %c0_33 = arith.constant 0 : index
      %c2_34 = arith.constant 2 : index
      %84 = memref.load %arg5[%c0_33, %c2_34] : memref<16x6xf32, #tpu.memory_space<smem>>
      %85 = vector.broadcast %84 : f32 to vector<4x16x2xf32>
      %86 = arith.mulf %85, %46 : vector<4x16x2xf32>
      %87 = arith.addf %83, %86 : vector<4x16x2xf32>
      %c0_35 = arith.constant 0 : index
      %c3_36 = arith.constant 3 : index
      %88 = memref.load %arg5[%c0_35, %c3_36] : memref<16x6xf32, #tpu.memory_space<smem>>
      %89 = vector.broadcast %88 : f32 to vector<4x16x2xf32>
      %90 = arith.mulf %89, %56 : vector<4x16x2xf32>
      %91 = arith.addf %87, %90 : vector<4x16x2xf32>
      %c0_37 = arith.constant 0 : index
      %c4_38 = arith.constant 4 : index
      %92 = memref.load %arg5[%c0_37, %c4_38] : memref<16x6xf32, #tpu.memory_space<smem>>
      %93 = vector.broadcast %92 : f32 to vector<4x16x2xf32>
      %94 = arith.mulf %93, %66 : vector<4x16x2xf32>
      %95 = arith.addf %91, %94 : vector<4x16x2xf32>
      %c0_39 = arith.constant 0 : index
      %c5_40 = arith.constant 5 : index
      %96 = memref.load %arg5[%c0_39, %c5_40] : memref<16x6xf32, #tpu.memory_space<smem>>
      %97 = vector.broadcast %96 : f32 to vector<4x16x2xf32>
      %98 = arith.mulf %97, %76 : vector<4x16x2xf32>
      %99 = arith.addf %95, %98 : vector<4x16x2xf32>
      %c0_41 = arith.constant 0 : index
      %100 = memref.load %arg6[%c0_41] : memref<16xf32, #tpu.memory_space<smem>>
      %101 = vector.broadcast %100 : f32 to vector<4x16x2xf32>
      %102 = arith.addf %99, %101 : vector<4x16x2xf32>
      %cst_42 = arith.constant dense<0xFF800000> : vector<16x2xf32>
      %103 = vector.multi_reduction <maximumf>, %102, %cst_42 [0] : vector<4x16x2xf32> to vector<16x2xf32>
      %c0_43 = arith.constant 0 : index
      %c0_44 = arith.constant 0 : index
      %c0_45 = arith.constant 0 : index
      %104 = vector.load %arg12[%c0_43, %c0_44, %c0_45] : memref<1x256x2xf32, #tpu.memory_space<vmem>>, vector<1x16x2xf32>
      %105 = vector.shape_cast %104 : vector<1x16x2xf32> to vector<16x2xf32>
      %106 = vector.shape_cast %103 : vector<16x2xf32> to vector<1x16x2xf32>
      tpu.vector_store %arg12[%c0_43, %c0_44, %c0_45], %106 {strides = array<i32>} : memref<1x256x2xf32, #tpu.memory_space<vmem>>, vector<1x16x2xf32>,
      %c1_46 = arith.constant 1 : index
      %c0_47 = arith.constant 0 : index
      %107 = memref.load %arg5[%c1_46, %c0_47] : memref<16x6xf32, #tpu.memory_space<smem>>
      %108 = vector.broadcast %107 : f32 to vector<4x16x2xf32>
      %109 = arith.mulf %108, %26 : vector<4x16x2xf32>
      %c1_48 = arith.constant 1 : index
      %c1_49 = arith.constant 1 : index
      %110 = memref.load %arg5[%c1_48, %c1_49] : memref<16x6xf32, #tpu.memory_space<smem>>
      %111 = vector.broadcast %110 : f32 to vector<4x16x2xf32>
      %112 = arith.mulf %111, %36 : vector<4x16x2xf32>
      %113 = arith.addf %109, %112 : vector<4x16x2xf32>
      %c1_50 = arith.constant 1 : index
      %c2_51 = arith.constant 2 : index
      %114 = memref.load %arg5[%c1_50, %c2_51] : memref<16x6xf32, #tpu.memory_space<smem>>
      %115 = vector.broadcast %114 : f32 to vector<4x16x2xf32>
      %116 = arith.mulf %115, %46 : vector<4x16x2xf32>
      %117 = arith.addf %113, %116 : vector<4x16x2xf32>
      %c1_52 = arith.constant 1 : index
      %c3_53 = arith.constant 3 : index
      %118 = memref.load %arg5[%c1_52, %c3_53] : memref<16x6xf32, #tpu.memory_space<smem>>
      %119 = vector.broadcast %118 : f32 to vector<4x16x2xf32>
      %120 = arith.mulf %119, %56 : vector<4x16x2xf32>
      %121 = arith.addf %117, %120 : vector<4x16x2xf32>
      %c1_54 = arith.constant 1 : index
      %c4_55 = arith.constant 4 : index
      %122 = memref.load %arg5[%c1_54, %c4_55] : memref<16x6xf32, #tpu.memory_space<smem>>
      %123 = vector.broadcast %122 : f32 to vector<4x16x2xf32>
      %124 = arith.mulf %123, %66 : vector<4x16x2xf32>
      %125 = arith.addf %121, %124 : vector<4x16x2xf32>
      %c1_56 = arith.constant 1 : index
      %c5_57 = arith.constant 5 : index
      %126 = memref.load %arg5[%c1_56, %c5_57] : memref<16x6xf32, #tpu.memory_space<smem>>
      %127 = vector.broadcast %126 : f32 to vector<4x16x2xf32>
      %128 = arith.mulf %127, %76 : vector<4x16x2xf32>
      %129 = arith.addf %125, %128 : vector<4x16x2xf32>
      %c1_58 = arith.constant 1 : index
      %130 = memref.load %arg6[%c1_58] : memref<16xf32, #tpu.memory_space<smem>>
      %131 = vector.broadcast %130 : f32 to vector<4x16x2xf32>
      %132 = arith.addf %129, %131 : vector<4x16x2xf32>
      %cst_59 = arith.constant dense<0xFF800000> : vector<16x2xf32>
      %133 = vector.multi_reduction <maximumf>, %132, %cst_59 [0] : vector<4x16x2xf32> to vector<16x2xf32>
      %c0_60 = arith.constant 0 : index
      %c16 = arith.constant 16 : index
      %c0_61 = arith.constant 0 : index
      %134 = vector.load %arg12[%c0_60, %c16, %c0_61] : memref<1x256x2xf32, #tpu.memory_space<vmem>>, vector<1x16x2xf32>
      %135 = vector.shape_cast %134 : vector<1x16x2xf32> to vector<16x2xf32>
      %136 = vector.shape_cast %133 : vector<16x2xf32> to vector<1x16x2xf32>
      tpu.vector_store %arg12[%c0_60, %c16, %c0_61], %136 {strides = array<i32>} : memref<1x256x2xf32, #tpu.memory_space<vmem>>, vector<1x16x2xf32>,
      %c2_62 = arith.constant 2 : index
      %c0_63 = arith.constant 0 : index
      %137 = memref.load %arg5[%c2_62, %c0_63] : memref<16x6xf32, #tpu.memory_space<smem>>
      %138 = vector.broadcast %137 : f32 to vector<4x16x2xf32>
      %139 = arith.mulf %138, %26 : vector<4x16x2xf32>
      %c2_64 = arith.constant 2 : index
      %c1_65 = arith.constant 1 : index
      %140 = memref.load %arg5[%c2_64, %c1_65] : memref<16x6xf32, #tpu.memory_space<smem>>
      %141 = vector.broadcast %140 : f32 to vector<4x16x2xf32>
      %142 = arith.mulf %141, %36 : vector<4x16x2xf32>
      %143 = arith.addf %139, %142 : vector<4x16x2xf32>
      %c2_66 = arith.constant 2 : index
      %c2_67 = arith.constant 2 : index
      %144 = memref.load %arg5[%c2_66, %c2_67] : memref<16x6xf32, #tpu.memory_space<smem>>
      %145 = vector.broadcast %144 : f32 to vector<4x16x2xf32>
      %146 = arith.mulf %145, %46 : vector<4x16x2xf32>
      %147 = arith.addf %143, %146 : vector<4x16x2xf32>
      %c2_68 = arith.constant 2 : index
      %c3_69 = arith.constant 3 : index
      %148 = memref.load %arg5[%c2_68, %c3_69] : memref<16x6xf32, #tpu.memory_space<smem>>
      %149 = vector.broadcast %148 : f32 to vector<4x16x2xf32>
      %150 = arith.mulf %149, %56 : vector<4x16x2xf32>
      %151 = arith.addf %147, %150 : vector<4x16x2xf32>
      %c2_70 = arith.constant 2 : index
      %c4_71 = arith.constant 4 : index
      %152 = memref.load %arg5[%c2_70, %c4_71] : memref<16x6xf32, #tpu.memory_space<smem>>
      %153 = vector.broadcast %152 : f32 to vector<4x16x2xf32>
      %154 = arith.mulf %153, %66 : vector<4x16x2xf32>
      %155 = arith.addf %151, %154 : vector<4x16x2xf32>
      %c2_72 = arith.constant 2 : index
      %c5_73 = arith.constant 5 : index
      %156 = memref.load %arg5[%c2_72, %c5_73] : memref<16x6xf32, #tpu.memory_space<smem>>
      %157 = vector.broadcast %156 : f32 to vector<4x16x2xf32>
      %158 = arith.mulf %157, %76 : vector<4x16x2xf32>
      %159 = arith.addf %155, %158 : vector<4x16x2xf32>
      %c2_74 = arith.constant 2 : index
      %160 = memref.load %arg6[%c2_74] : memref<16xf32, #tpu.memory_space<smem>>
      %161 = vector.broadcast %160 : f32 to vector<4x16x2xf32>
      %162 = arith.addf %159, %161 : vector<4x16x2xf32>
      %cst_75 = arith.constant dense<0xFF800000> : vector<16x2xf32>
      %163 = vector.multi_reduction <maximumf>, %162, %cst_75 [0] : vector<4x16x2xf32> to vector<16x2xf32>
      %c0_76 = arith.constant 0 : index
      %c32 = arith.constant 32 : index
      %c0_77 = arith.constant 0 : index
      %164 = vector.load %arg12[%c0_76, %c32, %c0_77] : memref<1x256x2xf32, #tpu.memory_space<vmem>>, vector<1x16x2xf32>
      %165 = vector.shape_cast %164 : vector<1x16x2xf32> to vector<16x2xf32>
      %166 = vector.shape_cast %163 : vector<16x2xf32> to vector<1x16x2xf32>
      tpu.vector_store %arg12[%c0_76, %c32, %c0_77], %166 {strides = array<i32>} : memref<1x256x2xf32, #tpu.memory_space<vmem>>, vector<1x16x2xf32>,
      %c3_78 = arith.constant 3 : index
      %c0_79 = arith.constant 0 : index
      %167 = memref.load %arg5[%c3_78, %c0_79] : memref<16x6xf32, #tpu.memory_space<smem>>
      %168 = vector.broadcast %167 : f32 to vector<4x16x2xf32>
      %169 = arith.mulf %168, %26 : vector<4x16x2xf32>
      %c3_80 = arith.constant 3 : index
      %c1_81 = arith.constant 1 : index
      %170 = memref.load %arg5[%c3_80, %c1_81] : memref<16x6xf32, #tpu.memory_space<smem>>
      %171 = vector.broadcast %170 : f32 to vector<4x16x2xf32>
      %172 = arith.mulf %171, %36 : vector<4x16x2xf32>
      %173 = arith.addf %169, %172 : vector<4x16x2xf32>
      %c3_82 = arith.constant 3 : index
      %c2_83 = arith.constant 2 : index
      %174 = memref.load %arg5[%c3_82, %c2_83] : memref<16x6xf32, #tpu.memory_space<smem>>
      %175 = vector.broadcast %174 : f32 to vector<4x16x2xf32>
      %176 = arith.mulf %175, %46 : vector<4x16x2xf32>
      %177 = arith.addf %173, %176 : vector<4x16x2xf32>
      %c3_84 = arith.constant 3 : index
      %c3_85 = arith.constant 3 : index
      %178 = memref.load %arg5[%c3_84, %c3_85] : memref<16x6xf32, #tpu.memory_space<smem>>
      %179 = vector.broadcast %178 : f32 to vector<4x16x2xf32>
      %180 = arith.mulf %179, %56 : vector<4x16x2xf32>
      %181 = arith.addf %177, %180 : vector<4x16x2xf32>
      %c3_86 = arith.constant 3 : index
      %c4_87 = arith.constant 4 : index
      %182 = memref.load %arg5[%c3_86, %c4_87] : memref<16x6xf32, #tpu.memory_space<smem>>
      %183 = vector.broadcast %182 : f32 to vector<4x16x2xf32>
      %184 = arith.mulf %183, %66 : vector<4x16x2xf32>
      %185 = arith.addf %181, %184 : vector<4x16x2xf32>
      %c3_88 = arith.constant 3 : index
      %c5_89 = arith.constant 5 : index
      %186 = memref.load %arg5[%c3_88, %c5_89] : memref<16x6xf32, #tpu.memory_space<smem>>
      %187 = vector.broadcast %186 : f32 to vector<4x16x2xf32>
      %188 = arith.mulf %187, %76 : vector<4x16x2xf32>
      %189 = arith.addf %185, %188 : vector<4x16x2xf32>
      %c3_90 = arith.constant 3 : index
      %190 = memref.load %arg6[%c3_90] : memref<16xf32, #tpu.memory_space<smem>>
      %191 = vector.broadcast %190 : f32 to vector<4x16x2xf32>
      %192 = arith.addf %189, %191 : vector<4x16x2xf32>
      %cst_91 = arith.constant dense<0xFF800000> : vector<16x2xf32>
      %193 = vector.multi_reduction <maximumf>, %192, %cst_91 [0] : vector<4x16x2xf32> to vector<16x2xf32>
      %c0_92 = arith.constant 0 : index
      %c48 = arith.constant 48 : index
      %c0_93 = arith.constant 0 : index
      %194 = vector.load %arg12[%c0_92, %c48, %c0_93] : memref<1x256x2xf32, #tpu.memory_space<vmem>>, vector<1x16x2xf32>
      %195 = vector.shape_cast %194 : vector<1x16x2xf32> to vector<16x2xf32>
      %196 = vector.shape_cast %193 : vector<16x2xf32> to vector<1x16x2xf32>
      tpu.vector_store %arg12[%c0_92, %c48, %c0_93], %196 {strides = array<i32>} : memref<1x256x2xf32, #tpu.memory_space<vmem>>, vector<1x16x2xf32>,
      %c4_94 = arith.constant 4 : index
      %c0_95 = arith.constant 0 : index
      %197 = memref.load %arg5[%c4_94, %c0_95] : memref<16x6xf32, #tpu.memory_space<smem>>
      %198 = vector.broadcast %197 : f32 to vector<4x16x2xf32>
      %199 = arith.mulf %198, %26 : vector<4x16x2xf32>
      %c4_96 = arith.constant 4 : index
      %c1_97 = arith.constant 1 : index
      %200 = memref.load %arg5[%c4_96, %c1_97] : memref<16x6xf32, #tpu.memory_space<smem>>
      %201 = vector.broadcast %200 : f32 to vector<4x16x2xf32>
      %202 = arith.mulf %201, %36 : vector<4x16x2xf32>
      %203 = arith.addf %199, %202 : vector<4x16x2xf32>
      %c4_98 = arith.constant 4 : index
      %c2_99 = arith.constant 2 : index
      %204 = memref.load %arg5[%c4_98, %c2_99] : memref<16x6xf32, #tpu.memory_space<smem>>
      %205 = vector.broadcast %204 : f32 to vector<4x16x2xf32>
      %206 = arith.mulf %205, %46 : vector<4x16x2xf32>
      %207 = arith.addf %203, %206 : vector<4x16x2xf32>
      %c4_100 = arith.constant 4 : index
      %c3_101 = arith.constant 3 : index
      %208 = memref.load %arg5[%c4_100, %c3_101] : memref<16x6xf32, #tpu.memory_space<smem>>
      %209 = vector.broadcast %208 : f32 to vector<4x16x2xf32>
      %210 = arith.mulf %209, %56 : vector<4x16x2xf32>
      %211 = arith.addf %207, %210 : vector<4x16x2xf32>
      %c4_102 = arith.constant 4 : index
      %c4_103 = arith.constant 4 : index
      %212 = memref.load %arg5[%c4_102, %c4_103] : memref<16x6xf32, #tpu.memory_space<smem>>
      %213 = vector.broadcast %212 : f32 to vector<4x16x2xf32>
      %214 = arith.mulf %213, %66 : vector<4x16x2xf32>
      %215 = arith.addf %211, %214 : vector<4x16x2xf32>
      %c4_104 = arith.constant 4 : index
      %c5_105 = arith.constant 5 : index
      %216 = memref.load %arg5[%c4_104, %c5_105] : memref<16x6xf32, #tpu.memory_space<smem>>
      %217 = vector.broadcast %216 : f32 to vector<4x16x2xf32>
      %218 = arith.mulf %217, %76 : vector<4x16x2xf32>
      %219 = arith.addf %215, %218 : vector<4x16x2xf32>
      %c4_106 = arith.constant 4 : index
      %220 = memref.load %arg6[%c4_106] : memref<16xf32, #tpu.memory_space<smem>>
      %221 = vector.broadcast %220 : f32 to vector<4x16x2xf32>
      %222 = arith.addf %219, %221 : vector<4x16x2xf32>
      %cst_107 = arith.constant dense<0xFF800000> : vector<16x2xf32>
      %223 = vector.multi_reduction <maximumf>, %222, %cst_107 [0] : vector<4x16x2xf32> to vector<16x2xf32>
      %c0_108 = arith.constant 0 : index
      %c64 = arith.constant 64 : index
      %c0_109 = arith.constant 0 : index
      %224 = vector.load %arg12[%c0_108, %c64, %c0_109] : memref<1x256x2xf32, #tpu.memory_space<vmem>>, vector<1x16x2xf32>
      %225 = vector.shape_cast %224 : vector<1x16x2xf32> to vector<16x2xf32>
      %226 = vector.shape_cast %223 : vector<16x2xf32> to vector<1x16x2xf32>
      tpu.vector_store %arg12[%c0_108, %c64, %c0_109], %226 {strides = array<i32>} : memref<1x256x2xf32, #tpu.memory_space<vmem>>, vector<1x16x2xf32>,
      %c5_110 = arith.constant 5 : index
      %c0_111 = arith.constant 0 : index
      %227 = memref.load %arg5[%c5_110, %c0_111] : memref<16x6xf32, #tpu.memory_space<smem>>
      %228 = vector.broadcast %227 : f32 to vector<4x16x2xf32>
      %229 = arith.mulf %228, %26 : vector<4x16x2xf32>
      %c5_112 = arith.constant 5 : index
      %c1_113 = arith.constant 1 : index
      %230 = memref.load %arg5[%c5_112, %c1_113] : memref<16x6xf32, #tpu.memory_space<smem>>
      %231 = vector.broadcast %230 : f32 to vector<4x16x2xf32>
      %232 = arith.mulf %231, %36 : vector<4x16x2xf32>
      %233 = arith.addf %229, %232 : vector<4x16x2xf32>
      %c5_114 = arith.constant 5 : index
      %c2_115 = arith.constant 2 : index
      %234 = memref.load %arg5[%c5_114, %c2_115] : memref<16x6xf32, #tpu.memory_space<smem>>
      %235 = vector.broadcast %234 : f32 to vector<4x16x2xf32>
      %236 = arith.mulf %235, %46 : vector<4x16x2xf32>
      %237 = arith.addf %233, %236 : vector<4x16x2xf32>
      %c5_116 = arith.constant 5 : index
      %c3_117 = arith.constant 3 : index
      %238 = memref.load %arg5[%c5_116, %c3_117] : memref<16x6xf32, #tpu.memory_space<smem>>
      %239 = vector.broadcast %238 : f32 to vector<4x16x2xf32>
      %240 = arith.mulf %239, %56 : vector<4x16x2xf32>
      %241 = arith.addf %237, %240 : vector<4x16x2xf32>
      %c5_118 = arith.constant 5 : index
      %c4_119 = arith.constant 4 : index
      %242 = memref.load %arg5[%c5_118, %c4_119] : memref<16x6xf32, #tpu.memory_space<smem>>
      %243 = vector.broadcast %242 : f32 to vector<4x16x2xf32>
      %244 = arith.mulf %243, %66 : vector<4x16x2xf32>
      %245 = arith.addf %241, %244 : vector<4x16x2xf32>
      %c5_120 = arith.constant 5 : index
      %c5_121 = arith.constant 5 : index
      %246 = memref.load %arg5[%c5_120, %c5_121] : memref<16x6xf32, #tpu.memory_space<smem>>
      %247 = vector.broadcast %246 : f32 to vector<4x16x2xf32>
      %248 = arith.mulf %247, %76 : vector<4x16x2xf32>
      %249 = arith.addf %245, %248 : vector<4x16x2xf32>
      %c5_122 = arith.constant 5 : index
      %250 = memref.load %arg6[%c5_122] : memref<16xf32, #tpu.memory_space<smem>>
      %251 = vector.broadcast %250 : f32 to vector<4x16x2xf32>
      %252 = arith.addf %249, %251 : vector<4x16x2xf32>
      %cst_123 = arith.constant dense<0xFF800000> : vector<16x2xf32>
      %253 = vector.multi_reduction <maximumf>, %252, %cst_123 [0] : vector<4x16x2xf32> to vector<16x2xf32>
      %c0_124 = arith.constant 0 : index
      %c80 = arith.constant 80 : index
      %c0_125 = arith.constant 0 : index
      %254 = vector.load %arg12[%c0_124, %c80, %c0_125] : memref<1x256x2xf32, #tpu.memory_space<vmem>>, vector<1x16x2xf32>
      %255 = vector.shape_cast %254 : vector<1x16x2xf32> to vector<16x2xf32>
      %256 = vector.shape_cast %253 : vector<16x2xf32> to vector<1x16x2xf32>
      tpu.vector_store %arg12[%c0_124, %c80, %c0_125], %256 {strides = array<i32>} : memref<1x256x2xf32, #tpu.memory_space<vmem>>, vector<1x16x2xf32>,
      %c6 = arith.constant 6 : index
      %c0_126 = arith.constant 0 : index
      %257 = memref.load %arg5[%c6, %c0_126] : memref<16x6xf32, #tpu.memory_space<smem>>
      %258 = vector.broadcast %257 : f32 to vector<4x16x2xf32>
      %259 = arith.mulf %258, %26 : vector<4x16x2xf32>
      %c6_127 = arith.constant 6 : index
      %c1_128 = arith.constant 1 : index
      %260 = memref.load %arg5[%c6_127, %c1_128] : memref<16x6xf32, #tpu.memory_space<smem>>
      %261 = vector.broadcast %260 : f32 to vector<4x16x2xf32>
      %262 = arith.mulf %261, %36 : vector<4x16x2xf32>
      %263 = arith.addf %259, %262 : vector<4x16x2xf32>
      %c6_129 = arith.constant 6 : index
      %c2_130 = arith.constant 2 : index
      %264 = memref.load %arg5[%c6_129, %c2_130] : memref<16x6xf32, #tpu.memory_space<smem>>
      %265 = vector.broadcast %264 : f32 to vector<4x16x2xf32>
      %266 = arith.mulf %265, %46 : vector<4x16x2xf32>
      %267 = arith.addf %263, %266 : vector<4x16x2xf32>
      %c6_131 = arith.constant 6 : index
      %c3_132 = arith.constant 3 : index
      %268 = memref.load %arg5[%c6_131, %c3_132] : memref<16x6xf32, #tpu.memory_space<smem>>
      %269 = vector.broadcast %268 : f32 to vector<4x16x2xf32>
      %270 = arith.mulf %269, %56 : vector<4x16x2xf32>
      %271 = arith.addf %267, %270 : vector<4x16x2xf32>
      %c6_133 = arith.constant 6 : index
      %c4_134 = arith.constant 4 : index
      %272 = memref.load %arg5[%c6_133, %c4_134] : memref<16x6xf32, #tpu.memory_space<smem>>
      %273 = vector.broadcast %272 : f32 to vector<4x16x2xf32>
      %274 = arith.mulf %273, %66 : vector<4x16x2xf32>
      %275 = arith.addf %271, %274 : vector<4x16x2xf32>
      %c6_135 = arith.constant 6 : index
      %c5_136 = arith.constant 5 : index
      %276 = memref.load %arg5[%c6_135, %c5_136] : memref<16x6xf32, #tpu.memory_space<smem>>
      %277 = vector.broadcast %276 : f32 to vector<4x16x2xf32>
      %278 = arith.mulf %277, %76 : vector<4x16x2xf32>
      %279 = arith.addf %275, %278 : vector<4x16x2xf32>
      %c6_137 = arith.constant 6 : index
      %280 = memref.load %arg6[%c6_137] : memref<16xf32, #tpu.memory_space<smem>>
      %281 = vector.broadcast %280 : f32 to vector<4x16x2xf32>
      %282 = arith.addf %279, %281 : vector<4x16x2xf32>
      %cst_138 = arith.constant dense<0xFF800000> : vector<16x2xf32>
      %283 = vector.multi_reduction <maximumf>, %282, %cst_138 [0] : vector<4x16x2xf32> to vector<16x2xf32>
      %c0_139 = arith.constant 0 : index
      %c96 = arith.constant 96 : index
      %c0_140 = arith.constant 0 : index
      %284 = vector.load %arg12[%c0_139, %c96, %c0_140] : memref<1x256x2xf32, #tpu.memory_space<vmem>>, vector<1x16x2xf32>
      %285 = vector.shape_cast %284 : vector<1x16x2xf32> to vector<16x2xf32>
      %286 = vector.shape_cast %283 : vector<16x2xf32> to vector<1x16x2xf32>
      tpu.vector_store %arg12[%c0_139, %c96, %c0_140], %286 {strides = array<i32>} : memref<1x256x2xf32, #tpu.memory_space<vmem>>, vector<1x16x2xf32>,
      %c7 = arith.constant 7 : index
      %c0_141 = arith.constant 0 : index
      %287 = memref.load %arg5[%c7, %c0_141] : memref<16x6xf32, #tpu.memory_space<smem>>
      %288 = vector.broadcast %287 : f32 to vector<4x16x2xf32>
      %289 = arith.mulf %288, %26 : vector<4x16x2xf32>
      %c7_142 = arith.constant 7 : index
      %c1_143 = arith.constant 1 : index
      %290 = memref.load %arg5[%c7_142, %c1_143] : memref<16x6xf32, #tpu.memory_space<smem>>
      %291 = vector.broadcast %290 : f32 to vector<4x16x2xf32>
      %292 = arith.mulf %291, %36 : vector<4x16x2xf32>
      %293 = arith.addf %289, %292 : vector<4x16x2xf32>
      %c7_144 = arith.constant 7 : index
      %c2_145 = arith.constant 2 : index
      %294 = memref.load %arg5[%c7_144, %c2_145] : memref<16x6xf32, #tpu.memory_space<smem>>
      %295 = vector.broadcast %294 : f32 to vector<4x16x2xf32>
      %296 = arith.mulf %295, %46 : vector<4x16x2xf32>
      %297 = arith.addf %293, %296 : vector<4x16x2xf32>
      %c7_146 = arith.constant 7 : index
      %c3_147 = arith.constant 3 : index
      %298 = memref.load %arg5[%c7_146, %c3_147] : memref<16x6xf32, #tpu.memory_space<smem>>
      %299 = vector.broadcast %298 : f32 to vector<4x16x2xf32>
      %300 = arith.mulf %299, %56 : vector<4x16x2xf32>
      %301 = arith.addf %297, %300 : vector<4x16x2xf32>
      %c7_148 = arith.constant 7 : index
      %c4_149 = arith.constant 4 : index
      %302 = memref.load %arg5[%c7_148, %c4_149] : memref<16x6xf32, #tpu.memory_space<smem>>
      %303 = vector.broadcast %302 : f32 to vector<4x16x2xf32>
      %304 = arith.mulf %303, %66 : vector<4x16x2xf32>
      %305 = arith.addf %301, %304 : vector<4x16x2xf32>
      %c7_150 = arith.constant 7 : index
      %c5_151 = arith.constant 5 : index
      %306 = memref.load %arg5[%c7_150, %c5_151] : memref<16x6xf32, #tpu.memory_space<smem>>
      %307 = vector.broadcast %306 : f32 to vector<4x16x2xf32>
      %308 = arith.mulf %307, %76 : vector<4x16x2xf32>
      %309 = arith.addf %305, %308 : vector<4x16x2xf32>
      %c7_152 = arith.constant 7 : index
      %310 = memref.load %arg6[%c7_152] : memref<16xf32, #tpu.memory_space<smem>>
      %311 = vector.broadcast %310 : f32 to vector<4x16x2xf32>
      %312 = arith.addf %309, %311 : vector<4x16x2xf32>
      %cst_153 = arith.constant dense<0xFF800000> : vector<16x2xf32>
      %313 = vector.multi_reduction <maximumf>, %312, %cst_153 [0] : vector<4x16x2xf32> to vector<16x2xf32>
      %c0_154 = arith.constant 0 : index
      %c112 = arith.constant 112 : index
      %c0_155 = arith.constant 0 : index
      %314 = vector.load %arg12[%c0_154, %c112, %c0_155] : memref<1x256x2xf32, #tpu.memory_space<vmem>>, vector<1x16x2xf32>
      %315 = vector.shape_cast %314 : vector<1x16x2xf32> to vector<16x2xf32>
      %316 = vector.shape_cast %313 : vector<16x2xf32> to vector<1x16x2xf32>
      tpu.vector_store %arg12[%c0_154, %c112, %c0_155], %316 {strides = array<i32>} : memref<1x256x2xf32, #tpu.memory_space<vmem>>, vector<1x16x2xf32>,
      %c8 = arith.constant 8 : index
      %c0_156 = arith.constant 0 : index
      %317 = memref.load %arg5[%c8, %c0_156] : memref<16x6xf32, #tpu.memory_space<smem>>
      %318 = vector.broadcast %317 : f32 to vector<4x16x2xf32>
      %319 = arith.mulf %318, %26 : vector<4x16x2xf32>
      %c8_157 = arith.constant 8 : index
      %c1_158 = arith.constant 1 : index
      %320 = memref.load %arg5[%c8_157, %c1_158] : memref<16x6xf32, #tpu.memory_space<smem>>
      %321 = vector.broadcast %320 : f32 to vector<4x16x2xf32>
      %322 = arith.mulf %321, %36 : vector<4x16x2xf32>
      %323 = arith.addf %319, %322 : vector<4x16x2xf32>
      %c8_159 = arith.constant 8 : index
      %c2_160 = arith.constant 2 : index
      %324 = memref.load %arg5[%c8_159, %c2_160] : memref<16x6xf32, #tpu.memory_space<smem>>
      %325 = vector.broadcast %324 : f32 to vector<4x16x2xf32>
      %326 = arith.mulf %325, %46 : vector<4x16x2xf32>
      %327 = arith.addf %323, %326 : vector<4x16x2xf32>
      %c8_161 = arith.constant 8 : index
      %c3_162 = arith.constant 3 : index
      %328 = memref.load %arg5[%c8_161, %c3_162] : memref<16x6xf32, #tpu.memory_space<smem>>
      %329 = vector.broadcast %328 : f32 to vector<4x16x2xf32>
      %330 = arith.mulf %329, %56 : vector<4x16x2xf32>
      %331 = arith.addf %327, %330 : vector<4x16x2xf32>
      %c8_163 = arith.constant 8 : index
      %c4_164 = arith.constant 4 : index
      %332 = memref.load %arg5[%c8_163, %c4_164] : memref<16x6xf32, #tpu.memory_space<smem>>
      %333 = vector.broadcast %332 : f32 to vector<4x16x2xf32>
      %334 = arith.mulf %333, %66 : vector<4x16x2xf32>
      %335 = arith.addf %331, %334 : vector<4x16x2xf32>
      %c8_165 = arith.constant 8 : index
      %c5_166 = arith.constant 5 : index
      %336 = memref.load %arg5[%c8_165, %c5_166] : memref<16x6xf32, #tpu.memory_space<smem>>
      %337 = vector.broadcast %336 : f32 to vector<4x16x2xf32>
      %338 = arith.mulf %337, %76 : vector<4x16x2xf32>
      %339 = arith.addf %335, %338 : vector<4x16x2xf32>
      %c8_167 = arith.constant 8 : index
      %340 = memref.load %arg6[%c8_167] : memref<16xf32, #tpu.memory_space<smem>>
      %341 = vector.broadcast %340 : f32 to vector<4x16x2xf32>
      %342 = arith.addf %339, %341 : vector<4x16x2xf32>
      %cst_168 = arith.constant dense<0xFF800000> : vector<16x2xf32>
      %343 = vector.multi_reduction <maximumf>, %342, %cst_168 [0] : vector<4x16x2xf32> to vector<16x2xf32>
      %c0_169 = arith.constant 0 : index
      %c128 = arith.constant 128 : index
      %c0_170 = arith.constant 0 : index
      %344 = vector.load %arg12[%c0_169, %c128, %c0_170] : memref<1x256x2xf32, #tpu.memory_space<vmem>>, vector<1x16x2xf32>
      %345 = vector.shape_cast %344 : vector<1x16x2xf32> to vector<16x2xf32>
      %346 = vector.shape_cast %343 : vector<16x2xf32> to vector<1x16x2xf32>
      tpu.vector_store %arg12[%c0_169, %c128, %c0_170], %346 {strides = array<i32>} : memref<1x256x2xf32, #tpu.memory_space<vmem>>, vector<1x16x2xf32>,
      %c9 = arith.constant 9 : index
      %c0_171 = arith.constant 0 : index
      %347 = memref.load %arg5[%c9, %c0_171] : memref<16x6xf32, #tpu.memory_space<smem>>
      %348 = vector.broadcast %347 : f32 to vector<4x16x2xf32>
      %349 = arith.mulf %348, %26 : vector<4x16x2xf32>
      %c9_172 = arith.constant 9 : index
      %c1_173 = arith.constant 1 : index
      %350 = memref.load %arg5[%c9_172, %c1_173] : memref<16x6xf32, #tpu.memory_space<smem>>
      %351 = vector.broadcast %350 : f32 to vector<4x16x2xf32>
      %352 = arith.mulf %351, %36 : vector<4x16x2xf32>
      %353 = arith.addf %349, %352 : vector<4x16x2xf32>
      %c9_174 = arith.constant 9 : index
      %c2_175 = arith.constant 2 : index
      %354 = memref.load %arg5[%c9_174, %c2_175] : memref<16x6xf32, #tpu.memory_space<smem>>
      %355 = vector.broadcast %354 : f32 to vector<4x16x2xf32>
      %356 = arith.mulf %355, %46 : vector<4x16x2xf32>
      %357 = arith.addf %353, %356 : vector<4x16x2xf32>
      %c9_176 = arith.constant 9 : index
      %c3_177 = arith.constant 3 : index
      %358 = memref.load %arg5[%c9_176, %c3_177] : memref<16x6xf32, #tpu.memory_space<smem>>
      %359 = vector.broadcast %358 : f32 to vector<4x16x2xf32>
      %360 = arith.mulf %359, %56 : vector<4x16x2xf32>
      %361 = arith.addf %357, %360 : vector<4x16x2xf32>
      %c9_178 = arith.constant 9 : index
      %c4_179 = arith.constant 4 : index
      %362 = memref.load %arg5[%c9_178, %c4_179] : memref<16x6xf32, #tpu.memory_space<smem>>
      %363 = vector.broadcast %362 : f32 to vector<4x16x2xf32>
      %364 = arith.mulf %363, %66 : vector<4x16x2xf32>
      %365 = arith.addf %361, %364 : vector<4x16x2xf32>
      %c9_180 = arith.constant 9 : index
      %c5_181 = arith.constant 5 : index
      %366 = memref.load %arg5[%c9_180, %c5_181] : memref<16x6xf32, #tpu.memory_space<smem>>
      %367 = vector.broadcast %366 : f32 to vector<4x16x2xf32>
      %368 = arith.mulf %367, %76 : vector<4x16x2xf32>
      %369 = arith.addf %365, %368 : vector<4x16x2xf32>
      %c9_182 = arith.constant 9 : index
      %370 = memref.load %arg6[%c9_182] : memref<16xf32, #tpu.memory_space<smem>>
      %371 = vector.broadcast %370 : f32 to vector<4x16x2xf32>
      %372 = arith.addf %369, %371 : vector<4x16x2xf32>
      %cst_183 = arith.constant dense<0xFF800000> : vector<16x2xf32>
      %373 = vector.multi_reduction <maximumf>, %372, %cst_183 [0] : vector<4x16x2xf32> to vector<16x2xf32>
      %c0_184 = arith.constant 0 : index
      %c144 = arith.constant 144 : index
      %c0_185 = arith.constant 0 : index
      %374 = vector.load %arg12[%c0_184, %c144, %c0_185] : memref<1x256x2xf32, #tpu.memory_space<vmem>>, vector<1x16x2xf32>
      %375 = vector.shape_cast %374 : vector<1x16x2xf32> to vector<16x2xf32>
      %376 = vector.shape_cast %373 : vector<16x2xf32> to vector<1x16x2xf32>
      tpu.vector_store %arg12[%c0_184, %c144, %c0_185], %376 {strides = array<i32>} : memref<1x256x2xf32, #tpu.memory_space<vmem>>, vector<1x16x2xf32>,
      %c10 = arith.constant 10 : index
      %c0_186 = arith.constant 0 : index
      %377 = memref.load %arg5[%c10, %c0_186] : memref<16x6xf32, #tpu.memory_space<smem>>
      %378 = vector.broadcast %377 : f32 to vector<4x16x2xf32>
      %379 = arith.mulf %378, %26 : vector<4x16x2xf32>
      %c10_187 = arith.constant 10 : index
      %c1_188 = arith.constant 1 : index
      %380 = memref.load %arg5[%c10_187, %c1_188] : memref<16x6xf32, #tpu.memory_space<smem>>
      %381 = vector.broadcast %380 : f32 to vector<4x16x2xf32>
      %382 = arith.mulf %381, %36 : vector<4x16x2xf32>
      %383 = arith.addf %379, %382 : vector<4x16x2xf32>
      %c10_189 = arith.constant 10 : index
      %c2_190 = arith.constant 2 : index
      %384 = memref.load %arg5[%c10_189, %c2_190] : memref<16x6xf32, #tpu.memory_space<smem>>
      %385 = vector.broadcast %384 : f32 to vector<4x16x2xf32>
      %386 = arith.mulf %385, %46 : vector<4x16x2xf32>
      %387 = arith.addf %383, %386 : vector<4x16x2xf32>
      %c10_191 = arith.constant 10 : index
      %c3_192 = arith.constant 3 : index
      %388 = memref.load %arg5[%c10_191, %c3_192] : memref<16x6xf32, #tpu.memory_space<smem>>
      %389 = vector.broadcast %388 : f32 to vector<4x16x2xf32>
      %390 = arith.mulf %389, %56 : vector<4x16x2xf32>
      %391 = arith.addf %387, %390 : vector<4x16x2xf32>
      %c10_193 = arith.constant 10 : index
      %c4_194 = arith.constant 4 : index
      %392 = memref.load %arg5[%c10_193, %c4_194] : memref<16x6xf32, #tpu.memory_space<smem>>
      %393 = vector.broadcast %392 : f32 to vector<4x16x2xf32>
      %394 = arith.mulf %393, %66 : vector<4x16x2xf32>
      %395 = arith.addf %391, %394 : vector<4x16x2xf32>
      %c10_195 = arith.constant 10 : index
      %c5_196 = arith.constant 5 : index
      %396 = memref.load %arg5[%c10_195, %c5_196] : memref<16x6xf32, #tpu.memory_space<smem>>
      %397 = vector.broadcast %396 : f32 to vector<4x16x2xf32>
      %398 = arith.mulf %397, %76 : vector<4x16x2xf32>
      %399 = arith.addf %395, %398 : vector<4x16x2xf32>
      %c10_197 = arith.constant 10 : index
      %400 = memref.load %arg6[%c10_197] : memref<16xf32, #tpu.memory_space<smem>>
      %401 = vector.broadcast %400 : f32 to vector<4x16x2xf32>
      %402 = arith.addf %399, %401 : vector<4x16x2xf32>
      %cst_198 = arith.constant dense<0xFF800000> : vector<16x2xf32>
      %403 = vector.multi_reduction <maximumf>, %402, %cst_198 [0] : vector<4x16x2xf32> to vector<16x2xf32>
      %c0_199 = arith.constant 0 : index
      %c160 = arith.constant 160 : index
      %c0_200 = arith.constant 0 : index
      %404 = vector.load %arg12[%c0_199, %c160, %c0_200] : memref<1x256x2xf32, #tpu.memory_space<vmem>>, vector<1x16x2xf32>
      %405 = vector.shape_cast %404 : vector<1x16x2xf32> to vector<16x2xf32>
      %406 = vector.shape_cast %403 : vector<16x2xf32> to vector<1x16x2xf32>
      tpu.vector_store %arg12[%c0_199, %c160, %c0_200], %406 {strides = array<i32>} : memref<1x256x2xf32, #tpu.memory_space<vmem>>, vector<1x16x2xf32>,
      %c11 = arith.constant 11 : index
      %c0_201 = arith.constant 0 : index
      %407 = memref.load %arg5[%c11, %c0_201] : memref<16x6xf32, #tpu.memory_space<smem>>
      %408 = vector.broadcast %407 : f32 to vector<4x16x2xf32>
      %409 = arith.mulf %408, %26 : vector<4x16x2xf32>
      %c11_202 = arith.constant 11 : index
      %c1_203 = arith.constant 1 : index
      %410 = memref.load %arg5[%c11_202, %c1_203] : memref<16x6xf32, #tpu.memory_space<smem>>
      %411 = vector.broadcast %410 : f32 to vector<4x16x2xf32>
      %412 = arith.mulf %411, %36 : vector<4x16x2xf32>
      %413 = arith.addf %409, %412 : vector<4x16x2xf32>
      %c11_204 = arith.constant 11 : index
      %c2_205 = arith.constant 2 : index
      %414 = memref.load %arg5[%c11_204, %c2_205] : memref<16x6xf32, #tpu.memory_space<smem>>
      %415 = vector.broadcast %414 : f32 to vector<4x16x2xf32>
      %416 = arith.mulf %415, %46 : vector<4x16x2xf32>
      %417 = arith.addf %413, %416 : vector<4x16x2xf32>
      %c11_206 = arith.constant 11 : index
      %c3_207 = arith.constant 3 : index
      %418 = memref.load %arg5[%c11_206, %c3_207] : memref<16x6xf32, #tpu.memory_space<smem>>
      %419 = vector.broadcast %418 : f32 to vector<4x16x2xf32>
      %420 = arith.mulf %419, %56 : vector<4x16x2xf32>
      %421 = arith.addf %417, %420 : vector<4x16x2xf32>
      %c11_208 = arith.constant 11 : index
      %c4_209 = arith.constant 4 : index
      %422 = memref.load %arg5[%c11_208, %c4_209] : memref<16x6xf32, #tpu.memory_space<smem>>
      %423 = vector.broadcast %422 : f32 to vector<4x16x2xf32>
      %424 = arith.mulf %423, %66 : vector<4x16x2xf32>
      %425 = arith.addf %421, %424 : vector<4x16x2xf32>
      %c11_210 = arith.constant 11 : index
      %c5_211 = arith.constant 5 : index
      %426 = memref.load %arg5[%c11_210, %c5_211] : memref<16x6xf32, #tpu.memory_space<smem>>
      %427 = vector.broadcast %426 : f32 to vector<4x16x2xf32>
      %428 = arith.mulf %427, %76 : vector<4x16x2xf32>
      %429 = arith.addf %425, %428 : vector<4x16x2xf32>
      %c11_212 = arith.constant 11 : index
      %430 = memref.load %arg6[%c11_212] : memref<16xf32, #tpu.memory_space<smem>>
      %431 = vector.broadcast %430 : f32 to vector<4x16x2xf32>
      %432 = arith.addf %429, %431 : vector<4x16x2xf32>
      %cst_213 = arith.constant dense<0xFF800000> : vector<16x2xf32>
      %433 = vector.multi_reduction <maximumf>, %432, %cst_213 [0] : vector<4x16x2xf32> to vector<16x2xf32>
      %c0_214 = arith.constant 0 : index
      %c176 = arith.constant 176 : index
      %c0_215 = arith.constant 0 : index
      %434 = vector.load %arg12[%c0_214, %c176, %c0_215] : memref<1x256x2xf32, #tpu.memory_space<vmem>>, vector<1x16x2xf32>
      %435 = vector.shape_cast %434 : vector<1x16x2xf32> to vector<16x2xf32>
      %436 = vector.shape_cast %433 : vector<16x2xf32> to vector<1x16x2xf32>
      tpu.vector_store %arg12[%c0_214, %c176, %c0_215], %436 {strides = array<i32>} : memref<1x256x2xf32, #tpu.memory_space<vmem>>, vector<1x16x2xf32>,
      %c12 = arith.constant 12 : index
      %c0_216 = arith.constant 0 : index
      %437 = memref.load %arg5[%c12, %c0_216] : memref<16x6xf32, #tpu.memory_space<smem>>
      %438 = vector.broadcast %437 : f32 to vector<4x16x2xf32>
      %439 = arith.mulf %438, %26 : vector<4x16x2xf32>
      %c12_217 = arith.constant 12 : index
      %c1_218 = arith.constant 1 : index
      %440 = memref.load %arg5[%c12_217, %c1_218] : memref<16x6xf32, #tpu.memory_space<smem>>
      %441 = vector.broadcast %440 : f32 to vector<4x16x2xf32>
      %442 = arith.mulf %441, %36 : vector<4x16x2xf32>
      %443 = arith.addf %439, %442 : vector<4x16x2xf32>
      %c12_219 = arith.constant 12 : index
      %c2_220 = arith.constant 2 : index
      %444 = memref.load %arg5[%c12_219, %c2_220] : memref<16x6xf32, #tpu.memory_space<smem>>
      %445 = vector.broadcast %444 : f32 to vector<4x16x2xf32>
      %446 = arith.mulf %445, %46 : vector<4x16x2xf32>
      %447 = arith.addf %443, %446 : vector<4x16x2xf32>
      %c12_221 = arith.constant 12 : index
      %c3_222 = arith.constant 3 : index
      %448 = memref.load %arg5[%c12_221, %c3_222] : memref<16x6xf32, #tpu.memory_space<smem>>
      %449 = vector.broadcast %448 : f32 to vector<4x16x2xf32>
      %450 = arith.mulf %449, %56 : vector<4x16x2xf32>
      %451 = arith.addf %447, %450 : vector<4x16x2xf32>
      %c12_223 = arith.constant 12 : index
      %c4_224 = arith.constant 4 : index
      %452 = memref.load %arg5[%c12_223, %c4_224] : memref<16x6xf32, #tpu.memory_space<smem>>
      %453 = vector.broadcast %452 : f32 to vector<4x16x2xf32>
      %454 = arith.mulf %453, %66 : vector<4x16x2xf32>
      %455 = arith.addf %451, %454 : vector<4x16x2xf32>
      %c12_225 = arith.constant 12 : index
      %c5_226 = arith.constant 5 : index
      %456 = memref.load %arg5[%c12_225, %c5_226] : memref<16x6xf32, #tpu.memory_space<smem>>
      %457 = vector.broadcast %456 : f32 to vector<4x16x2xf32>
      %458 = arith.mulf %457, %76 : vector<4x16x2xf32>
      %459 = arith.addf %455, %458 : vector<4x16x2xf32>
      %c12_227 = arith.constant 12 : index
      %460 = memref.load %arg6[%c12_227] : memref<16xf32, #tpu.memory_space<smem>>
      %461 = vector.broadcast %460 : f32 to vector<4x16x2xf32>
      %462 = arith.addf %459, %461 : vector<4x16x2xf32>
      %cst_228 = arith.constant dense<0xFF800000> : vector<16x2xf32>
      %463 = vector.multi_reduction <maximumf>, %462, %cst_228 [0] : vector<4x16x2xf32> to vector<16x2xf32>
      %c0_229 = arith.constant 0 : index
      %c192 = arith.constant 192 : index
      %c0_230 = arith.constant 0 : index
      %464 = vector.load %arg12[%c0_229, %c192, %c0_230] : memref<1x256x2xf32, #tpu.memory_space<vmem>>, vector<1x16x2xf32>
      %465 = vector.shape_cast %464 : vector<1x16x2xf32> to vector<16x2xf32>
      %466 = vector.shape_cast %463 : vector<16x2xf32> to vector<1x16x2xf32>
      tpu.vector_store %arg12[%c0_229, %c192, %c0_230], %466 {strides = array<i32>} : memref<1x256x2xf32, #tpu.memory_space<vmem>>, vector<1x16x2xf32>,
      %c13 = arith.constant 13 : index
      %c0_231 = arith.constant 0 : index
      %467 = memref.load %arg5[%c13, %c0_231] : memref<16x6xf32, #tpu.memory_space<smem>>
      %468 = vector.broadcast %467 : f32 to vector<4x16x2xf32>
      %469 = arith.mulf %468, %26 : vector<4x16x2xf32>
      %c13_232 = arith.constant 13 : index
      %c1_233 = arith.constant 1 : index
      %470 = memref.load %arg5[%c13_232, %c1_233] : memref<16x6xf32, #tpu.memory_space<smem>>
      %471 = vector.broadcast %470 : f32 to vector<4x16x2xf32>
      %472 = arith.mulf %471, %36 : vector<4x16x2xf32>
      %473 = arith.addf %469, %472 : vector<4x16x2xf32>
      %c13_234 = arith.constant 13 : index
      %c2_235 = arith.constant 2 : index
      %474 = memref.load %arg5[%c13_234, %c2_235] : memref<16x6xf32, #tpu.memory_space<smem>>
      %475 = vector.broadcast %474 : f32 to vector<4x16x2xf32>
      %476 = arith.mulf %475, %46 : vector<4x16x2xf32>
      %477 = arith.addf %473, %476 : vector<4x16x2xf32>
      %c13_236 = arith.constant 13 : index
      %c3_237 = arith.constant 3 : index
      %478 = memref.load %arg5[%c13_236, %c3_237] : memref<16x6xf32, #tpu.memory_space<smem>>
      %479 = vector.broadcast %478 : f32 to vector<4x16x2xf32>
      %480 = arith.mulf %479, %56 : vector<4x16x2xf32>
      %481 = arith.addf %477, %480 : vector<4x16x2xf32>
      %c13_238 = arith.constant 13 : index
      %c4_239 = arith.constant 4 : index
      %482 = memref.load %arg5[%c13_238, %c4_239] : memref<16x6xf32, #tpu.memory_space<smem>>
      %483 = vector.broadcast %482 : f32 to vector<4x16x2xf32>
      %484 = arith.mulf %483, %66 : vector<4x16x2xf32>
      %485 = arith.addf %481, %484 : vector<4x16x2xf32>
      %c13_240 = arith.constant 13 : index
      %c5_241 = arith.constant 5 : index
      %486 = memref.load %arg5[%c13_240, %c5_241] : memref<16x6xf32, #tpu.memory_space<smem>>
      %487 = vector.broadcast %486 : f32 to vector<4x16x2xf32>
      %488 = arith.mulf %487, %76 : vector<4x16x2xf32>
      %489 = arith.addf %485, %488 : vector<4x16x2xf32>
      %c13_242 = arith.constant 13 : index
      %490 = memref.load %arg6[%c13_242] : memref<16xf32, #tpu.memory_space<smem>>
      %491 = vector.broadcast %490 : f32 to vector<4x16x2xf32>
      %492 = arith.addf %489, %491 : vector<4x16x2xf32>
      %cst_243 = arith.constant dense<0xFF800000> : vector<16x2xf32>
      %493 = vector.multi_reduction <maximumf>, %492, %cst_243 [0] : vector<4x16x2xf32> to vector<16x2xf32>
      %c0_244 = arith.constant 0 : index
      %c208 = arith.constant 208 : index
      %c0_245 = arith.constant 0 : index
      %494 = vector.load %arg12[%c0_244, %c208, %c0_245] : memref<1x256x2xf32, #tpu.memory_space<vmem>>, vector<1x16x2xf32>
      %495 = vector.shape_cast %494 : vector<1x16x2xf32> to vector<16x2xf32>
      %496 = vector.shape_cast %493 : vector<16x2xf32> to vector<1x16x2xf32>
      tpu.vector_store %arg12[%c0_244, %c208, %c0_245], %496 {strides = array<i32>} : memref<1x256x2xf32, #tpu.memory_space<vmem>>, vector<1x16x2xf32>,
      %c14 = arith.constant 14 : index
      %c0_246 = arith.constant 0 : index
      %497 = memref.load %arg5[%c14, %c0_246] : memref<16x6xf32, #tpu.memory_space<smem>>
      %498 = vector.broadcast %497 : f32 to vector<4x16x2xf32>
      %499 = arith.mulf %498, %26 : vector<4x16x2xf32>
      %c14_247 = arith.constant 14 : index
      %c1_248 = arith.constant 1 : index
      %500 = memref.load %arg5[%c14_247, %c1_248] : memref<16x6xf32, #tpu.memory_space<smem>>
      %501 = vector.broadcast %500 : f32 to vector<4x16x2xf32>
      %502 = arith.mulf %501, %36 : vector<4x16x2xf32>
      %503 = arith.addf %499, %502 : vector<4x16x2xf32>
      %c14_249 = arith.constant 14 : index
      %c2_250 = arith.constant 2 : index
      %504 = memref.load %arg5[%c14_249, %c2_250] : memref<16x6xf32, #tpu.memory_space<smem>>
      %505 = vector.broadcast %504 : f32 to vector<4x16x2xf32>
      %506 = arith.mulf %505, %46 : vector<4x16x2xf32>
      %507 = arith.addf %503, %506 : vector<4x16x2xf32>
      %c14_251 = arith.constant 14 : index
      %c3_252 = arith.constant 3 : index
      %508 = memref.load %arg5[%c14_251, %c3_252] : memref<16x6xf32, #tpu.memory_space<smem>>
      %509 = vector.broadcast %508 : f32 to vector<4x16x2xf32>
      %510 = arith.mulf %509, %56 : vector<4x16x2xf32>
      %511 = arith.addf %507, %510 : vector<4x16x2xf32>
      %c14_253 = arith.constant 14 : index
      %c4_254 = arith.constant 4 : index
      %512 = memref.load %arg5[%c14_253, %c4_254] : memref<16x6xf32, #tpu.memory_space<smem>>
      %513 = vector.broadcast %512 : f32 to vector<4x16x2xf32>
      %514 = arith.mulf %513, %66 : vector<4x16x2xf32>
      %515 = arith.addf %511, %514 : vector<4x16x2xf32>
      %c14_255 = arith.constant 14 : index
      %c5_256 = arith.constant 5 : index
      %516 = memref.load %arg5[%c14_255, %c5_256] : memref<16x6xf32, #tpu.memory_space<smem>>
      %517 = vector.broadcast %516 : f32 to vector<4x16x2xf32>
      %518 = arith.mulf %517, %76 : vector<4x16x2xf32>
      %519 = arith.addf %515, %518 : vector<4x16x2xf32>
      %c14_257 = arith.constant 14 : index
      %520 = memref.load %arg6[%c14_257] : memref<16xf32, #tpu.memory_space<smem>>
      %521 = vector.broadcast %520 : f32 to vector<4x16x2xf32>
      %522 = arith.addf %519, %521 : vector<4x16x2xf32>
      %cst_258 = arith.constant dense<0xFF800000> : vector<16x2xf32>
      %523 = vector.multi_reduction <maximumf>, %522, %cst_258 [0] : vector<4x16x2xf32> to vector<16x2xf32>
      %c0_259 = arith.constant 0 : index
      %c224 = arith.constant 224 : index
      %c0_260 = arith.constant 0 : index
      %524 = vector.load %arg12[%c0_259, %c224, %c0_260] : memref<1x256x2xf32, #tpu.memory_space<vmem>>, vector<1x16x2xf32>
      %525 = vector.shape_cast %524 : vector<1x16x2xf32> to vector<16x2xf32>
      %526 = vector.shape_cast %523 : vector<16x2xf32> to vector<1x16x2xf32>
      tpu.vector_store %arg12[%c0_259, %c224, %c0_260], %526 {strides = array<i32>} : memref<1x256x2xf32, #tpu.memory_space<vmem>>, vector<1x16x2xf32>,
      %c15 = arith.constant 15 : index
      %c0_261 = arith.constant 0 : index
      %527 = memref.load %arg5[%c15, %c0_261] : memref<16x6xf32, #tpu.memory_space<smem>>
      %528 = vector.broadcast %527 : f32 to vector<4x16x2xf32>
      %529 = arith.mulf %528, %26 : vector<4x16x2xf32>
      %c15_262 = arith.constant 15 : index
      %c1_263 = arith.constant 1 : index
      %530 = memref.load %arg5[%c15_262, %c1_263] : memref<16x6xf32, #tpu.memory_space<smem>>
      %531 = vector.broadcast %530 : f32 to vector<4x16x2xf32>
      %532 = arith.mulf %531, %36 : vector<4x16x2xf32>
      %533 = arith.addf %529, %532 : vector<4x16x2xf32>
      %c15_264 = arith.constant 15 : index
      %c2_265 = arith.constant 2 : index
      %534 = memref.load %arg5[%c15_264, %c2_265] : memref<16x6xf32, #tpu.memory_space<smem>>
      %535 = vector.broadcast %534 : f32 to vector<4x16x2xf32>
      %536 = arith.mulf %535, %46 : vector<4x16x2xf32>
      %537 = arith.addf %533, %536 : vector<4x16x2xf32>
      %c15_266 = arith.constant 15 : index
      %c3_267 = arith.constant 3 : index
      %538 = memref.load %arg5[%c15_266, %c3_267] : memref<16x6xf32, #tpu.memory_space<smem>>
      %539 = vector.broadcast %538 : f32 to vector<4x16x2xf32>
      %540 = arith.mulf %539, %56 : vector<4x16x2xf32>
      %541 = arith.addf %537, %540 : vector<4x16x2xf32>
      %c15_268 = arith.constant 15 : index
      %c4_269 = arith.constant 4 : index
      %542 = memref.load %arg5[%c15_268, %c4_269] : memref<16x6xf32, #tpu.memory_space<smem>>
      %543 = vector.broadcast %542 : f32 to vector<4x16x2xf32>
      %544 = arith.mulf %543, %66 : vector<4x16x2xf32>
      %545 = arith.addf %541, %544 : vector<4x16x2xf32>
      %c15_270 = arith.constant 15 : index
      %c5_271 = arith.constant 5 : index
      %546 = memref.load %arg5[%c15_270, %c5_271] : memref<16x6xf32, #tpu.memory_space<smem>>
      %547 = vector.broadcast %546 : f32 to vector<4x16x2xf32>
      %548 = arith.mulf %547, %76 : vector<4x16x2xf32>
      %549 = arith.addf %545, %548 : vector<4x16x2xf32>
      %c15_272 = arith.constant 15 : index
      %550 = memref.load %arg6[%c15_272] : memref<16xf32, #tpu.memory_space<smem>>
      %551 = vector.broadcast %550 : f32 to vector<4x16x2xf32>
      %552 = arith.addf %549, %551 : vector<4x16x2xf32>
      %cst_273 = arith.constant dense<0xFF800000> : vector<16x2xf32>
      %553 = vector.multi_reduction <maximumf>, %552, %cst_273 [0] : vector<4x16x2xf32> to vector<16x2xf32>
      %c0_274 = arith.constant 0 : index
      %c240 = arith.constant 240 : index
      %c0_275 = arith.constant 0 : index
      %554 = vector.load %arg12[%c0_274, %c240, %c0_275] : memref<1x256x2xf32, #tpu.memory_space<vmem>>, vector<1x16x2xf32>
      %555 = vector.shape_cast %554 : vector<1x16x2xf32> to vector<16x2xf32>
      %556 = vector.shape_cast %553 : vector<16x2xf32> to vector<1x16x2xf32>
      tpu.vector_store %arg12[%c0_274, %c240, %c0_275], %556 {strides = array<i32>} : memref<1x256x2xf32, #tpu.memory_space<vmem>>, vector<1x16x2xf32>,
      %cst_276 = arith.constant 0.000000e+00 : f32
      %557 = vector.broadcast %cst_276 : f32 to vector<4x2xf32>
      %c0_277 = arith.constant 0 : index
      %c0_278 = arith.constant 0 : index
      %558 = vector.load %arg13[%c0_277, %c0_278] : memref<4x2xf32, #tpu.memory_space<vmem>>, vector<4x2xf32>
      tpu.vector_store %arg13[%c0_277, %c0_278], %557 {strides = array<i32>} : memref<4x2xf32, #tpu.memory_space<vmem>>, vector<4x2xf32>,
    } else {
    }
    %c0 = arith.constant 0 : index
    %c0_1 = arith.constant 0 : index
    %3 = vector.load %arg13[%c0, %c0_1] : memref<4x2xf32, #tpu.memory_space<vmem>>, vector<4x2xf32>
    %c0_2 = arith.constant 0 : index
    %c0_3 = arith.constant 0 : index
    %4 = vector.load %arg7[%c0_2, %c0_3] : memref<4x256xf32, #tpu.memory_space<vmem>>, vector<4x256xf32>
    %5 = arith.index_cast %arg1 : i32 to index
    %c0_4 = arith.constant 0 : index
    %c0_5 = arith.constant 0 : index
    %6 = vector.load %arg12[%5, %c0_4, %c0_5] : memref<1x256x2xf32, #tpu.memory_space<vmem>>, vector<1x256x2xf32>
    %7 = vector.shape_cast %6 : vector<1x256x2xf32> to vector<256x2xf32>
    %cst = arith.constant dense<0.000000e+00> : vector<4x2xf32>
    %8 = tpu.matmul %4, %7, %cst {dimension_numbers = #tpu.dot_dimension_numbers<[1], [0], [0], [1], [0, 0, 1, 1], [], []>} : vector<4x256xf32>, vector<256x2xf32>, vector<4x2xf32> -> vector<4x2xf32>
    %9 = arith.addf %3, %8 : vector<4x2xf32>
    %c0_6 = arith.constant 0 : index
    %c0_7 = arith.constant 0 : index
    %10 = vector.load %arg13[%c0_6, %c0_7] : memref<4x2xf32, #tpu.memory_space<vmem>>, vector<4x2xf32>
    tpu.vector_store %arg13[%c0_6, %c0_7], %9 {strides = array<i32>} : memref<4x2xf32, #tpu.memory_space<vmem>>, vector<4x2xf32>,
    %c0_i32_8 = arith.constant 0 : i32
    %11 = arith.cmpi eq, %arg1, %c0_i32_8 : i32
    %12 = arith.extui %11 : i1 to i32
    %c0_i32_9 = arith.constant 0 : i32
    %13 = arith.cmpi ne, %12, %c0_i32_9 : i32
    scf.if %13 {
      %c0_10 = arith.constant 0 : index
      %c0_11 = arith.constant 0 : index
      %14 = vector.load %arg13[%c0_10, %c0_11] : memref<4x2xf32, #tpu.memory_space<vmem>>, vector<4x2xf32>
      %c0_12 = arith.constant 0 : index
      %c0_13 = arith.constant 0 : index
      %15 = vector.load %arg8[%c0_12, %c0_13] : memref<4x1xf32, #tpu.memory_space<vmem>>, vector<4x1xf32>
      %16 = vector.broadcast %15 : vector<4x1xf32> to vector<4x2xf32>
      %17 = arith.addf %14, %16 : vector<4x2xf32>
      %cst_14 = arith.constant 0.000000e+00 : f32
      %18 = vector.broadcast %cst_14 : f32 to vector<4x2xf32>
      %19 = arith.maximumf %17, %18 : vector<4x2xf32>
      %c0_15 = arith.constant 0 : index
      %c0_16 = arith.constant 0 : index
      %20 = vector.load %arg9[%c0_15, %c0_16] : memref<8x4xf32, #tpu.memory_space<vmem>>, vector<8x4xf32>
      %cst_17 = arith.constant dense<0.000000e+00> : vector<8x2xf32>
      %21 = tpu.matmul %20, %19, %cst_17 {dimension_numbers = #tpu.dot_dimension_numbers<[1], [0], [0], [1], [0, 0, 1, 1], [], []>} : vector<8x4xf32>, vector<4x2xf32>, vector<8x2xf32> -> vector<8x2xf32>
      %c0_18 = arith.constant 0 : index
      %c0_19 = arith.constant 0 : index
      %22 = vector.load %arg10[%c0_18, %c0_19] : memref<8x1xf32, #tpu.memory_space<vmem>>, vector<8x1xf32>
      %23 = vector.broadcast %22 : vector<8x1xf32> to vector<8x2xf32>
      %24 = arith.addf %21, %23 : vector<8x2xf32>
      %c0_20 = arith.constant 0 : index
      %c0_21 = arith.constant 0 : index
      %25 = vector.load %arg11[%c0_20, %c0_21] : memref<8x2xf32, #tpu.memory_space<vmem>>, vector<8x2xf32>
      tpu.vector_store %arg11[%c0_20, %c0_21], %24 {strides = array<i32>} : memref<8x2xf32, #tpu.memory_space<vmem>>, vector<8x2xf32>,
    } else {
    }
    return
  }
  func.func @transform_0(%arg0: i32, %arg1: i32) -> (i32, i32, i32, i32) {
    %c0_i32 = arith.constant 0 : i32
    %c0_i32_0 = arith.constant 0 : i32
    %c0_i32_1 = arith.constant 0 : i32
    %c0_i32_2 = arith.constant 0 : i32
    return %c0_i32, %c0_i32_0, %c0_i32_1, %arg0 : i32, i32, i32, i32
  }
  func.func @transform_1(%arg0: i32, %arg1: i32) -> i32 {
    %c0_i32 = arith.constant 0 : i32
    %c0_i32_0 = arith.constant 0 : i32
    return %c0_i32 : i32
  }
  func.func @transform_2(%arg0: i32, %arg1: i32) -> i32 {
    %c0_i32 = arith.constant 0 : i32
    %c0_i32_0 = arith.constant 0 : i32
    return %c0_i32 : i32
  }
  func.func @transform_3(%arg0: i32, %arg1: i32) -> (i32, i32) {
    %c0_i32 = arith.constant 0 : i32
    %c0_i32_0 = arith.constant 0 : i32
    %c0_i32_1 = arith.constant 0 : i32
    return %c0_i32, %c0_i32_0 : i32, i32
  }
  func.func @transform_4(%arg0: i32, %arg1: i32) -> i32 {
    %c0_i32 = arith.constant 0 : i32
    %c0_i32_0 = arith.constant 0 : i32
    return %c0_i32 : i32
  }
  func.func @transform_5(%arg0: i32, %arg1: i32) -> (i32, i32) {
    %c0_i32 = arith.constant 0 : i32
    %c0_i32_0 = arith.constant 0 : i32
    return %c0_i32, %arg1 : i32, i32
  }
  func.func @transform_6(%arg0: i32, %arg1: i32) -> (i32, i32) {
    %c0_i32 = arith.constant 0 : i32
    %c0_i32_0 = arith.constant 0 : i32
    %c0_i32_1 = arith.constant 0 : i32
    return %c0_i32, %c0_i32_0 : i32, i32
  }
  func.func @transform_7(%arg0: i32, %arg1: i32) -> (i32, i32) {
    %c0_i32 = arith.constant 0 : i32
    %c0_i32_0 = arith.constant 0 : i32
    %c0_i32_1 = arith.constant 0 : i32
    return %c0_i32, %c0_i32_0 : i32, i32
  }
  func.func @transform_8(%arg0: i32, %arg1: i32) -> (i32, i32) {
    %c0_i32 = arith.constant 0 : i32
    %c0_i32_0 = arith.constant 0 : i32
    %c0_i32_1 = arith.constant 0 : i32
    return %c0_i32, %c0_i32_0 : i32, i32
  }
  func.func @transform_9(%arg0: i32, %arg1: i32) -> (i32, i32) {
    %c0_i32 = arith.constant 0 : i32
    %c0_i32_0 = arith.constant 0 : i32
    return %c0_i32, %arg0 : i32, i32
  }
}

</mosaic_0001>

<llo_original>
// kernel: squeeze.1
$region0: #{squeeze.1}
  %s0 = inlined_call_operand.hbm [shape: f32[2,1,16,16], index: 0, kind: input, shape index: {}]
  %s1 = inlined_call_operand.vmem [shape: f32[2,4,2,2,4,2,2], index: 1, kind: output, shape index: {}]
  $region1: #{squeeze.1} parent=0
    #allocation0 [shape = 'u8[16384]{0}', space=vmem, size = 0x4000, scoped, tag = 'operand span for operand 0']
    #allocation1 [shape = 's32[1]{0}', space=sflag, size = 0x4, scoped, tag = 'scoped memory for squeeze.1']
    #allocation2 [shape = 'u8[524288]{0}', space=vmem, size = 0x80000, scoped, tag = 'scoped mem for output reshape']
    %2 = vsyncpa [#allocation1], 0
    %4 = vsyncadd [#allocation1], 0
    %s6 = sshll.u32 %s0, 4
    %s7 = int_to_ptr.hbm [resolvable:$true] %s6
    %s8 = sshll.u32 [#allocation0], 4
    %s9 = int_to_ptr.vmem [resolvable:$true] %s8
    %11 = dma.hbm_to_vmem [thread:$0]  %s7, 512, %s9, [#allocation1]
    %13 = dma.done [#allocation1], 512
    %v14 = vld [vmem:[#allocation0] sm:$0xff]
    %vm15 = vcmask 15360
    %16 = vst.msk [vmem:[#allocation2] sm:$0x1] %vm15, %v14
    %s17 = scalar_lea.vmem [#allocation2], 31
    %18 = vst.msk [vmem:[%s17] sm:$0x2] %vm15, %v14
    %s19 = scalar_lea.vmem [#allocation2], 62
    %20 = vst.msk [vmem:[%s19] sm:$0x4] %vm15, %v14
    %s21 = scalar_lea.vmem [#allocation2], 93
    %22 = vst.msk [vmem:[%s21] sm:$0x8] %vm15, %v14
    %s23 = scalar_lea.vmem [#allocation2], 124
    %24 = vst.msk [vmem:[%s23] sm:$0x10] %vm15, %v14
    %s25 = scalar_lea.vmem [#allocation2], 155
    %26 = vst.msk [vmem:[%s25] sm:$0x20] %vm15, %v14
    %s27 = scalar_lea.vmem [#allocation2], 186
    %28 = vst.msk [vmem:[%s27] sm:$0x40] %vm15, %v14
    %s29 = scalar_lea.vmem [#allocation2], 217
    %30 = vst.msk [vmem:[%s29] sm:$0x80] %vm15, %v14
    %s31 = scalar_lea.vmem [#allocation0], 8
    %v32 = vld [vmem:[%s31] sm:$0xff]
    %vm33 = vcmask 15360
    %s34 = scalar_lea.vmem [#allocation2], 256
    %35 = vst.msk [vmem:[%s34] sm:$0x1] %vm33, %v32
    %s36 = scalar_lea.vmem [#allocation2], 287
    %37 = vst.msk [vmem:[%s36] sm:$0x2] %vm33, %v32
    %s38 = scalar_lea.vmem [#allocation2], 318
    %39 = vst.msk [vmem:[%s38] sm:$0x4] %vm33, %v32
    %s40 = scalar_lea.vmem [#allocation2], 349
    %41 = vst.msk [vmem:[%s40] sm:$0x8] %vm33, %v32
    %s42 = scalar_lea.vmem [#allocation2], 380
    %43 = vst.msk [vmem:[%s42] sm:$0x10] %vm33, %v32
    %s44 = scalar_lea.vmem [#allocation2], 411
    %45 = vst.msk [vmem:[%s44] sm:$0x20] %vm33, %v32
    %s46 = scalar_lea.vmem [#allocation2], 442
    %47 = vst.msk [vmem:[%s46] sm:$0x40] %vm33, %v32
    %s48 = scalar_lea.vmem [#allocation2], 473
    %49 = vst.msk [vmem:[%s48] sm:$0x80] %vm33, %v32
    %s50 = scalar_lea.vmem [#allocation0], 16
    %v51 = vld [vmem:[%s50] sm:$0xff]
    %vm52 = vcmask 15360
    %s53 = scalar_lea.vmem [#allocation2], 512
    %54 = vst.msk [vmem:[%s53] sm:$0x1] %vm52, %v51
    %s55 = scalar_lea.vmem [#allocation2], 543
    %56 = vst.msk [vmem:[%s55] sm:$0x2] %vm52, %v51
    %s57 = scalar_lea.vmem [#allocation2], 574
    %58 = vst.msk [vmem:[%s57] sm:$0x4] %vm52, %v51
    %s59 = scalar_lea.vmem [#allocation2], 605
    %60 = vst.msk [vmem:[%s59] sm:$0x8] %vm52, %v51
    %s61 = scalar_lea.vmem [#allocation2], 636
    %62 = vst.msk [vmem:[%s61] sm:$0x10] %vm52, %v51
    %s63 = scalar_lea.vmem [#allocation2], 667
    %64 = vst.msk [vmem:[%s63] sm:$0x20] %vm52, %v51
    %s65 = scalar_lea.vmem [#allocation2], 698
    %66 = vst.msk [vmem:[%s65] sm:$0x40] %vm52, %v51
    %s67 = scalar_lea.vmem [#allocation2], 729
    %68 = vst.msk [vmem:[%s67] sm:$0x80] %vm52, %v51
    %s69 = scalar_lea.vmem [#allocation0], 24
    %v70 = vld [vmem:[%s69] sm:$0xff]
    %vm71 = vcmask 15360
    %s72 = scalar_lea.vmem [#allocation2], 768
    %73 = vst.msk [vmem:[%s72] sm:$0x1] %vm71, %v70
    %s74 = scalar_lea.vmem [#allocation2], 799
    %75 = vst.msk [vmem:[%s74] sm:$0x2] %vm71, %v70
    %s76 = scalar_lea.vmem [#allocation2], 830
    %77 = vst.msk [vmem:[%s76] sm:$0x4] %vm71, %v70
    %s78 = scalar_lea.vmem [#allocation2], 861
    %79 = vst.msk [vmem:[%s78] sm:$0x8] %vm71, %v70
    %s80 = scalar_lea.vmem [#allocation2], 892
    %81 = vst.msk [vmem:[%s80] sm:$0x10] %vm71, %v70
    %s82 = scalar_lea.vmem [#allocation2], 923
    %83 = vst.msk [vmem:[%s82] sm:$0x20] %vm71, %v70
    %s84 = scalar_lea.vmem [#allocation2], 954
    %85 = vst.msk [vmem:[%s84] sm:$0x40] %vm71, %v70
    %s86 = scalar_lea.vmem [#allocation2], 985
    %87 = vst.msk [vmem:[%s86] sm:$0x80] %vm71, %v70
    %v88 = vld [vmem:[#allocation0] sm:$0xff]
    %89 = vrot.lane.b32.xlu0 %v88, 126
    %v90 = vpop.permute.xlu0 %89
    %vm91 = vcmask 15360
    %s92 = scalar_lea.vmem [#allocation2], 1
    %93 = vst.msk [vmem:[%s92] sm:$0x1] %vm91, %v90
    %s94 = scalar_lea.vmem [#allocation2], 32
    %95 = vst.msk [vmem:[%s94] sm:$0x2] %vm91, %v90
    %s96 = scalar_lea.vmem [#allocation2], 63
    %97 = vst.msk [vmem:[%s96] sm:$0x4] %vm91, %v90
    %s98 = scalar_lea.vmem [#allocation2], 94
    %99 = vst.msk [vmem:[%s98] sm:$0x8] %vm91, %v90
    %s100 = scalar_lea.vmem [#allocation2], 125
    %101 = vst.msk [vmem:[%s100] sm:$0x10] %vm91, %v90
    %s102 = scalar_lea.vmem [#allocation2], 156
    %103 = vst.msk [vmem:[%s102] sm:$0x20] %vm91, %v90
    %s104 = scalar_lea.vmem [#allocation2], 187
    %105 = vst.msk [vmem:[%s104] sm:$0x40] %vm91, %v90
    %s106 = scalar_lea.vmem [#allocation2], 218
    %107 = vst.msk [vmem:[%s106] sm:$0x80] %vm91, %v90
    %s108 = scalar_lea.vmem [#allocation0], 8
    %v109 = vld [vmem:[%s108] sm:$0xff]
    %110 = vrot.lane.b32.xlu0 %v109, 126
    %v111 = vpop.permute.xlu0 %110
    %vm112 = vcmask 15360
    %s113 = scalar_lea.vmem [#allocation2], 257
    %114 = vst.msk [vmem:[%s113] sm:$0x1] %vm112, %v111
    %s115 = scalar_lea.vmem [#allocation2], 288
    %116 = vst.msk [vmem:[%s115] sm:$0x2] %vm112, %v111
    %s117 = scalar_lea.vmem [#allocation2], 319
    %118 = vst.msk [vmem:[%s117] sm:$0x4] %vm112, %v111
    %s119 = scalar_lea.vmem [#allocation2], 350
    %120 = vst.msk [vmem:[%s119] sm:$0x8] %vm112, %v111
    %s121 = scalar_lea.vmem [#allocation2], 381
    %122 = vst.msk [vmem:[%s121] sm:$0x10] %vm112, %v111
    %s123 = scalar_lea.vmem [#allocation2], 412
    %124 = vst.msk [vmem:[%s123] sm:$0x20] %vm112, %v111
    %s125 = scalar_lea.vmem [#allocation2], 443
    %126 = vst.msk [vmem:[%s125] sm:$0x40] %vm112, %v111
    %s127 = scalar_lea.vmem [#allocation2], 474
    %128 = vst.msk [vmem:[%s127] sm:$0x80] %vm112, %v111
    %s129 = scalar_lea.vmem [#allocation0], 16
    %v130 = vld [vmem:[%s129] sm:$0xff]
    %131 = vrot.lane.b32.xlu0 %v130, 126
    %v132 = vpop.permute.xlu0 %131
    %vm133 = vcmask 15360
    %s134 = scalar_lea.vmem [#allocation2], 513
    %135 = vst.msk [vmem:[%s134] sm:$0x1] %vm133, %v132
    %s136 = scalar_lea.vmem [#allocation2], 544
    %137 = vst.msk [vmem:[%s136] sm:$0x2] %vm133, %v132
    %s138 = scalar_lea.vmem [#allocation2], 575
    %139 = vst.msk [vmem:[%s138] sm:$0x4] %vm133, %v132
    %s140 = scalar_lea.vmem [#allocation2], 606
    %141 = vst.msk [vmem:[%s140] sm:$0x8] %vm133, %v132
    %s142 = scalar_lea.vmem [#allocation2], 637
    %143 = vst.msk [vmem:[%s142] sm:$0x10] %vm133, %v132
    %s144 = scalar_lea.vmem [#allocation2], 668
    %145 = vst.msk [vmem:[%s144] sm:$0x20] %vm133, %v132
    %s146 = scalar_lea.vmem [#allocation2], 699
    %147 = vst.msk [vmem:[%s146] sm:$0x40] %vm133, %v132
    %s148 = scalar_lea.vmem [#allocation2], 730
    %149 = vst.msk [vmem:[%s148] sm:$0x80] %vm133, %v132
    %s150 = scalar_lea.vmem [#allocation0], 24
    %v151 = vld [vmem:[%s150] sm:$0xff]
    %152 = vrot.lane.b32.xlu0 %v151, 126
    %v153 = vpop.permute.xlu0 %152
    %vm154 = vcmask 15360
    %s155 = scalar_lea.vmem [#allocation2], 769
    %156 = vst.msk [vmem:[%s155] sm:$0x1] %vm154, %v153
    %s157 = scalar_lea.vmem [#allocation2], 800
    %158 = vst.msk [vmem:[%s157] sm:$0x2] %vm154, %v153
    %s159 = scalar_lea.vmem [#allocation2], 831
    %160 = vst.msk [vmem:[%s159] sm:$0x4] %vm154, %v153
    %s161 = scalar_lea.vmem [#allocation2], 862
    %162 = vst.msk [vmem:[%s161] sm:$0x8] %vm154, %v153
    %s163 = scalar_lea.vmem [#allocation2], 893
    %164 = vst.msk [vmem:[%s163] sm:$0x10] %vm154, %v153
    %s165 = scalar_lea.vmem [#allocation2], 924
    %166 = vst.msk [vmem:[%s165] sm:$0x20] %vm154, %v153
    %s167 = scalar_lea.vmem [#allocation2], 955
    %168 = vst.msk [vmem:[%s167] sm:$0x40] %vm154, %v153
    %s169 = scalar_lea.vmem [#allocation2], 986
    %170 = vst.msk [vmem:[%s169] sm:$0x80] %vm154, %v153
    %v171 = vld [vmem:[#allocation0] sm:$0xff]
    %172 = vrot.lane.b32.xlu0 %v171, 124
    %v173 = vpop.permute.xlu0 %172
    %vm174 = vcmask 15360
    %s175 = scalar_lea.vmem [#allocation2], 8
    %176 = vst.msk [vmem:[%s175] sm:$0x1] %vm174, %v173
    %s177 = scalar_lea.vmem [#allocation2], 39
    %178 = vst.msk [vmem:[%s177] sm:$0x2] %vm174, %v173
    %s179 = scalar_lea.vmem [#allocation2], 70
    %180 = vst.msk [vmem:[%s179] sm:$0x4] %vm174, %v173
    %s181 = scalar_lea.vmem [#allocation2], 101
    %182 = vst.msk [vmem:[%s181] sm:$0x8] %vm174, %v173
    %s183 = scalar_lea.vmem [#allocation2], 132
    %184 = vst.msk [vmem:[%s183] sm:$0x10] %vm174, %v173
    %s185 = scalar_lea.vmem [#allocation2], 163
    %186 = vst.msk [vmem:[%s185] sm:$0x20] %vm174, %v173
    %s187 = scalar_lea.vmem [#allocation2], 194
    %188 = vst.msk [vmem:[%s187] sm:$0x40] %vm174, %v173
    %s189 = scalar_lea.vmem [#allocation2], 225
    %190 = vst.msk [vmem:[%s189] sm:$0x80] %vm174, %v173
    %s191 = scalar_lea.vmem [#allocation0], 8
    %v192 = vld [vmem:[%s191] sm:$0xff]
    %193 = vrot.lane.b32.xlu0 %v192, 124
    %v194 = vpop.permute.xlu0 %193
    %vm195 = vcmask 15360
    %s196 = scalar_lea.vmem [#allocation2], 264
    %197 = vst.msk [vmem:[%s196] sm:$0x1] %vm195, %v194
    %s198 = scalar_lea.vmem [#allocation2], 295
    %199 = vst.msk [vmem:[%s198] sm:$0x2] %vm195, %v194
    %s200 = scalar_lea.vmem [#allocation2], 326
    %201 = vst.msk [vmem:[%s200] sm:$0x4] %vm195, %v194
    %s202 = scalar_lea.vmem [#allocation2], 357
    %203 = vst.msk [vmem:[%s202] sm:$0x8] %vm195, %v194
    %s204 = scalar_lea.vmem [#allocation2], 388
    %205 = vst.msk [vmem:[%s204] sm:$0x10] %vm195, %v194
    %s206 = scalar_lea.vmem [#allocation2], 419
    %207 = vst.msk [vmem:[%s206] sm:$0x20] %vm195, %v194
    %s208 = scalar_lea.vmem [#allocation2], 450
    %209 = vst.msk [vmem:[%s208] sm:$0x40] %vm195, %v194
    %s210 = scalar_lea.vmem [#allocation2], 481
    %211 = vst.msk [vmem:[%s210] sm:$0x80] %vm195, %v194
    %s212 = scalar_lea.vmem [#allocation0], 16
    %v213 = vld [vmem:[%s212] sm:$0xff]
    %214 = vrot.lane.b32.xlu0 %v213, 124
    %v215 = vpop.permute.xlu0 %214
    %vm216 = vcmask 15360
    %s217 = scalar_lea.vmem [#allocation2], 520
    %218 = vst.msk [vmem:[%s217] sm:$0x1] %vm216, %v215
    %s219 = scalar_lea.vmem [#allocation2], 551
    %220 = vst.msk [vmem:[%s219] sm:$0x2] %vm216, %v215
    %s221 = scalar_lea.vmem [#allocation2], 582
    %222 = vst.msk [vmem:[%s221] sm:$0x4] %vm216, %v215
    %s223 = scalar_lea.vmem [#allocation2], 613
    %224 = vst.msk [vmem:[%s223] sm:$0x8] %vm216, %v215
    %s225 = scalar_lea.vmem [#allocation2], 644
    %226 = vst.msk [vmem:[%s225] sm:$0x10] %vm216, %v215
    %s227 = scalar_lea.vmem [#allocation2], 675
    %228 = vst.msk [vmem:[%s227] sm:$0x20] %vm216, %v215
    %s229 = scalar_lea.vmem [#allocation2], 706
    %230 = vst.msk [vmem:[%s229] sm:$0x40] %vm216, %v215
    %s231 = scalar_lea.vmem [#allocation2], 737
    %232 = vst.msk [vmem:[%s231] sm:$0x80] %vm216, %v215
    %s233 = scalar_lea.vmem [#allocation0], 24
    %v234 = vld [vmem:[%s233] sm:$0xff]
    %235 = vrot.lane.b32.xlu0 %v234, 124
    %v236 = vpop.permute.xlu0 %235
    %vm237 = vcmask 15360
    %s238 = scalar_lea.vmem [#allocation2], 776
    %239 = vst.msk [vmem:[%s238] sm:$0x1] %vm237, %v236
    %s240 = scalar_lea.vmem [#allocation2], 807
    %241 = vst.msk [vmem:[%s240] sm:$0x2] %vm237, %v236
    %s242 = scalar_lea.vmem [#allocation2], 838
    %243 = vst.msk [vmem:[%s242] sm:$0x4] %vm237, %v236
    %s244 = scalar_lea.vmem [#allocation2], 869
    %245 = vst.msk [vmem:[%s244] sm:$0x8] %vm237, %v236
    %s246 = scalar_lea.vmem [#allocation2], 900
    %247 = vst.msk [vmem:[%s246] sm:$0x10] %vm237, %v236
    %s248 = scalar_lea.vmem [#allocation2], 931
    %249 = vst.msk [vmem:[%s248] sm:$0x20] %vm237, %v236
    %s250 = scalar_lea.vmem [#allocation2], 962
    %251 = vst.msk [vmem:[%s250] sm:$0x40] %vm237, %v236
    %s252 = scalar_lea.vmem [#allocation2], 993
    %253 = vst.msk [vmem:[%s252] sm:$0x80] %vm237, %v236
    %v254 = vld [vmem:[#allocation0] sm:$0xff]
    %255 = vrot.lane.b32.xlu0 %v254, 122
    %v256 = vpop.permute.xlu0 %255
    %vm257 = vcmask 15360
    %s258 = scalar_lea.vmem [#allocation2], 9
    %259 = vst.msk [vmem:[%s258] sm:$0x1] %vm257, %v256
    %s260 = scalar_lea.vmem [#allocation2], 40
    %261 = vst.msk [vmem:[%s260] sm:$0x2] %vm257, %v256
    %s262 = scalar_lea.vmem [#allocation2], 71
    %263 = vst.msk [vmem:[%s262] sm:$0x4] %vm257, %v256
    %s264 = scalar_lea.vmem [#allocation2], 102
    %265 = vst.msk [vmem:[%s264] sm:$0x8] %vm257, %v256
    %s266 = scalar_lea.vmem [#allocation2], 133
    %267 = vst.msk [vmem:[%s266] sm:$0x10] %vm257, %v256
    %s268 = scalar_lea.vmem [#allocation2], 164
    %269 = vst.msk [vmem:[%s268] sm:$0x20] %vm257, %v256
    %s270 = scalar_lea.vmem [#allocation2], 195
    %271 = vst.msk [vmem:[%s270] sm:$0x40] %vm257, %v256
    %s272 = scalar_lea.vmem [#allocation2], 226
    %273 = vst.msk [vmem:[%s272] sm:$0x80] %vm257, %v256
    %s274 = scalar_lea.vmem [#allocation0], 8
    %v275 = vld [vmem:[%s274] sm:$0xff]
    %276 = vrot.lane.b32.xlu0 %v275, 122
    %v277 = vpop.permute.xlu0 %276
    %vm278 = vcmask 15360
    %s279 = scalar_lea.vmem [#allocation2], 265
    %280 = vst.msk [vmem:[%s279] sm:$0x1] %vm278, %v277
    %s281 = scalar_lea.vmem [#allocation2], 296
    %282 = vst.msk [vmem:[%s281] sm:$0x2] %vm278, %v277
    %s283 = scalar_lea.vmem [#allocation2], 327
    %284 = vst.msk [vmem:[%s283] sm:$0x4] %vm278, %v277
    %s285 = scalar_lea.vmem [#allocation2], 358
    %286 = vst.msk [vmem:[%s285] sm:$0x8] %vm278, %v277
    %s287 = scalar_lea.vmem [#allocation2], 389
    %288 = vst.msk [vmem:[%s287] sm:$0x10] %vm278, %v277
    %s289 = scalar_lea.vmem [#allocation2], 420
    %290 = vst.msk [vmem:[%s289] sm:$0x20] %vm278, %v277
    %s291 = scalar_lea.vmem [#allocation2], 451
    %292 = vst.msk [vmem:[%s291] sm:$0x40] %vm278, %v277
    %s293 = scalar_lea.vmem [#allocation2], 482
    %294 = vst.msk [vmem:[%s293] sm:$0x80] %vm278, %v277
    %s295 = scalar_lea.vmem [#allocation0], 16
    %v296 = vld [vmem:[%s295] sm:$0xff]
    %297 = vrot.lane.b32.xlu0 %v296, 122
    %v298 = vpop.permute.xlu0 %297
    %vm299 = vcmask 15360
    %s300 = scalar_lea.vmem [#allocation2], 521
    %301 = vst.msk [vmem:[%s300] sm:$0x1] %vm299, %v298
    %s302 = scalar_lea.vmem [#allocation2], 552
    %303 = vst.msk [vmem:[%s302] sm:$0x2] %vm299, %v298
    %s304 = scalar_lea.vmem [#allocation2], 583
    %305 = vst.msk [vmem:[%s304] sm:$0x4] %vm299, %v298
    %s306 = scalar_lea.vmem [#allocation2], 614
    %307 = vst.msk [vmem:[%s306] sm:$0x8] %vm299, %v298
    %s308 = scalar_lea.vmem [#allocation2], 645
    %309 = vst.msk [vmem:[%s308] sm:$0x10] %vm299, %v298
    %s310 = scalar_lea.vmem [#allocation2], 676
    %311 = vst.msk [vmem:[%s310] sm:$0x20] %vm299, %v298
    %s312 = scalar_lea.vmem [#allocation2], 707
    %313 = vst.msk [vmem:[%s312] sm:$0x40] %vm299, %v298
    %s314 = scalar_lea.vmem [#allocation2], 738
    %315 = vst.msk [vmem:[%s314] sm:$0x80] %vm299, %v298
    %s316 = scalar_lea.vmem [#allocation0], 24
    %v317 = vld [vmem:[%s316] sm:$0xff]
    %318 = vrot.lane.b32.xlu0 %v317, 122
    %v319 = vpop.permute.xlu0 %318
    %vm320 = vcmask 15360
    %s321 = scalar_lea.vmem [#allocation2], 777
    %322 = vst.msk [vmem:[%s321] sm:$0x1] %vm320, %v319
    %s323 = scalar_lea.vmem [#allocation2], 808
    %324 = vst.msk [vmem:[%s323] sm:$0x2] %vm320, %v319
    %s325 = scalar_lea.vmem [#allocation2], 839
    %326 = vst.msk [vmem:[%s325] sm:$0x4] %vm320, %v319
    %s327 = scalar_lea.vmem [#allocation2], 870
    %328 = vst.msk [vmem:[%s327] sm:$0x8] %vm320, %v319
    %s329 = scalar_lea.vmem [#allocation2], 901
    %330 = vst.msk [vmem:[%s329] sm:$0x10] %vm320, %v319
    %s331 = scalar_lea.vmem [#allocation2], 932
    %332 = vst.msk [vmem:[%s331] sm:$0x20] %vm320, %v319
    %s333 = scalar_lea.vmem [#allocation2], 963
    %334 = vst.msk [vmem:[%s333] sm:$0x40] %vm320, %v319
    %s335 = scalar_lea.vmem [#allocation2], 994
    %336 = vst.msk [vmem:[%s335] sm:$0x80] %vm320, %v319
    %v337 = vld [vmem:[#allocation0] sm:$0xff]
    %338 = vrot.lane.b32.xlu0 %v337, 120
    %v339 = vpop.permute.xlu0 %338
    %vm340 = vcmask 15360
    %s341 = scalar_lea.vmem [#allocation2], 16
    %342 = vst.msk [vmem:[%s341] sm:$0x1] %vm340, %v339
    %s343 = scalar_lea.vmem [#allocation2], 47
    %344 = vst.msk [vmem:[%s343] sm:$0x2] %vm340, %v339
    %s345 = scalar_lea.vmem [#allocation2], 78
    %346 = vst.msk [vmem:[%s345] sm:$0x4] %vm340, %v339
    %s347 = scalar_lea.vmem [#allocation2], 109
    %348 = vst.msk [vmem:[%s347] sm:$0x8] %vm340, %v339
    %s349 = scalar_lea.vmem [#allocation2], 140
    %350 = vst.msk [vmem:[%s349] sm:$0x10] %vm340, %v339
    %s351 = scalar_lea.vmem [#allocation2], 171
    %352 = vst.msk [vmem:[%s351] sm:$0x20] %vm340, %v339
    %s353 = scalar_lea.vmem [#allocation2], 202
    %354 = vst.msk [vmem:[%s353] sm:$0x40] %vm340, %v339
    %s355 = scalar_lea.vmem [#allocation2], 233
    %356 = vst.msk [vmem:[%s355] sm:$0x80] %vm340, %v339
    %s357 = scalar_lea.vmem [#allocation0], 8
    %v358 = vld [vmem:[%s357] sm:$0xff]
    %359 = vrot.lane.b32.xlu0 %v358, 120
    %v360 = vpop.permute.xlu0 %359
    %vm361 = vcmask 15360
    %s362 = scalar_lea.vmem [#allocation2], 272
    %363 = vst.msk [vmem:[%s362] sm:$0x1] %vm361, %v360
    %s364 = scalar_lea.vmem [#allocation2], 303
    %365 = vst.msk [vmem:[%s364] sm:$0x2] %vm361, %v360
    %s366 = scalar_lea.vmem [#allocation2], 334
    %367 = vst.msk [vmem:[%s366] sm:$0x4] %vm361, %v360
    %s368 = scalar_lea.vmem [#allocation2], 365
    %369 = vst.msk [vmem:[%s368] sm:$0x8] %vm361, %v360
    %s370 = scalar_lea.vmem [#allocation2], 396
    %371 = vst.msk [vmem:[%s370] sm:$0x10] %vm361, %v360
    %s372 = scalar_lea.vmem [#allocation2], 427
    %373 = vst.msk [vmem:[%s372] sm:$0x20] %vm361, %v360
    %s374 = scalar_lea.vmem [#allocation2], 458
    %375 = vst.msk [vmem:[%s374] sm:$0x40] %vm361, %v360
    %s376 = scalar_lea.vmem [#allocation2], 489
    %377 = vst.msk [vmem:[%s376] sm:$0x80] %vm361, %v360
    %s378 = scalar_lea.vmem [#allocation0], 16
    %v379 = vld [vmem:[%s378] sm:$0xff]
    %380 = vrot.lane.b32.xlu0 %v379, 120
    %v381 = vpop.permute.xlu0 %380
    %vm382 = vcmask 15360
    %s383 = scalar_lea.vmem [#allocation2], 528
    %384 = vst.msk [vmem:[%s383] sm:$0x1] %vm382, %v381
    %s385 = scalar_lea.vmem [#allocation2], 559
    %386 = vst.msk [vmem:[%s385] sm:$0x2] %vm382, %v381
    %s387 = scalar_lea.vmem [#allocation2], 590
    %388 = vst.msk [vmem:[%s387] sm:$0x4] %vm382, %v381
    %s389 = scalar_lea.vmem [#allocation2], 621
    %390 = vst.msk [vmem:[%s389] sm:$0x8] %vm382, %v381
    %s391 = scalar_lea.vmem [#allocation2], 652
    %392 = vst.msk [vmem:[%s391] sm:$0x10] %vm382, %v381
    %s393 = scalar_lea.vmem [#allocation2], 683
    %394 = vst.msk [vmem:[%s393] sm:$0x20] %vm382, %v381
    %s395 = scalar_lea.vmem [#allocation2], 714
    %396 = vst.msk [vmem:[%s395] sm:$0x40] %vm382, %v381
    %s397 = scalar_lea.vmem [#allocation2], 745
    %398 = vst.msk [vmem:[%s397] sm:$0x80] %vm382, %v381
    %s399 = scalar_lea.vmem [#allocation0], 24
    %v400 = vld [vmem:[%s399] sm:$0xff]
    %401 = vrot.lane.b32.xlu0 %v400, 120
    %v402 = vpop.permute.xlu0 %401
    %vm403 = vcmask 15360
    %s404 = scalar_lea.vmem [#allocation2], 784
    %405 = vst.msk [vmem:[%s404] sm:$0x1] %vm403, %v402
    %s406 = scalar_lea.vmem [#allocation2], 815
    %407 = vst.msk [vmem:[%s406] sm:$0x2] %vm403, %v402
    %s408 = scalar_lea.vmem [#allocation2], 846
    %409 = vst.msk [vmem:[%s408] sm:$0x4] %vm403, %v402
    %s410 = scalar_lea.vmem [#allocation2], 877
    %411 = vst.msk [vmem:[%s410] sm:$0x8] %vm403, %v402
    %s412 = scalar_lea.vmem [#allocation2], 908
    %413 = vst.msk [vmem:[%s412] sm:$0x10] %vm403, %v402
    %s414 = scalar_lea.vmem [#allocation2], 939
    %415 = vst.msk [vmem:[%s414] sm:$0x20] %vm403, %v402
    %s416 = scalar_lea.vmem [#allocation2], 970
    %417 = vst.msk [vmem:[%s416] sm:$0x40] %vm403, %v402
    %s418 = scalar_lea.vmem [#allocation2], 1001
    %419 = vst.msk [vmem:[%s418] sm:$0x80] %vm403, %v402
    %v420 = vld [vmem:[#allocation0] sm:$0xff]
    %421 = vrot.lane.b32.xlu0 %v420, 118
    %v422 = vpop.permute.xlu0 %421
    %vm423 = vcmask 15360
    %s424 = scalar_lea.vmem [#allocation2], 17
    %425 = vst.msk [vmem:[%s424] sm:$0x1] %vm423, %v422
    %s426 = scalar_lea.vmem [#allocation2], 48
    %427 = vst.msk [vmem:[%s426] sm:$0x2] %vm423, %v422
    %s428 = scalar_lea.vmem [#allocation2], 79
    %429 = vst.msk [vmem:[%s428] sm:$0x4] %vm423, %v422
    %s430 = scalar_lea.vmem [#allocation2], 110
    %431 = vst.msk [vmem:[%s430] sm:$0x8] %vm423, %v422
    %s432 = scalar_lea.vmem [#allocation2], 141
    %433 = vst.msk [vmem:[%s432] sm:$0x10] %vm423, %v422
    %s434 = scalar_lea.vmem [#allocation2], 172
    %435 = vst.msk [vmem:[%s434] sm:$0x20] %vm423, %v422
    %s436 = scalar_lea.vmem [#allocation2], 203
    %437 = vst.msk [vmem:[%s436] sm:$0x40] %vm423, %v422
    %s438 = scalar_lea.vmem [#allocation2], 234
    %439 = vst.msk [vmem:[%s438] sm:$0x80] %vm423, %v422
    %s440 = scalar_lea.vmem [#allocation0], 8
    %v441 = vld [vmem:[%s440] sm:$0xff]
    %442 = vrot.lane.b32.xlu0 %v441, 118
    %v443 = vpop.permute.xlu0 %442
    %vm444 = vcmask 15360
    %s445 = scalar_lea.vmem [#allocation2], 273
    %446 = vst.msk [vmem:[%s445] sm:$0x1] %vm444, %v443
    %s447 = scalar_lea.vmem [#allocation2], 304
    %448 = vst.msk [vmem:[%s447] sm:$0x2] %vm444, %v443
    %s449 = scalar_lea.vmem [#allocation2], 335
    %450 = vst.msk [vmem:[%s449] sm:$0x4] %vm444, %v443
    %s451 = scalar_lea.vmem [#allocation2], 366
    %452 = vst.msk [vmem:[%s451] sm:$0x8] %vm444, %v443
    %s453 = scalar_lea.vmem [#allocation2], 397
    %454 = vst.msk [vmem:[%s453] sm:$0x10] %vm444, %v443
    %s455 = scalar_lea.vmem [#allocation2], 428
    %456 = vst.msk [vmem:[%s455] sm:$0x20] %vm444, %v443
    %s457 = scalar_lea.vmem [#allocation2], 459
    %458 = vst.msk [vmem:[%s457] sm:$0x40] %vm444, %v443
    %s459 = scalar_lea.vmem [#allocation2], 490
    %460 = vst.msk [vmem:[%s459] sm:$0x80] %vm444, %v443
    %s461 = scalar_lea.vmem [#allocation0], 16
    %v462 = vld [vmem:[%s461] sm:$0xff]
    %463 = vrot.lane.b32.xlu0 %v462, 118
    %v464 = vpop.permute.xlu0 %463
    %vm465 = vcmask 15360
    %s466 = scalar_lea.vmem [#allocation2], 529
    %467 = vst.msk [vmem:[%s466] sm:$0x1] %vm465, %v464
    %s468 = scalar_lea.vmem [#allocation2], 560
    %469 = vst.msk [vmem:[%s468] sm:$0x2] %vm465, %v464
    %s470 = scalar_lea.vmem [#allocation2], 591
    %471 = vst.msk [vmem:[%s470] sm:$0x4] %vm465, %v464
    %s472 = scalar_lea.vmem [#allocation2], 622
    %473 = vst.msk [vmem:[%s472] sm:$0x8] %vm465, %v464
    %s474 = scalar_lea.vmem [#allocation2], 653
    %475 = vst.msk [vmem:[%s474] sm:$0x10] %vm465, %v464
    %s476 = scalar_lea.vmem [#allocation2], 684
    %477 = vst.msk [vmem:[%s476] sm:$0x20] %vm465, %v464
    %s478 = scalar_lea.vmem [#allocation2], 715
    %479 = vst.msk [vmem:[%s478] sm:$0x40] %vm465, %v464
    %s480 = scalar_lea.vmem [#allocation2], 746
    %481 = vst.msk [vmem:[%s480] sm:$0x80] %vm465, %v464
    %s482 = scalar_lea.vmem [#allocation0], 24
    %v483 = vld [vmem:[%s482] sm:$0xff]
    %484 = vrot.lane.b32.xlu0 %v483, 118
    %v485 = vpop.permute.xlu0 %484
    %vm486 = vcmask 15360
    %s487 = scalar_lea.vmem [#allocation2], 785
    %488 = vst.msk [vmem:[%s487] sm:$0x1] %vm486, %v485
    %s489 = scalar_lea.vmem [#allocation2], 816
    %490 = vst.msk [vmem:[%s489] sm:$0x2] %vm486, %v485
    %s491 = scalar_lea.vmem [#allocation2], 847
    %492 = vst.msk [vmem:[%s491] sm:$0x4] %vm486, %v485
    %s493 = scalar_lea.vmem [#allocation2], 878
    %494 = vst.msk [vmem:[%s493] sm:$0x8] %vm486, %v485
    %s495 = scalar_lea.vmem [#allocation2], 909
    %496 = vst.msk [vmem:[%s495] sm:$0x10] %vm486, %v485
    %s497 = scalar_lea.vmem [#allocation2], 940
    %498 = vst.msk [vmem:[%s497] sm:$0x20] %vm486, %v485
    %s499 = scalar_lea.vmem [#allocation2], 971
    %500 = vst.msk [vmem:[%s499] sm:$0x40] %vm486, %v485
    %s501 = scalar_lea.vmem [#allocation2], 1002
    %502 = vst.msk [vmem:[%s501] sm:$0x80] %vm486, %v485
    %v503 = vld [vmem:[#allocation0] sm:$0xff]
    %504 = vrot.lane.b32.xlu0 %v503, 116
    %v505 = vpop.permute.xlu0 %504
    %vm506 = vcmask 15360
    %s507 = scalar_lea.vmem [#allocation2], 24
    %508 = vst.msk [vmem:[%s507] sm:$0x1] %vm506, %v505
    %s509 = scalar_lea.vmem [#allocation2], 55
    %510 = vst.msk [vmem:[%s509] sm:$0x2] %vm506, %v505
    %s511 = scalar_lea.vmem [#allocation2], 86
    %512 = vst.msk [vmem:[%s511] sm:$0x4] %vm506, %v505
    %s513 = scalar_lea.vmem [#allocation2], 117
    %514 = vst.msk [vmem:[%s513] sm:$0x8] %vm506, %v505
    %s515 = scalar_lea.vmem [#allocation2], 148
    %516 = vst.msk [vmem:[%s515] sm:$0x10] %vm506, %v505
    %s517 = scalar_lea.vmem [#allocation2], 179
    %518 = vst.msk [vmem:[%s517] sm:$0x20] %vm506, %v505
    %s519 = scalar_lea.vmem [#allocation2], 210
    %520 = vst.msk [vmem:[%s519] sm:$0x40] %vm506, %v505
    %s521 = scalar_lea.vmem [#allocation2], 241
    %522 = vst.msk [vmem:[%s521] sm:$0x80] %vm506, %v505
    %s523 = scalar_lea.vmem [#allocation0], 8
    %v524 = vld [vmem:[%s523] sm:$0xff]
    %525 = vrot.lane.b32.xlu0 %v524, 116
    %v526 = vpop.permute.xlu0 %525
    %vm527 = vcmask 15360
    %s528 = scalar_lea.vmem [#allocation2], 280
    %529 = vst.msk [vmem:[%s528] sm:$0x1] %vm527, %v526
    %s530 = scalar_lea.vmem [#allocation2], 311
    %531 = vst.msk [vmem:[%s530] sm:$0x2] %vm527, %v526
    %s532 = scalar_lea.vmem [#allocation2], 342
    %533 = vst.msk [vmem:[%s532] sm:$0x4] %vm527, %v526
    %s534 = scalar_lea.vmem [#allocation2], 373
    %535 = vst.msk [vmem:[%s534] sm:$0x8] %vm527, %v526
    %s536 = scalar_lea.vmem [#allocation2], 404
    %537 = vst.msk [vmem:[%s536] sm:$0x10] %vm527, %v526
    %s538 = scalar_lea.vmem [#allocation2], 435
    %539 = vst.msk [vmem:[%s538] sm:$0x20] %vm527, %v526
    %s540 = scalar_lea.vmem [#allocation2], 466
    %541 = vst.msk [vmem:[%s540] sm:$0x40] %vm527, %v526
    %s542 = scalar_lea.vmem [#allocation2], 497
    %543 = vst.msk [vmem:[%s542] sm:$0x80] %vm527, %v526
    %s544 = scalar_lea.vmem [#allocation0], 16
    %v545 = vld [vmem:[%s544] sm:$0xff]
    %546 = vrot.lane.b32.xlu0 %v545, 116
    %v547 = vpop.permute.xlu0 %546
    %vm548 = vcmask 15360
    %s549 = scalar_lea.vmem [#allocation2], 536
    %550 = vst.msk [vmem:[%s549] sm:$0x1] %vm548, %v547
    %s551 = scalar_lea.vmem [#allocation2], 567
    %552 = vst.msk [vmem:[%s551] sm:$0x2] %vm548, %v547
    %s553 = scalar_lea.vmem [#allocation2], 598
    %554 = vst.msk [vmem:[%s553] sm:$0x4] %vm548, %v547
    %s555 = scalar_lea.vmem [#allocation2], 629
    %556 = vst.msk [vmem:[%s555] sm:$0x8] %vm548, %v547
    %s557 = scalar_lea.vmem [#allocation2], 660
    %558 = vst.msk [vmem:[%s557] sm:$0x10] %vm548, %v547
    %s559 = scalar_lea.vmem [#allocation2], 691
    %560 = vst.msk [vmem:[%s559] sm:$0x20] %vm548, %v547
    %s561 = scalar_lea.vmem [#allocation2], 722
    %562 = vst.msk [vmem:[%s561] sm:$0x40] %vm548, %v547
    %s563 = scalar_lea.vmem [#allocation2], 753
    %564 = vst.msk [vmem:[%s563] sm:$0x80] %vm548, %v547
    %s565 = scalar_lea.vmem [#allocation0], 24
    %v566 = vld [vmem:[%s565] sm:$0xff]
    %567 = vrot.lane.b32.xlu0 %v566, 116
    %v568 = vpop.permute.xlu0 %567
    %vm569 = vcmask 15360
    %s570 = scalar_lea.vmem [#allocation2], 792
    %571 = vst.msk [vmem:[%s570] sm:$0x1] %vm569, %v568
    %s572 = scalar_lea.vmem [#allocation2], 823
    %573 = vst.msk [vmem:[%s572] sm:$0x2] %vm569, %v568
    %s574 = scalar_lea.vmem [#allocation2], 854
    %575 = vst.msk [vmem:[%s574] sm:$0x4] %vm569, %v568
    %s576 = scalar_lea.vmem [#allocation2], 885
    %577 = vst.msk [vmem:[%s576] sm:$0x8] %vm569, %v568
    %s578 = scalar_lea.vmem [#allocation2], 916
    %579 = vst.msk [vmem:[%s578] sm:$0x10] %vm569, %v568
    %s580 = scalar_lea.vmem [#allocation2], 947
    %581 = vst.msk [vmem:[%s580] sm:$0x20] %vm569, %v568
    %s582 = scalar_lea.vmem [#allocation2], 978
    %583 = vst.msk [vmem:[%s582] sm:$0x40] %vm569, %v568
    %s584 = scalar_lea.vmem [#allocation2], 1009
    %585 = vst.msk [vmem:[%s584] sm:$0x80] %vm569, %v568
    %v586 = vld [vmem:[#allocation0] sm:$0xff]
    %587 = vrot.lane.b32.xlu0 %v586, 114
    %v588 = vpop.permute.xlu0 %587
    %vm589 = vcmask 15360
    %s590 = scalar_lea.vmem [#allocation2], 25
    %591 = vst.msk [vmem:[%s590] sm:$0x1] %vm589, %v588
    %s592 = scalar_lea.vmem [#allocation2], 56
    %593 = vst.msk [vmem:[%s592] sm:$0x2] %vm589, %v588
    %s594 = scalar_lea.vmem [#allocation2], 87
    %595 = vst.msk [vmem:[%s594] sm:$0x4] %vm589, %v588
    %s596 = scalar_lea.vmem [#allocation2], 118
    %597 = vst.msk [vmem:[%s596] sm:$0x8] %vm589, %v588
    %s598 = scalar_lea.vmem [#allocation2], 149
    %599 = vst.msk [vmem:[%s598] sm:$0x10] %vm589, %v588
    %s600 = scalar_lea.vmem [#allocation2], 180
    %601 = vst.msk [vmem:[%s600] sm:$0x20] %vm589, %v588
    %s602 = scalar_lea.vmem [#allocation2], 211
    %603 = vst.msk [vmem:[%s602] sm:$0x40] %vm589, %v588
    %s604 = scalar_lea.vmem [#allocation2], 242
    %605 = vst.msk [vmem:[%s604] sm:$0x80] %vm589, %v588
    %s606 = scalar_lea.vmem [#allocation0], 8
    %v607 = vld [vmem:[%s606] sm:$0xff]
    %608 = vrot.lane.b32.xlu0 %v607, 114
    %v609 = vpop.permute.xlu0 %608
    %vm610 = vcmask 15360
    %s611 = scalar_lea.vmem [#allocation2], 281
    %612 = vst.msk [vmem:[%s611] sm:$0x1] %vm610, %v609
    %s613 = scalar_lea.vmem [#allocation2], 312
    %614 = vst.msk [vmem:[%s613] sm:$0x2] %vm610, %v609
    %s615 = scalar_lea.vmem [#allocation2], 343
    %616 = vst.msk [vmem:[%s615] sm:$0x4] %vm610, %v609
    %s617 = scalar_lea.vmem [#allocation2], 374
    %618 = vst.msk [vmem:[%s617] sm:$0x8] %vm610, %v609
    %s619 = scalar_lea.vmem [#allocation2], 405
    %620 = vst.msk [vmem:[%s619] sm:$0x10] %vm610, %v609
    %s621 = scalar_lea.vmem [#allocation2], 436
    %622 = vst.msk [vmem:[%s621] sm:$0x20] %vm610, %v609
    %s623 = scalar_lea.vmem [#allocation2], 467
    %624 = vst.msk [vmem:[%s623] sm:$0x40] %vm610, %v609
    %s625 = scalar_lea.vmem [#allocation2], 498
    %626 = vst.msk [vmem:[%s625] sm:$0x80] %vm610, %v609
    %s627 = scalar_lea.vmem [#allocation0], 16
    %v628 = vld [vmem:[%s627] sm:$0xff]
    %629 = vrot.lane.b32.xlu0 %v628, 114
    %v630 = vpop.permute.xlu0 %629
    %vm631 = vcmask 15360
    %s632 = scalar_lea.vmem [#allocation2], 537
    %633 = vst.msk [vmem:[%s632] sm:$0x1] %vm631, %v630
    %s634 = scalar_lea.vmem [#allocation2], 568
    %635 = vst.msk [vmem:[%s634] sm:$0x2] %vm631, %v630
    %s636 = scalar_lea.vmem [#allocation2], 599
    %637 = vst.msk [vmem:[%s636] sm:$0x4] %vm631, %v630
    %s638 = scalar_lea.vmem [#allocation2], 630
    %639 = vst.msk [vmem:[%s638] sm:$0x8] %vm631, %v630
    %s640 = scalar_lea.vmem [#allocation2], 661
    %641 = vst.msk [vmem:[%s640] sm:$0x10] %vm631, %v630
    %s642 = scalar_lea.vmem [#allocation2], 692
    %643 = vst.msk [vmem:[%s642] sm:$0x20] %vm631, %v630
    %s644 = scalar_lea.vmem [#allocation2], 723
    %645 = vst.msk [vmem:[%s644] sm:$0x40] %vm631, %v630
    %s646 = scalar_lea.vmem [#allocation2], 754
    %647 = vst.msk [vmem:[%s646] sm:$0x80] %vm631, %v630
    %s648 = scalar_lea.vmem [#allocation0], 24
    %v649 = vld [vmem:[%s648] sm:$0xff]
    %650 = vrot.lane.b32.xlu0 %v649, 114
    %v651 = vpop.permute.xlu0 %650
    %vm652 = vcmask 15360
    %s653 = scalar_lea.vmem [#allocation2], 793
    %654 = vst.msk [vmem:[%s653] sm:$0x1] %vm652, %v651
    %s655 = scalar_lea.vmem [#allocation2], 824
    %656 = vst.msk [vmem:[%s655] sm:$0x2] %vm652, %v651
    %s657 = scalar_lea.vmem [#allocation2], 855
    %658 = vst.msk [vmem:[%s657] sm:$0x4] %vm652, %v651
    %s659 = scalar_lea.vmem [#allocation2], 886
    %660 = vst.msk [vmem:[%s659] sm:$0x8] %vm652, %v651
    %s661 = scalar_lea.vmem [#allocation2], 917
    %662 = vst.msk [vmem:[%s661] sm:$0x10] %vm652, %v651
    %s663 = scalar_lea.vmem [#allocation2], 948
    %664 = vst.msk [vmem:[%s663] sm:$0x20] %vm652, %v651
    %s665 = scalar_lea.vmem [#allocation2], 979
    %666 = vst.msk [vmem:[%s665] sm:$0x40] %vm652, %v651
    %s667 = scalar_lea.vmem [#allocation2], 1010
    %668 = vst.msk [vmem:[%s667] sm:$0x80] %vm652, %v651
    %s670 = ssub.s32 4, 1
    %v671 = vld [vmem:[#allocation2] sm:%s670]
    %s673 = ssub.s32 4, 1
    %674 = vst [vmem:[%s1] sm:%s673] %v671
    %s675 = scalar_lea.vmem [#allocation2], 8
    %v676 = vld [vmem:[%s675] sm:%s670]
    %s678 = ssub.s32 4, 1
    %s679 = scalar_lea.vmem %s1, 2
    %680 = vst [vmem:[%s679] sm:%s678] %v676
    %s681 = scalar_lea.vmem [#allocation2], 16
    %v682 = vld [vmem:[%s681] sm:%s670]
    %s684 = ssub.s32 4, 1
    %s685 = scalar_lea.vmem %s1, 4
    %686 = vst [vmem:[%s685] sm:%s684] %v682
    %s687 = scalar_lea.vmem [#allocation2], 24
    %v688 = vld [vmem:[%s687] sm:%s670]
    %s690 = ssub.s32 4, 1
    %s691 = scalar_lea.vmem %s1, 6
    %692 = vst [vmem:[%s691] sm:%s690] %v688
    %s693 = scalar_lea.vmem [#allocation2], 32
    %v694 = vld [vmem:[%s693] sm:%s670]
    %s696 = ssub.s32 4, 1
    %s697 = scalar_lea.vmem %s1, 8
    %698 = vst [vmem:[%s697] sm:%s696] %v694
    %s699 = scalar_lea.vmem [#allocation2], 40
    %v700 = vld [vmem:[%s699] sm:%s670]
    %s702 = ssub.s32 4, 1
    %s703 = scalar_lea.vmem %s1, 10
    %704 = vst [vmem:[%s703] sm:%s702] %v700
    %s705 = scalar_lea.vmem [#allocation2], 48
    %v706 = vld [vmem:[%s705] sm:%s670]
    %s708 = ssub.s32 4, 1
    %s709 = scalar_lea.vmem %s1, 12
    %710 = vst [vmem:[%s709] sm:%s708] %v706
    %s711 = scalar_lea.vmem [#allocation2], 56
    %v712 = vld [vmem:[%s711] sm:%s670]
    %s714 = ssub.s32 4, 1
    %s715 = scalar_lea.vmem %s1, 14
    %716 = vst [vmem:[%s715] sm:%s714] %v712
    %s717 = scalar_lea.vmem [#allocation2], 64
    %v718 = vld [vmem:[%s717] sm:%s670]
    %s720 = ssub.s32 4, 1
    %s721 = scalar_lea.vmem %s1, 16
    %722 = vst [vmem:[%s721] sm:%s720] %v718
    %s723 = scalar_lea.vmem [#allocation2], 72
    %v724 = vld [vmem:[%s723] sm:%s670]
    %s726 = ssub.s32 4, 1
    %s727 = scalar_lea.vmem %s1, 18
    %728 = vst [vmem:[%s727] sm:%s726] %v724
    %s729 = scalar_lea.vmem [#allocation2], 80
    %v730 = vld [vmem:[%s729] sm:%s670]
    %s732 = ssub.s32 4, 1
    %s733 = scalar_lea.vmem %s1, 20
    %734 = vst [vmem:[%s733] sm:%s732] %v730
    %s735 = scalar_lea.vmem [#allocation2], 88
    %v736 = vld [vmem:[%s735] sm:%s670]
    %s738 = ssub.s32 4, 1
    %s739 = scalar_lea.vmem %s1, 22
    %740 = vst [vmem:[%s739] sm:%s738] %v736
    %s741 = scalar_lea.vmem [#allocation2], 96
    %v742 = vld [vmem:[%s741] sm:%s670]
    %s744 = ssub.s32 4, 1
    %s745 = scalar_lea.vmem %s1, 24
    %746 = vst [vmem:[%s745] sm:%s744] %v742
    %s747 = scalar_lea.vmem [#allocation2], 104
    %v748 = vld [vmem:[%s747] sm:%s670]
    %s750 = ssub.s32 4, 1
    %s751 = scalar_lea.vmem %s1, 26
    %752 = vst [vmem:[%s751] sm:%s750] %v748
    %s753 = scalar_lea.vmem [#allocation2], 112
    %v754 = vld [vmem:[%s753] sm:%s670]
    %s756 = ssub.s32 4, 1
    %s757 = scalar_lea.vmem %s1, 28
    %758 = vst [vmem:[%s757] sm:%s756] %v754
    %s759 = scalar_lea.vmem [#allocation2], 120
    %v760 = vld [vmem:[%s759] sm:%s670]
    %s762 = ssub.s32 4, 1
    %s763 = scalar_lea.vmem %s1, 30
    %764 = vst [vmem:[%s763] sm:%s762] %v760
    %s765 = scalar_lea.vmem [#allocation2], 128
    %v766 = vld [vmem:[%s765] sm:%s670]
    %s768 = ssub.s32 4, 1
    %s769 = scalar_lea.vmem %s1, 32
    %770 = vst [vmem:[%s769] sm:%s768] %v766
    %s771 = scalar_lea.vmem [#allocation2], 136
    %v772 = vld [vmem:[%s771] sm:%s670]
    %s774 = ssub.s32 4, 1
    %s775 = scalar_lea.vmem %s1, 34
    %776 = vst [vmem:[%s775] sm:%s774] %v772
    %s777 = scalar_lea.vmem [#allocation2], 144
    %v778 = vld [vmem:[%s777] sm:%s670]
    %s780 = ssub.s32 4, 1
    %s781 = scalar_lea.vmem %s1, 36
    %782 = vst [vmem:[%s781] sm:%s780] %v778
    %s783 = scalar_lea.vmem [#allocation2], 152
    %v784 = vld [vmem:[%s783] sm:%s670]
    %s786 = ssub.s32 4, 1
    %s787 = scalar_lea.vmem %s1, 38
    %788 = vst [vmem:[%s787] sm:%s786] %v784
    %s789 = scalar_lea.vmem [#allocation2], 160
    %v790 = vld [vmem:[%s789] sm:%s670]
    %s792 = ssub.s32 4, 1
    %s793 = scalar_lea.vmem %s1, 40
    %794 = vst [vmem:[%s793] sm:%s792] %v790
    %s795 = scalar_lea.vmem [#allocation2], 168
    %v796 = vld [vmem:[%s795] sm:%s670]
    %s798 = ssub.s32 4, 1
    %s799 = scalar_lea.vmem %s1, 42
    %800 = vst [vmem:[%s799] sm:%s798] %v796
    %s801 = scalar_lea.vmem [#allocation2], 176
    %v802 = vld [vmem:[%s801] sm:%s670]
    %s804 = ssub.s32 4, 1
    %s805 = scalar_lea.vmem %s1, 44
    %806 = vst [vmem:[%s805] sm:%s804] %v802
    %s807 = scalar_lea.vmem [#allocation2], 184
    %v808 = vld [vmem:[%s807] sm:%s670]
    %s810 = ssub.s32 4, 1
    %s811 = scalar_lea.vmem %s1, 46
    %812 = vst [vmem:[%s811] sm:%s810] %v808
    %s813 = scalar_lea.vmem [#allocation2], 192
    %v814 = vld [vmem:[%s813] sm:%s670]
    %s816 = ssub.s32 4, 1
    %s817 = scalar_lea.vmem %s1, 48
    %818 = vst [vmem:[%s817] sm:%s816] %v814
    %s819 = scalar_lea.vmem [#allocation2], 200
    %v820 = vld [vmem:[%s819] sm:%s670]
    %s822 = ssub.s32 4, 1
    %s823 = scalar_lea.vmem %s1, 50
    %824 = vst [vmem:[%s823] sm:%s822] %v820
    %s825 = scalar_lea.vmem [#allocation2], 208
    %v826 = vld [vmem:[%s825] sm:%s670]
    %s828 = ssub.s32 4, 1
    %s829 = scalar_lea.vmem %s1, 52
    %830 = vst [vmem:[%s829] sm:%s828] %v826
    %s831 = scalar_lea.vmem [#allocation2], 216
    %v832 = vld [vmem:[%s831] sm:%s670]
    %s834 = ssub.s32 4, 1
    %s835 = scalar_lea.vmem %s1, 54
    %836 = vst [vmem:[%s835] sm:%s834] %v832
    %s837 = scalar_lea.vmem [#allocation2], 224
    %v838 = vld [vmem:[%s837] sm:%s670]
    %s840 = ssub.s32 4, 1
    %s841 = scalar_lea.vmem %s1, 56
    %842 = vst [vmem:[%s841] sm:%s840] %v838
    %s843 = scalar_lea.vmem [#allocation2], 232
    %v844 = vld [vmem:[%s843] sm:%s670]
    %s846 = ssub.s32 4, 1
    %s847 = scalar_lea.vmem %s1, 58
    %848 = vst [vmem:[%s847] sm:%s846] %v844
    %s849 = scalar_lea.vmem [#allocation2], 240
    %v850 = vld [vmem:[%s849] sm:%s670]
    %s852 = ssub.s32 4, 1
    %s853 = scalar_lea.vmem %s1, 60
    %854 = vst [vmem:[%s853] sm:%s852] %v850
    %s855 = scalar_lea.vmem [#allocation2], 248
    %v856 = vld [vmem:[%s855] sm:%s670]
    %s858 = ssub.s32 4, 1
    %s859 = scalar_lea.vmem %s1, 62
    %860 = vst [vmem:[%s859] sm:%s858] %v856
    %s861 = scalar_lea.vmem [#allocation2], 256
    %v862 = vld [vmem:[%s861] sm:%s670]
    %s864 = ssub.s32 4, 1
    %s865 = scalar_lea.vmem %s1, 64
    %866 = vst [vmem:[%s865] sm:%s864] %v862
    %s867 = scalar_lea.vmem [#allocation2], 264
    %v868 = vld [vmem:[%s867] sm:%s670]
    %s870 = ssub.s32 4, 1
    %s871 = scalar_lea.vmem %s1, 66
    %872 = vst [vmem:[%s871] sm:%s870] %v868
    %s873 = scalar_lea.vmem [#allocation2], 272
    %v874 = vld [vmem:[%s873] sm:%s670]
    %s876 = ssub.s32 4, 1
    %s877 = scalar_lea.vmem %s1, 68
    %878 = vst [vmem:[%s877] sm:%s876] %v874
    %s879 = scalar_lea.vmem [#allocation2], 280
    %v880 = vld [vmem:[%s879] sm:%s670]
    %s882 = ssub.s32 4, 1
    %s883 = scalar_lea.vmem %s1, 70
    %884 = vst [vmem:[%s883] sm:%s882] %v880
    %s885 = scalar_lea.vmem [#allocation2], 288
    %v886 = vld [vmem:[%s885] sm:%s670]
    %s888 = ssub.s32 4, 1
    %s889 = scalar_lea.vmem %s1, 72
    %890 = vst [vmem:[%s889] sm:%s888] %v886
    %s891 = scalar_lea.vmem [#allocation2], 296
    %v892 = vld [vmem:[%s891] sm:%s670]
    %s894 = ssub.s32 4, 1
    %s895 = scalar_lea.vmem %s1, 74
    %896 = vst [vmem:[%s895] sm:%s894] %v892
    %s897 = scalar_lea.vmem [#allocation2], 304
    %v898 = vld [vmem:[%s897] sm:%s670]
    %s900 = ssub.s32 4, 1
    %s901 = scalar_lea.vmem %s1, 76
    %902 = vst [vmem:[%s901] sm:%s900] %v898
    %s903 = scalar_lea.vmem [#allocation2], 312
    %v904 = vld [vmem:[%s903] sm:%s670]
    %s906 = ssub.s32 4, 1
    %s907 = scalar_lea.vmem %s1, 78
    %908 = vst [vmem:[%s907] sm:%s906] %v904
    %s909 = scalar_lea.vmem [#allocation2], 320
    %v910 = vld [vmem:[%s909] sm:%s670]
    %s912 = ssub.s32 4, 1
    %s913 = scalar_lea.vmem %s1, 80
    %914 = vst [vmem:[%s913] sm:%s912] %v910
    %s915 = scalar_lea.vmem [#allocation2], 328
    %v916 = vld [vmem:[%s915] sm:%s670]
    %s918 = ssub.s32 4, 1
    %s919 = scalar_lea.vmem %s1, 82
    %920 = vst [vmem:[%s919] sm:%s918] %v916
    %s921 = scalar_lea.vmem [#allocation2], 336
    %v922 = vld [vmem:[%s921] sm:%s670]
    %s924 = ssub.s32 4, 1
    %s925 = scalar_lea.vmem %s1, 84
    %926 = vst [vmem:[%s925] sm:%s924] %v922
    %s927 = scalar_lea.vmem [#allocation2], 344
    %v928 = vld [vmem:[%s927] sm:%s670]
    %s930 = ssub.s32 4, 1
    %s931 = scalar_lea.vmem %s1, 86
    %932 = vst [vmem:[%s931] sm:%s930] %v928
    %s933 = scalar_lea.vmem [#allocation2], 352
    %v934 = vld [vmem:[%s933] sm:%s670]
    %s936 = ssub.s32 4, 1
    %s937 = scalar_lea.vmem %s1, 88
    %938 = vst [vmem:[%s937] sm:%s936] %v934
    %s939 = scalar_lea.vmem [#allocation2], 360
    %v940 = vld [vmem:[%s939] sm:%s670]
    %s942 = ssub.s32 4, 1
    %s943 = scalar_lea.vmem %s1, 90
    %944 = vst [vmem:[%s943] sm:%s942] %v940
    %s945 = scalar_lea.vmem [#allocation2], 368
    %v946 = vld [vmem:[%s945] sm:%s670]
    %s948 = ssub.s32 4, 1
    %s949 = scalar_lea.vmem %s1, 92
    %950 = vst [vmem:[%s949] sm:%s948] %v946
    %s951 = scalar_lea.vmem [#allocation2], 376
    %v952 = vld [vmem:[%s951] sm:%s670]
    %s954 = ssub.s32 4, 1
    %s955 = scalar_lea.vmem %s1, 94
    %956 = vst [vmem:[%s955] sm:%s954] %v952
    %s957 = scalar_lea.vmem [#allocation2], 384
    %v958 = vld [vmem:[%s957] sm:%s670]
    %s960 = ssub.s32 4, 1
    %s961 = scalar_lea.vmem %s1, 96
    %962 = vst [vmem:[%s961] sm:%s960] %v958
    %s963 = scalar_lea.vmem [#allocation2], 392
    %v964 = vld [vmem:[%s963] sm:%s670]
    %s966 = ssub.s32 4, 1
    %s967 = scalar_lea.vmem %s1, 98
    %968 = vst [vmem:[%s967] sm:%s966] %v964
    %s969 = scalar_lea.vmem [#allocation2], 400
    %v970 = vld [vmem:[%s969] sm:%s670]
    %s972 = ssub.s32 4, 1
    %s973 = scalar_lea.vmem %s1, 100
    %974 = vst [vmem:[%s973] sm:%s972] %v970
    %s975 = scalar_lea.vmem [#allocation2], 408
    %v976 = vld [vmem:[%s975] sm:%s670]
    %s978 = ssub.s32 4, 1
    %s979 = scalar_lea.vmem %s1, 102
    %980 = vst [vmem:[%s979] sm:%s978] %v976
    %s981 = scalar_lea.vmem [#allocation2], 416
    %v982 = vld [vmem:[%s981] sm:%s670]
    %s984 = ssub.s32 4, 1
    %s985 = scalar_lea.vmem %s1, 104
    %986 = vst [vmem:[%s985] sm:%s984] %v982
    %s987 = scalar_lea.vmem [#allocation2], 424
    %v988 = vld [vmem:[%s987] sm:%s670]
    %s990 = ssub.s32 4, 1
    %s991 = scalar_lea.vmem %s1, 106
    %992 = vst [vmem:[%s991] sm:%s990] %v988
    %s993 = scalar_lea.vmem [#allocation2], 432
    %v994 = vld [vmem:[%s993] sm:%s670]
    %s996 = ssub.s32 4, 1
    %s997 = scalar_lea.vmem %s1, 108
    %998 = vst [vmem:[%s997] sm:%s996] %v994
    %s999 = scalar_lea.vmem [#allocation2], 440
    %v1000 = vld [vmem:[%s999] sm:%s670]
    %s1002 = ssub.s32 4, 1
    %s1003 = scalar_lea.vmem %s1, 110
    %1004 = vst [vmem:[%s1003] sm:%s1002] %v1000
    %s1005 = scalar_lea.vmem [#allocation2], 448
    %v1006 = vld [vmem:[%s1005] sm:%s670]
    %s1008 = ssub.s32 4, 1
    %s1009 = scalar_lea.vmem %s1, 112
    %1010 = vst [vmem:[%s1009] sm:%s1008] %v1006
    %s1011 = scalar_lea.vmem [#allocation2], 456
    %v1012 = vld [vmem:[%s1011] sm:%s670]
    %s1014 = ssub.s32 4, 1
    %s1015 = scalar_lea.vmem %s1, 114
    %1016 = vst [vmem:[%s1015] sm:%s1014] %v1012
    %s1017 = scalar_lea.vmem [#allocation2], 464
    %v1018 = vld [vmem:[%s1017] sm:%s670]
    %s1020 = ssub.s32 4, 1
    %s1021 = scalar_lea.vmem %s1, 116
    %1022 = vst [vmem:[%s1021] sm:%s1020] %v1018
    %s1023 = scalar_lea.vmem [#allocation2], 472
    %v1024 = vld [vmem:[%s1023] sm:%s670]
    %s1026 = ssub.s32 4, 1
    %s1027 = scalar_lea.vmem %s1, 118
    %1028 = vst [vmem:[%s1027] sm:%s1026] %v1024
    %s1029 = scalar_lea.vmem [#allocation2], 480
    %v1030 = vld [vmem:[%s1029] sm:%s670]
    %s1032 = ssub.s32 4, 1
    %s1033 = scalar_lea.vmem %s1, 120
    %1034 = vst [vmem:[%s1033] sm:%s1032] %v1030
    %s1035 = scalar_lea.vmem [#allocation2], 488
    %v1036 = vld [vmem:[%s1035] sm:%s670]
    %s1038 = ssub.s32 4, 1
    %s1039 = scalar_lea.vmem %s1, 122
    %1040 = vst [vmem:[%s1039] sm:%s1038] %v1036
    %s1041 = scalar_lea.vmem [#allocation2], 496
    %v1042 = vld [vmem:[%s1041] sm:%s670]
    %s1044 = ssub.s32 4, 1
    %s1045 = scalar_lea.vmem %s1, 124
    %1046 = vst [vmem:[%s1045] sm:%s1044] %v1042
    %s1047 = scalar_lea.vmem [#allocation2], 504
    %v1048 = vld [vmem:[%s1047] sm:%s670]
    %s1050 = ssub.s32 4, 1
    %s1051 = scalar_lea.vmem %s1, 126
    %1052 = vst [vmem:[%s1051] sm:%s1050] %v1048
    %s1053 = scalar_lea.vmem [#allocation2], 512
    %v1054 = vld [vmem:[%s1053] sm:%s670]
    %s1056 = ssub.s32 4, 1
    %s1057 = scalar_lea.vmem %s1, 128
    %1058 = vst [vmem:[%s1057] sm:%s1056] %v1054
    %s1059 = scalar_lea.vmem [#allocation2], 520
    %v1060 = vld [vmem:[%s1059] sm:%s670]
    %s1062 = ssub.s32 4, 1
    %s1063 = scalar_lea.vmem %s1, 130
    %1064 = vst [vmem:[%s1063] sm:%s1062] %v1060
    %s1065 = scalar_lea.vmem [#allocation2], 528
    %v1066 = vld [vmem:[%s1065] sm:%s670]
    %s1068 = ssub.s32 4, 1
    %s1069 = scalar_lea.vmem %s1, 132
    %1070 = vst [vmem:[%s1069] sm:%s1068] %v1066
    %s1071 = scalar_lea.vmem [#allocation2], 536
    %v1072 = vld [vmem:[%s1071] sm:%s670]
    %s1074 = ssub.s32 4, 1
    %s1075 = scalar_lea.vmem %s1, 134
    %1076 = vst [vmem:[%s1075] sm:%s1074] %v1072
    %s1077 = scalar_lea.vmem [#allocation2], 544
    %v1078 = vld [vmem:[%s1077] sm:%s670]
    %s1080 = ssub.s32 4, 1
    %s1081 = scalar_lea.vmem %s1, 136
    %1082 = vst [vmem:[%s1081] sm:%s1080] %v1078
    %s1083 = scalar_lea.vmem [#allocation2], 552
    %v1084 = vld [vmem:[%s1083] sm:%s670]
    %s1086 = ssub.s32 4, 1
    %s1087 = scalar_lea.vmem %s1, 138
    %1088 = vst [vmem:[%s1087] sm:%s1086] %v1084
    %s1089 = scalar_lea.vmem [#allocation2], 560
    %v1090 = vld [vmem:[%s1089] sm:%s670]
    %s1092 = ssub.s32 4, 1
    %s1093 = scalar_lea.vmem %s1, 140
    %1094 = vst [vmem:[%s1093] sm:%s1092] %v1090
    %s1095 = scalar_lea.vmem [#allocation2], 568
    %v1096 = vld [vmem:[%s1095] sm:%s670]
    %s1098 = ssub.s32 4, 1
    %s1099 = scalar_lea.vmem %s1, 142
    %1100 = vst [vmem:[%s1099] sm:%s1098] %v1096
    %s1101 = scalar_lea.vmem [#allocation2], 576
    %v1102 = vld [vmem:[%s1101] sm:%s670]
    %s1104 = ssub.s32 4, 1
    %s1105 = scalar_lea.vmem %s1, 144
    %1106 = vst [vmem:[%s1105] sm:%s1104] %v1102
    %s1107 = scalar_lea.vmem [#allocation2], 584
    %v1108 = vld [vmem:[%s1107] sm:%s670]
    %s1110 = ssub.s32 4, 1
    %s1111 = scalar_lea.vmem %s1, 146
    %1112 = vst [vmem:[%s1111] sm:%s1110] %v1108
    %s1113 = scalar_lea.vmem [#allocation2], 592
    %v1114 = vld [vmem:[%s1113] sm:%s670]
    %s1116 = ssub.s32 4, 1
    %s1117 = scalar_lea.vmem %s1, 148
    %1118 = vst [vmem:[%s1117] sm:%s1116] %v1114
    %s1119 = scalar_lea.vmem [#allocation2], 600
    %v1120 = vld [vmem:[%s1119] sm:%s670]
    %s1122 = ssub.s32 4, 1
    %s1123 = scalar_lea.vmem %s1, 150
    %1124 = vst [vmem:[%s1123] sm:%s1122] %v1120
    %s1125 = scalar_lea.vmem [#allocation2], 608
    %v1126 = vld [vmem:[%s1125] sm:%s670]
    %s1128 = ssub.s32 4, 1
    %s1129 = scalar_lea.vmem %s1, 152
    %1130 = vst [vmem:[%s1129] sm:%s1128] %v1126
    %s1131 = scalar_lea.vmem [#allocation2], 616
    %v1132 = vld [vmem:[%s1131] sm:%s670]
    %s1134 = ssub.s32 4, 1
    %s1135 = scalar_lea.vmem %s1, 154
    %1136 = vst [vmem:[%s1135] sm:%s1134] %v1132
    %s1137 = scalar_lea.vmem [#allocation2], 624
    %v1138 = vld [vmem:[%s1137] sm:%s670]
    %s1140 = ssub.s32 4, 1
    %s1141 = scalar_lea.vmem %s1, 156
    %1142 = vst [vmem:[%s1141] sm:%s1140] %v1138
    %s1143 = scalar_lea.vmem [#allocation2], 632
    %v1144 = vld [vmem:[%s1143] sm:%s670]
    %s1146 = ssub.s32 4, 1
    %s1147 = scalar_lea.vmem %s1, 158
    %1148 = vst [vmem:[%s1147] sm:%s1146] %v1144
    %s1149 = scalar_lea.vmem [#allocation2], 640
    %v1150 = vld [vmem:[%s1149] sm:%s670]
    %s1152 = ssub.s32 4, 1
    %s1153 = scalar_lea.vmem %s1, 160
    %1154 = vst [vmem:[%s1153] sm:%s1152] %v1150
    %s1155 = scalar_lea.vmem [#allocation2], 648
    %v1156 = vld [vmem:[%s1155] sm:%s670]
    %s1158 = ssub.s32 4, 1
    %s1159 = scalar_lea.vmem %s1, 162
    %1160 = vst [vmem:[%s1159] sm:%s1158] %v1156
    %s1161 = scalar_lea.vmem [#allocation2], 656
    %v1162 = vld [vmem:[%s1161] sm:%s670]
    %s1164 = ssub.s32 4, 1
    %s1165 = scalar_lea.vmem %s1, 164
    %1166 = vst [vmem:[%s1165] sm:%s1164] %v1162
    %s1167 = scalar_lea.vmem [#allocation2], 664
    %v1168 = vld [vmem:[%s1167] sm:%s670]
    %s1170 = ssub.s32 4, 1
    %s1171 = scalar_lea.vmem %s1, 166
    %1172 = vst [vmem:[%s1171] sm:%s1170] %v1168
    %s1173 = scalar_lea.vmem [#allocation2], 672
    %v1174 = vld [vmem:[%s1173] sm:%s670]
    %s1176 = ssub.s32 4, 1
    %s1177 = scalar_lea.vmem %s1, 168
    %1178 = vst [vmem:[%s1177] sm:%s1176] %v1174
    %s1179 = scalar_lea.vmem [#allocation2], 680
    %v1180 = vld [vmem:[%s1179] sm:%s670]
    %s1182 = ssub.s32 4, 1
    %s1183 = scalar_lea.vmem %s1, 170
    %1184 = vst [vmem:[%s1183] sm:%s1182] %v1180
    %s1185 = scalar_lea.vmem [#allocation2], 688
    %v1186 = vld [vmem:[%s1185] sm:%s670]
    %s1188 = ssub.s32 4, 1
    %s1189 = scalar_lea.vmem %s1, 172
    %1190 = vst [vmem:[%s1189] sm:%s1188] %v1186
    %s1191 = scalar_lea.vmem [#allocation2], 696
    %v1192 = vld [vmem:[%s1191] sm:%s670]
    %s1194 = ssub.s32 4, 1
    %s1195 = scalar_lea.vmem %s1, 174
    %1196 = vst [vmem:[%s1195] sm:%s1194] %v1192
    %s1197 = scalar_lea.vmem [#allocation2], 704
    %v1198 = vld [vmem:[%s1197] sm:%s670]
    %s1200 = ssub.s32 4, 1
    %s1201 = scalar_lea.vmem %s1, 176
    %1202 = vst [vmem:[%s1201] sm:%s1200] %v1198
    %s1203 = scalar_lea.vmem [#allocation2], 712
    %v1204 = vld [vmem:[%s1203] sm:%s670]
    %s1206 = ssub.s32 4, 1
    %s1207 = scalar_lea.vmem %s1, 178
    %1208 = vst [vmem:[%s1207] sm:%s1206] %v1204
    %s1209 = scalar_lea.vmem [#allocation2], 720
    %v1210 = vld [vmem:[%s1209] sm:%s670]
    %s1212 = ssub.s32 4, 1
    %s1213 = scalar_lea.vmem %s1, 180
    %1214 = vst [vmem:[%s1213] sm:%s1212] %v1210
    %s1215 = scalar_lea.vmem [#allocation2], 728
    %v1216 = vld [vmem:[%s1215] sm:%s670]
    %s1218 = ssub.s32 4, 1
    %s1219 = scalar_lea.vmem %s1, 182
    %1220 = vst [vmem:[%s1219] sm:%s1218] %v1216
    %s1221 = scalar_lea.vmem [#allocation2], 736
    %v1222 = vld [vmem:[%s1221] sm:%s670]
    %s1224 = ssub.s32 4, 1
    %s1225 = scalar_lea.vmem %s1, 184
    %1226 = vst [vmem:[%s1225] sm:%s1224] %v1222
    %s1227 = scalar_lea.vmem [#allocation2], 744
    %v1228 = vld [vmem:[%s1227] sm:%s670]
    %s1230 = ssub.s32 4, 1
    %s1231 = scalar_lea.vmem %s1, 186
    %1232 = vst [vmem:[%s1231] sm:%s1230] %v1228
    %s1233 = scalar_lea.vmem [#allocation2], 752
    %v1234 = vld [vmem:[%s1233] sm:%s670]
    %s1236 = ssub.s32 4, 1
    %s1237 = scalar_lea.vmem %s1, 188
    %1238 = vst [vmem:[%s1237] sm:%s1236] %v1234
    %s1239 = scalar_lea.vmem [#allocation2], 760
    %v1240 = vld [vmem:[%s1239] sm:%s670]
    %s1242 = ssub.s32 4, 1
    %s1243 = scalar_lea.vmem %s1, 190
    %1244 = vst [vmem:[%s1243] sm:%s1242] %v1240
    %s1245 = scalar_lea.vmem [#allocation2], 768
    %v1246 = vld [vmem:[%s1245] sm:%s670]
    %s1248 = ssub.s32 4, 1
    %s1249 = scalar_lea.vmem %s1, 192
    %1250 = vst [vmem:[%s1249] sm:%s1248] %v1246
    %s1251 = scalar_lea.vmem [#allocation2], 776
    %v1252 = vld [vmem:[%s1251] sm:%s670]
    %s1254 = ssub.s32 4, 1
    %s1255 = scalar_lea.vmem %s1, 194
    %1256 = vst [vmem:[%s1255] sm:%s1254] %v1252
    %s1257 = scalar_lea.vmem [#allocation2], 784
    %v1258 = vld [vmem:[%s1257] sm:%s670]
    %s1260 = ssub.s32 4, 1
    %s1261 = scalar_lea.vmem %s1, 196
    %1262 = vst [vmem:[%s1261] sm:%s1260] %v1258
    %s1263 = scalar_lea.vmem [#allocation2], 792
    %v1264 = vld [vmem:[%s1263] sm:%s670]
    %s1266 = ssub.s32 4, 1
    %s1267 = scalar_lea.vmem %s1, 198
    %1268 = vst [vmem:[%s1267] sm:%s1266] %v1264
    %s1269 = scalar_lea.vmem [#allocation2], 800
    %v1270 = vld [vmem:[%s1269] sm:%s670]
    %s1272 = ssub.s32 4, 1
    %s1273 = scalar_lea.vmem %s1, 200
    %1274 = vst [vmem:[%s1273] sm:%s1272] %v1270
    %s1275 = scalar_lea.vmem [#allocation2], 808
    %v1276 = vld [vmem:[%s1275] sm:%s670]
    %s1278 = ssub.s32 4, 1
    %s1279 = scalar_lea.vmem %s1, 202
    %1280 = vst [vmem:[%s1279] sm:%s1278] %v1276
    %s1281 = scalar_lea.vmem [#allocation2], 816
    %v1282 = vld [vmem:[%s1281] sm:%s670]
    %s1284 = ssub.s32 4, 1
    %s1285 = scalar_lea.vmem %s1, 204
    %1286 = vst [vmem:[%s1285] sm:%s1284] %v1282
    %s1287 = scalar_lea.vmem [#allocation2], 824
    %v1288 = vld [vmem:[%s1287] sm:%s670]
    %s1290 = ssub.s32 4, 1
    %s1291 = scalar_lea.vmem %s1, 206
    %1292 = vst [vmem:[%s1291] sm:%s1290] %v1288
    %s1293 = scalar_lea.vmem [#allocation2], 832
    %v1294 = vld [vmem:[%s1293] sm:%s670]
    %s1296 = ssub.s32 4, 1
    %s1297 = scalar_lea.vmem %s1, 208
    %1298 = vst [vmem:[%s1297] sm:%s1296] %v1294
    %s1299 = scalar_lea.vmem [#allocation2], 840
    %v1300 = vld [vmem:[%s1299] sm:%s670]
    %s1302 = ssub.s32 4, 1
    %s1303 = scalar_lea.vmem %s1, 210
    %1304 = vst [vmem:[%s1303] sm:%s1302] %v1300
    %s1305 = scalar_lea.vmem [#allocation2], 848
    %v1306 = vld [vmem:[%s1305] sm:%s670]
    %s1308 = ssub.s32 4, 1
    %s1309 = scalar_lea.vmem %s1, 212
    %1310 = vst [vmem:[%s1309] sm:%s1308] %v1306
    %s1311 = scalar_lea.vmem [#allocation2], 856
    %v1312 = vld [vmem:[%s1311] sm:%s670]
    %s1314 = ssub.s32 4, 1
    %s1315 = scalar_lea.vmem %s1, 214
    %1316 = vst [vmem:[%s1315] sm:%s1314] %v1312
    %s1317 = scalar_lea.vmem [#allocation2], 864
    %v1318 = vld [vmem:[%s1317] sm:%s670]
    %s1320 = ssub.s32 4, 1
    %s1321 = scalar_lea.vmem %s1, 216
    %1322 = vst [vmem:[%s1321] sm:%s1320] %v1318
    %s1323 = scalar_lea.vmem [#allocation2], 872
    %v1324 = vld [vmem:[%s1323] sm:%s670]
    %s1326 = ssub.s32 4, 1
    %s1327 = scalar_lea.vmem %s1, 218
    %1328 = vst [vmem:[%s1327] sm:%s1326] %v1324
    %s1329 = scalar_lea.vmem [#allocation2], 880
    %v1330 = vld [vmem:[%s1329] sm:%s670]
    %s1332 = ssub.s32 4, 1
    %s1333 = scalar_lea.vmem %s1, 220
    %1334 = vst [vmem:[%s1333] sm:%s1332] %v1330
    %s1335 = scalar_lea.vmem [#allocation2], 888
    %v1336 = vld [vmem:[%s1335] sm:%s670]
    %s1338 = ssub.s32 4, 1
    %s1339 = scalar_lea.vmem %s1, 222
    %1340 = vst [vmem:[%s1339] sm:%s1338] %v1336
    %s1341 = scalar_lea.vmem [#allocation2], 896
    %v1342 = vld [vmem:[%s1341] sm:%s670]
    %s1344 = ssub.s32 4, 1
    %s1345 = scalar_lea.vmem %s1, 224
    %1346 = vst [vmem:[%s1345] sm:%s1344] %v1342
    %s1347 = scalar_lea.vmem [#allocation2], 904
    %v1348 = vld [vmem:[%s1347] sm:%s670]
    %s1350 = ssub.s32 4, 1
    %s1351 = scalar_lea.vmem %s1, 226
    %1352 = vst [vmem:[%s1351] sm:%s1350] %v1348
    %s1353 = scalar_lea.vmem [#allocation2], 912
    %v1354 = vld [vmem:[%s1353] sm:%s670]
    %s1356 = ssub.s32 4, 1
    %s1357 = scalar_lea.vmem %s1, 228
    %1358 = vst [vmem:[%s1357] sm:%s1356] %v1354
    %s1359 = scalar_lea.vmem [#allocation2], 920
    %v1360 = vld [vmem:[%s1359] sm:%s670]
    %s1362 = ssub.s32 4, 1
    %s1363 = scalar_lea.vmem %s1, 230
    %1364 = vst [vmem:[%s1363] sm:%s1362] %v1360
    %s1365 = scalar_lea.vmem [#allocation2], 928
    %v1366 = vld [vmem:[%s1365] sm:%s670]
    %s1368 = ssub.s32 4, 1
    %s1369 = scalar_lea.vmem %s1, 232
    %1370 = vst [vmem:[%s1369] sm:%s1368] %v1366
    %s1371 = scalar_lea.vmem [#allocation2], 936
    %v1372 = vld [vmem:[%s1371] sm:%s670]
    %s1374 = ssub.s32 4, 1
    %s1375 = scalar_lea.vmem %s1, 234
    %1376 = vst [vmem:[%s1375] sm:%s1374] %v1372
    %s1377 = scalar_lea.vmem [#allocation2], 944
    %v1378 = vld [vmem:[%s1377] sm:%s670]
    %s1380 = ssub.s32 4, 1
    %s1381 = scalar_lea.vmem %s1, 236
    %1382 = vst [vmem:[%s1381] sm:%s1380] %v1378
    %s1383 = scalar_lea.vmem [#allocation2], 952
    %v1384 = vld [vmem:[%s1383] sm:%s670]
    %s1386 = ssub.s32 4, 1
    %s1387 = scalar_lea.vmem %s1, 238
    %1388 = vst [vmem:[%s1387] sm:%s1386] %v1384
    %s1389 = scalar_lea.vmem [#allocation2], 960
    %v1390 = vld [vmem:[%s1389] sm:%s670]
    %s1392 = ssub.s32 4, 1
    %s1393 = scalar_lea.vmem %s1, 240
    %1394 = vst [vmem:[%s1393] sm:%s1392] %v1390
    %s1395 = scalar_lea.vmem [#allocation2], 968
    %v1396 = vld [vmem:[%s1395] sm:%s670]
    %s1398 = ssub.s32 4, 1
    %s1399 = scalar_lea.vmem %s1, 242
    %1400 = vst [vmem:[%s1399] sm:%s1398] %v1396
    %s1401 = scalar_lea.vmem [#allocation2], 976
    %v1402 = vld [vmem:[%s1401] sm:%s670]
    %s1404 = ssub.s32 4, 1
    %s1405 = scalar_lea.vmem %s1, 244
    %1406 = vst [vmem:[%s1405] sm:%s1404] %v1402
    %s1407 = scalar_lea.vmem [#allocation2], 984
    %v1408 = vld [vmem:[%s1407] sm:%s670]
    %s1410 = ssub.s32 4, 1
    %s1411 = scalar_lea.vmem %s1, 246
    %1412 = vst [vmem:[%s1411] sm:%s1410] %v1408
    %s1413 = scalar_lea.vmem [#allocation2], 992
    %v1414 = vld [vmem:[%s1413] sm:%s670]
    %s1416 = ssub.s32 4, 1
    %s1417 = scalar_lea.vmem %s1, 248
    %1418 = vst [vmem:[%s1417] sm:%s1416] %v1414
    %s1419 = scalar_lea.vmem [#allocation2], 1000
    %v1420 = vld [vmem:[%s1419] sm:%s670]
    %s1422 = ssub.s32 4, 1
    %s1423 = scalar_lea.vmem %s1, 250
    %1424 = vst [vmem:[%s1423] sm:%s1422] %v1420
    %s1425 = scalar_lea.vmem [#allocation2], 1008
    %v1426 = vld [vmem:[%s1425] sm:%s670]
    %s1428 = ssub.s32 4, 1
    %s1429 = scalar_lea.vmem %s1, 252
    %1430 = vst [vmem:[%s1429] sm:%s1428] %v1426
    %s1431 = scalar_lea.vmem [#allocation2], 1016
    %v1432 = vld [vmem:[%s1431] sm:%s670]
    %s1434 = ssub.s32 4, 1
    %s1435 = scalar_lea.vmem %s1, 254
    %1436 = vst [vmem:[%s1435] sm:%s1434] %v1432
    %1437 = vsyncpa [#allocation1], 1

// kernel: _lambda_.1
$region0: #{_lambda_.1}
  #allocation0 [shape = 'u32[]', space=smem, size = 0x4, offset = 0x4, fixed_abs, tag = 'smem constant byte address 0x4 - core index']
  #allocation1 [shape = 'u32[72,128]{1,0:T(1,128)}', space=vmem, size = 0x9000, scoped, tag = 'internal scratch']
  #allocation2 [shape = 'f32[1,256,2]{2,1,0:T(8,128)}', space=vmem, size = 0x20000, scoped, tag = 'scratch operand']
  #allocation3 [shape = 'f32[4,2]{1,0:T(4,128)}', space=vmem, size = 0x800, scoped, tag = 'scratch operand']
  %s0 = inlined_call_operand.vmem [shape: f32[4,4,16,2], index: 0, kind: input, shape index: {}]
  %s1 = inlined_call_operand.vmem [shape: f32[6], index: 1, kind: input, shape index: {}]
  %s2 = inlined_call_operand.vmem [shape: f32[6], index: 2, kind: input, shape index: {}]
  %s3 = inlined_call_operand.vmem [shape: f32[16,6], index: 3, kind: input, shape index: {}]
  %s4 = inlined_call_operand.vmem [shape: f32[16], index: 4, kind: input, shape index: {}]
  %s5 = inlined_call_operand.vmem [shape: f32[4,256], index: 5, kind: input, shape index: {}]
  %s6 = inlined_call_operand.vmem [shape: f32[4,1], index: 6, kind: input, shape index: {}]
  %s7 = inlined_call_operand.vmem [shape: f32[8,4], index: 7, kind: input, shape index: {}]
  %s8 = inlined_call_operand.vmem [shape: f32[8,1], index: 8, kind: input, shape index: {}]
  %s9 = inlined_call_operand.vmem [shape: f32[8,2], index: 9, kind: output, shape index: {}]
  %s10 = sld [smem:[#allocation0]]
  $region70: #{_lambda_.1} parent=0
    _
  %s12 = ssub.s32 1, %s10
  %s13 = scalar_select 0, %s12, %s10
  $region1: #{_lambda_.1} parent=0
    #allocation4 [shape = 'u8[512]{0}', space=smem, size = 0x200, scoped, tag = 'input window, operand 1, single buffered']
    #allocation5 [shape = 's32[1]{0}', space=sflag, size = 0x4, scoped, tag = 'scoped memory for _lambda_.1']
    #allocation6 [shape = 'u8[512]{0}', space=smem, size = 0x200, scoped, tag = 'input window, operand 2, single buffered']
    #allocation7 [shape = 's32[1]{0}', space=sflag, size = 0x4, scoped, tag = 'scoped memory for _lambda_.1']
    #allocation8 [shape = 'u8[8192]{0}', space=smem, size = 0x2000, scoped, tag = 'input window, operand 3, single buffered']
    #allocation9 [shape = 'u8[512]{0}', space=smem, size = 0x200, scoped, tag = 'input window, operand 4, single buffered']
    #allocation10 [shape = 's32[1]{0}', space=sflag, size = 0x4, scoped, tag = 'scoped memory for _lambda_.1']
    %14 = vsyncpa [#allocation5], 0
    %15 = vsyncpa [#allocation7], 0
    %16 = vsyncpa [#allocation10], 0
    // Predicated region
    $region2: #{_lambda_.1} parent=1 // pred_check
      _
    $region3: #{_lambda_.1} parent=1 // pred_check_branch
      %18 = sbr.rel (0) target = $region5
    $region4: #{_lambda_.1} parent=1 // pred_region
      _
    $region5: #{_lambda_.1} parent=1 // pred_fallthru
      _
    // Predicated region
    $region6: #{_lambda_.1} parent=1 // pred_check
      _
    $region7: #{_lambda_.1} parent=1 // pred_check_branch
      %20 = sbr.rel (0) target = $region9
    $region8: #{_lambda_.1} parent=1 // pred_region
      %22 = vsyncadd [#allocation5], 0
      %s24 = sshll.u32 %s1, 4
      %s25 = int_to_ptr.vmem [resolvable:$true] %s24
      %27 = dma.vmem_to_smem %s25, 16, [#allocation4], [#allocation5]
    $region9: #{_lambda_.1} parent=1 // pred_fallthru
      _
    // Predicated region
    $region10: #{_lambda_.1} parent=1 // pred_check
      _
    $region11: #{_lambda_.1} parent=1 // pred_check_branch
      %29 = sbr.rel (0) target = $region13
    $region12: #{_lambda_.1} parent=1 // pred_region
      %31 = vsyncadd [#allocation7], 0
      %s33 = sshll.u32 %s2, 4
      %s34 = int_to_ptr.vmem [resolvable:$true] %s33
      %36 = dma.vmem_to_smem %s34, 16, [#allocation6], [#allocation7]
    $region13: #{_lambda_.1} parent=1 // pred_fallthru
      _
    // Predicated region
    $region14: #{_lambda_.1} parent=1 // pred_check
      _
    $region15: #{_lambda_.1} parent=1 // pred_check_branch
      %38 = sbr.rel (0) target = $region17
    $region16: #{_lambda_.1} parent=1 // pred_region
      %40 = vsyncadd [#allocation7], 0
      %s41 = sshll.u32 %s3, 4
      %s42 = int_to_ptr.vmem [resolvable:$true] %s41
      %47 = dma.vmem_to_smem %s42, 256, [#allocation8], [#allocation7], 128, 128, 8
    $region17: #{_lambda_.1} parent=1 // pred_fallthru
      _
    // Predicated region
    $region18: #{_lambda_.1} parent=1 // pred_check
      _
    $region19: #{_lambda_.1} parent=1 // pred_check_branch
      %49 = sbr.rel (0) target = $region21
    $region20: #{_lambda_.1} parent=1 // pred_region
      %51 = vsyncadd [#allocation10], 0
      %s53 = sshll.u32 %s4, 4
      %s54 = int_to_ptr.vmem [resolvable:$true] %s53
      %56 = dma.vmem_to_smem %s54, 16, [#allocation9], [#allocation10]
    $region21: #{_lambda_.1} parent=1 // pred_fallthru
      _
    // Predicated region
    $region22: #{_lambda_.1} parent=1 // pred_check
      _
    $region23: #{_lambda_.1} parent=1 // pred_check_branch
      %58 = sbr.rel (0) target = $region25
    $region24: #{_lambda_.1} parent=1 // pred_region
      _
    $region25: #{_lambda_.1} parent=1 // pred_fallthru
      _
    // Predicated region
    $region26: #{_lambda_.1} parent=1 // pred_check
      _
    $region27: #{_lambda_.1} parent=1 // pred_check_branch
      %60 = sbr.rel (0) target = $region29
    $region28: #{_lambda_.1} parent=1 // pred_region
      _
    $region29: #{_lambda_.1} parent=1 // pred_fallthru
      _
    // Predicated region
    $region30: #{_lambda_.1} parent=1 // pred_check
      _
    $region31: #{_lambda_.1} parent=1 // pred_check_branch
      %62 = sbr.rel (0) target = $region33
    $region32: #{_lambda_.1} parent=1 // pred_region
      _
    $region33: #{_lambda_.1} parent=1 // pred_fallthru
      _
    // Predicated region
    $region34: #{_lambda_.1} parent=1 // pred_check
      _
    $region35: #{_lambda_.1} parent=1 // pred_check_branch
      %64 = sbr.rel (0) target = $region37
    $region36: #{_lambda_.1} parent=1 // pred_region
      _
    $region37: #{_lambda_.1} parent=1 // pred_fallthru
      _
    // Predicated region
    $region38: #{_lambda_.1} parent=1 // pred_check
      _
    $region39: #{_lambda_.1} parent=1 // pred_check_branch
      %66 = sbr.rel (0) target = $region41
    $region40: #{_lambda_.1} parent=1 // pred_region
      %68 = dma.done [#allocation5], 16
    $region41: #{_lambda_.1} parent=1 // pred_fallthru
      _
    // Predicated region
    $region42: #{_lambda_.1} parent=1 // pred_check
      _
    $region43: #{_lambda_.1} parent=1 // pred_check_branch
      %70 = sbr.rel (0) target = $region45
    $region44: #{_lambda_.1} parent=1 // pred_region
      %72 = dma.done [#allocation7], 16
    $region45: #{_lambda_.1} parent=1 // pred_fallthru
      _
    // Predicated region
    $region46: #{_lambda_.1} parent=1 // pred_check
      _
    $region47: #{_lambda_.1} parent=1 // pred_check_branch
      %74 = sbr.rel (0) target = $region49
    $region48: #{_lambda_.1} parent=1 // pred_region
      %76 = dma.done [#allocation7], 256
    $region49: #{_lambda_.1} parent=1 // pred_fallthru
      _
    // Predicated region
    $region50: #{_lambda_.1} parent=1 // pred_check
      _
    $region51: #{_lambda_.1} parent=1 // pred_check_branch
      %78 = sbr.rel (0) target = $region53
    $region52: #{_lambda_.1} parent=1 // pred_region
      %80 = dma.done [#allocation10], 16
    $region53: #{_lambda_.1} parent=1 // pred_fallthru
      _
    %81 = sfence
    %p82 = scmp.eq.s32.totalorder 0, 0
    // Predicated region
    $region54: #{_lambda_.1} parent=1 // pred_check
      %p83 = pneg %p82
    $region55: #{_lambda_.1} parent=1 // pred_check_branch
      %85 = sbr.rel (%p83) target = $region57
    $region56: #{_lambda_.1} parent=1 // pred_region
      %v86 = vld [vmem:[%s0] sm:$0xff]
      %v87 = vld [vmem:[%s0 + $0x8] sm:$0xff]
      %v88 = vld [vmem:[%s0 + $0x10] sm:$0xff]
      %v89 = vld [vmem:[%s0 + $0x18] sm:$0xff]
      %v90 = vld [vmem:[%s0 + $0x20] sm:$0xff]
      %v91 = vld [vmem:[%s0 + $0x28] sm:$0xff]
      %v92 = vld [vmem:[%s0 + $0x30] sm:$0xff]
      %v93 = vld [vmem:[%s0 + $0x38] sm:$0xff]
      %v94 = vld [vmem:[%s0 + $0x40] sm:$0xff]
      %v95 = vld [vmem:[%s0 + $0x48] sm:$0xff]
      %v96 = vld [vmem:[%s0 + $0x50] sm:$0xff]
      %v97 = vld [vmem:[%s0 + $0x58] sm:$0xff]
      %v98 = vld [vmem:[%s0 + $0x60] sm:$0xff]
      %v99 = vld [vmem:[%s0 + $0x68] sm:$0xff]
      %v100 = vld [vmem:[%s0 + $0x70] sm:$0xff]
      %v101 = vld [vmem:[%s0 + $0x78] sm:$0xff]
      %v102 = vld [vmem:[%s0 + $0x80] sm:$0xff]
      %v103 = vld [vmem:[%s0 + $0x88] sm:$0xff]
      %v104 = vld [vmem:[%s0 + $0x90] sm:$0xff]
      %v105 = vld [vmem:[%s0 + $0x98] sm:$0xff]
      %v106 = vld [vmem:[%s0 + $0xa0] sm:$0xff]
      %v107 = vld [vmem:[%s0 + $0xa8] sm:$0xff]
      %v108 = vld [vmem:[%s0 + $0xb0] sm:$0xff]
      %v109 = vld [vmem:[%s0 + $0xb8] sm:$0xff]
      %v110 = vld [vmem:[%s0 + $0xc0] sm:$0xff]
      %v111 = vld [vmem:[%s0 + $0xc8] sm:$0xff]
      %v112 = vld [vmem:[%s0 + $0xd0] sm:$0xff]
      %v113 = vld [vmem:[%s0 + $0xd8] sm:$0xff]
      %v114 = vld [vmem:[%s0 + $0xe0] sm:$0xff]
      %v115 = vld [vmem:[%s0 + $0xe8] sm:$0xff]
      %v116 = vld [vmem:[%s0 + $0xf0] sm:$0xff]
      %v117 = vld [vmem:[%s0 + $0xf8] sm:$0xff]
      %vm118 = vcmask 15360
      %v119 = vsel %vm118, %v86, -inf
      %v120 = vsel %vm118, %v88, -inf
      %v121 = vmax.f32 %v119, %v120
      %v122 = vsel %vm118, %v90, -inf
      %v123 = vmax.f32 %v121, %v122
      %v124 = vsel %vm118, %v92, -inf
      %v125 = vmax.f32 %v123, %v124
      %v126 = vsel %vm118, %v87, -inf
      %v127 = vsel %vm118, %v89, -inf
      %v128 = vmax.f32 %v126, %v127
      %v129 = vsel %vm118, %v91, -inf
      %v130 = vmax.f32 %v128, %v129
      %v131 = vsel %vm118, %v93, -inf
      %v132 = vmax.f32 %v130, %v131
      %v133 = vsel %vm118, %v94, -inf
      %v134 = vsel %vm118, %v96, -inf
      %v135 = vmax.f32 %v133, %v134
      %v136 = vsel %vm118, %v98, -inf
      %v137 = vmax.f32 %v135, %v136
      %v138 = vsel %vm118, %v100, -inf
      %v139 = vmax.f32 %v137, %v138
      %v140 = vsel %vm118, %v95, -inf
      %v141 = vsel %vm118, %v97, -inf
      %v142 = vmax.f32 %v140, %v141
      %v143 = vsel %vm118, %v99, -inf
      %v144 = vmax.f32 %v142, %v143
      %v145 = vsel %vm118, %v101, -inf
      %v146 = vmax.f32 %v144, %v145
      %v147 = vsel %vm118, %v102, -inf
      %v148 = vsel %vm118, %v104, -inf
      %v149 = vmax.f32 %v147, %v148
      %v150 = vsel %vm118, %v106, -inf
      %v151 = vmax.f32 %v149, %v150
      %v152 = vsel %vm118, %v108, -inf
      %v153 = vmax.f32 %v151, %v152
      %v154 = vsel %vm118, %v103, -inf
      %v155 = vsel %vm118, %v105, -inf
      %v156 = vmax.f32 %v154, %v155
      %v157 = vsel %vm118, %v107, -inf
      %v158 = vmax.f32 %v156, %v157
      %v159 = vsel %vm118, %v109, -inf
      %v160 = vmax.f32 %v158, %v159
      %v161 = vsel %vm118, %v110, -inf
      %v162 = vsel %vm118, %v112, -inf
      %v163 = vmax.f32 %v161, %v162
      %v164 = vsel %vm118, %v114, -inf
      %v165 = vmax.f32 %v163, %v164
      %v166 = vsel %vm118, %v116, -inf
      %v167 = vmax.f32 %v165, %v166
      %v168 = vsel %vm118, %v111, -inf
      %v169 = vsel %vm118, %v113, -inf
      %v170 = vmax.f32 %v168, %v169
      %v171 = vsel %vm118, %v115, -inf
      %v172 = vmax.f32 %v170, %v171
      %v173 = vsel %vm118, %v117, -inf
      %v174 = vmax.f32 %v172, %v173
      %v175 = vsel %vm118, %v86, inf
      %v176 = vsel %vm118, %v88, inf
      %v177 = vmin.f32 %v175, %v176
      %v178 = vsel %vm118, %v90, inf
      %v179 = vmin.f32 %v177, %v178
      %v180 = vsel %vm118, %v92, inf
      %v181 = vmin.f32 %v179, %v180
      %v182 = vsel %vm118, %v87, inf
      %v183 = vsel %vm118, %v89, inf
      %v184 = vmin.f32 %v182, %v183
      %v185 = vsel %vm118, %v91, inf
      %v186 = vmin.f32 %v184, %v185
      %v187 = vsel %vm118, %v93, inf
      %v188 = vmin.f32 %v186, %v187
      %v189 = vsel %vm118, %v94, inf
      %v190 = vsel %vm118, %v96, inf
      %v191 = vmin.f32 %v189, %v190
      %v192 = vsel %vm118, %v98, inf
      %v193 = vmin.f32 %v191, %v192
      %v194 = vsel %vm118, %v100, inf
      %v195 = vmin.f32 %v193, %v194
      %v196 = vsel %vm118, %v95, inf
      %v197 = vsel %vm118, %v97, inf
      %v198 = vmin.f32 %v196, %v197
      %v199 = vsel %vm118, %v99, inf
      %v200 = vmin.f32 %v198, %v199
      %v201 = vsel %vm118, %v101, inf
      %v202 = vmin.f32 %v200, %v201
      %v203 = vsel %vm118, %v102, inf
      %v204 = vsel %vm118, %v104, inf
      %v205 = vmin.f32 %v203, %v204
      %v206 = vsel %vm118, %v106, inf
      %v207 = vmin.f32 %v205, %v206
      %v208 = vsel %vm118, %v108, inf
      %v209 = vmin.f32 %v207, %v208
      %v210 = vsel %vm118, %v103, inf
      %v211 = vsel %vm118, %v105, inf
      %v212 = vmin.f32 %v210, %v211
      %v213 = vsel %vm118, %v107, inf
      %v214 = vmin.f32 %v212, %v213
      %v215 = vsel %vm118, %v109, inf
      %v216 = vmin.f32 %v214, %v215
      %v217 = vsel %vm118, %v110, inf
      %v218 = vsel %vm118, %v112, inf
      %v219 = vmin.f32 %v217, %v218
      %v220 = vsel %vm118, %v114, inf
      %v221 = vmin.f32 %v219, %v220
      %v222 = vsel %vm118, %v116, inf
      %v223 = vmin.f32 %v221, %v222
      %v224 = vsel %vm118, %v111, inf
      %v225 = vsel %vm118, %v113, inf
      %v226 = vmin.f32 %v224, %v225
      %v227 = vsel %vm118, %v115, inf
      %v228 = vmin.f32 %v226, %v227
      %v229 = vsel %vm118, %v117, inf
      %v230 = vmin.f32 %v228, %v229
      %s231 = sld [smem:[#allocation4]]
      %v232 = vstv %s231
      %v233 = vmul.f32 %v232, %v125
      %v234 = vmul.f32 %v232, %v132
      %v235 = vmul.f32 %v232, %v139
      %v236 = vmul.f32 %v232, %v146
      %v237 = vmul.f32 %v232, %v153
      %v238 = vmul.f32 %v232, %v160
      %v239 = vmul.f32 %v232, %v167
      %v240 = vmul.f32 %v232, %v174
      %v241 = vmul.f32 %v232, %v181
      %v242 = vmul.f32 %v232, %v188
      %v243 = vmul.f32 %v232, %v195
      %v244 = vmul.f32 %v232, %v202
      %v245 = vmul.f32 %v232, %v209
      %v246 = vmul.f32 %v232, %v216
      %v247 = vmul.f32 %v232, %v223
      %v248 = vmul.f32 %v232, %v230
      %v249 = vmax.f32 %v233, %v241
      %v250 = vmax.f32 %v234, %v242
      %v251 = vmax.f32 %v235, %v243
      %v252 = vmax.f32 %v236, %v244
      %v253 = vmax.f32 %v237, %v245
      %v254 = vmax.f32 %v238, %v246
      %v255 = vmax.f32 %v239, %v247
      %v256 = vmax.f32 %v240, %v248
      %s257 = sld [smem:[#allocation6]]
      %v258 = vstv %s257
      %v259 = vadd.f32 %v249, %v258
      %v260 = vadd.f32 %v250, %v258
      %v261 = vadd.f32 %v251, %v258
      %v262 = vadd.f32 %v252, %v258
      %v263 = vadd.f32 %v253, %v258
      %v264 = vadd.f32 %v254, %v258
      %v265 = vadd.f32 %v255, %v258
      %v266 = vadd.f32 %v256, %v258
      %s267 = sld [smem:[#allocation4 + $0x1]]
      %v268 = vstv %s267
      %v269 = vmul.f32 %v268, %v125
      %v270 = vmul.f32 %v268, %v132
      %v271 = vmul.f32 %v268, %v139
      %v272 = vmul.f32 %v268, %v146
      %v273 = vmul.f32 %v268, %v153
      %v274 = vmul.f32 %v268, %v160
      %v275 = vmul.f32 %v268, %v167
      %v276 = vmul.f32 %v268, %v174
      %v277 = vmul.f32 %v268, %v181
      %v278 = vmul.f32 %v268, %v188
      %v279 = vmul.f32 %v268, %v195
      %v280 = vmul.f32 %v268, %v202
      %v281 = vmul.f32 %v268, %v209
      %v282 = vmul.f32 %v268, %v216
      %v283 = vmul.f32 %v268, %v223
      %v284 = vmul.f32 %v268, %v230
      %v285 = vmax.f32 %v269, %v277
      %v286 = vmax.f32 %v270, %v278
      %v287 = vmax.f32 %v271, %v279
      %v288 = vmax.f32 %v272, %v280
      %v289 = vmax.f32 %v273, %v281
      %v290 = vmax.f32 %v274, %v282
      %v291 = vmax.f32 %v275, %v283
      %v292 = vmax.f32 %v276, %v284
      %s293 = sld [smem:[#allocation6 + $0x1]]
      %v294 = vstv %s293
      %v295 = vadd.f32 %v285, %v294
      %v296 = vadd.f32 %v286, %v294
      %v297 = vadd.f32 %v287, %v294
      %v298 = vadd.f32 %v288, %v294
      %v299 = vadd.f32 %v289, %v294
      %v300 = vadd.f32 %v290, %v294
      %v301 = vadd.f32 %v291, %v294
      %v302 = vadd.f32 %v292, %v294
      %s303 = sld [smem:[#allocation4 + $0x2]]
      %v304 = vstv %s303
      %v305 = vmul.f32 %v304, %v125
      %v306 = vmul.f32 %v304, %v132
      %v307 = vmul.f32 %v304, %v139
      %v308 = vmul.f32 %v304, %v146
      %v309 = vmul.f32 %v304, %v153
      %v310 = vmul.f32 %v304, %v160
      %v311 = vmul.f32 %v304, %v167
      %v312 = vmul.f32 %v304, %v174
      %v313 = vmul.f32 %v304, %v181
      %v314 = vmul.f32 %v304, %v188
      %v315 = vmul.f32 %v304, %v195
      %v316 = vmul.f32 %v304, %v202
      %v317 = vmul.f32 %v304, %v209
      %v318 = vmul.f32 %v304, %v216
      %v319 = vmul.f32 %v304, %v223
      %v320 = vmul.f32 %v304, %v230
      %v321 = vmax.f32 %v305, %v313
      %v322 = vmax.f32 %v306, %v314
      %v323 = vmax.f32 %v307, %v315
      %v324 = vmax.f32 %v308, %v316
      %v325 = vmax.f32 %v309, %v317
      %v326 = vmax.f32 %v310, %v318
      %v327 = vmax.f32 %v311, %v319
      %v328 = vmax.f32 %v312, %v320
      %s329 = sld [smem:[#allocation6 + $0x2]]
      %v330 = vstv %s329
      %v331 = vadd.f32 %v321, %v330
      %v332 = vadd.f32 %v322, %v330
      %v333 = vadd.f32 %v323, %v330
      %v334 = vadd.f32 %v324, %v330
      %v335 = vadd.f32 %v325, %v330
      %v336 = vadd.f32 %v326, %v330
      %v337 = vadd.f32 %v327, %v330
      %v338 = vadd.f32 %v328, %v330
      %s339 = sld [smem:[#allocation4 + $0x3]]
      %v340 = vstv %s339
      %v341 = vmul.f32 %v340, %v125
      %v342 = vmul.f32 %v340, %v132
      %v343 = vmul.f32 %v340, %v139
      %v344 = vmul.f32 %v340, %v146
      %v345 = vmul.f32 %v340, %v153
      %v346 = vmul.f32 %v340, %v160
      %v347 = vmul.f32 %v340, %v167
      %v348 = vmul.f32 %v340, %v174
      %v349 = vmul.f32 %v340, %v181
      %v350 = vmul.f32 %v340, %v188
      %v351 = vmul.f32 %v340, %v195
      %v352 = vmul.f32 %v340, %v202
      %v353 = vmul.f32 %v340, %v209
      %v354 = vmul.f32 %v340, %v216
      %v355 = vmul.f32 %v340, %v223
      %v356 = vmul.f32 %v340, %v230
      %v357 = vmax.f32 %v341, %v349
      %v358 = vmax.f32 %v342, %v350
      %v359 = vmax.f32 %v343, %v351
      %v360 = vmax.f32 %v344, %v352
      %v361 = vmax.f32 %v345, %v353
      %v362 = vmax.f32 %v346, %v354
      %v363 = vmax.f32 %v347, %v355
      %v364 = vmax.f32 %v348, %v356
      %s365 = sld [smem:[#allocation6 + $0x3]]
      %v366 = vstv %s365
      %v367 = vadd.f32 %v357, %v366
      %v368 = vadd.f32 %v358, %v366
      %v369 = vadd.f32 %v359, %v366
      %v370 = vadd.f32 %v360, %v366
      %v371 = vadd.f32 %v361, %v366
      %v372 = vadd.f32 %v362, %v366
      %v373 = vadd.f32 %v363, %v366
      %v374 = vadd.f32 %v364, %v366
      %s375 = sld [smem:[#allocation4 + $0x4]]
      %v376 = vstv %s375
      %v377 = vmul.f32 %v376, %v125
      %v378 = vmul.f32 %v376, %v132
      %v379 = vmul.f32 %v376, %v139
      %v380 = vmul.f32 %v376, %v146
      %v381 = vmul.f32 %v376, %v153
      %v382 = vmul.f32 %v376, %v160
      %v383 = vmul.f32 %v376, %v167
      %v384 = vmul.f32 %v376, %v174
      %v385 = vmul.f32 %v376, %v181
      %v386 = vmul.f32 %v376, %v188
      %v387 = vmul.f32 %v376, %v195
      %v388 = vmul.f32 %v376, %v202
      %v389 = vmul.f32 %v376, %v209
      %v390 = vmul.f32 %v376, %v216
      %v391 = vmul.f32 %v376, %v223
      %v392 = vmul.f32 %v376, %v230
      %v393 = vmax.f32 %v377, %v385
      %v394 = vmax.f32 %v378, %v386
      %v395 = vmax.f32 %v379, %v387
      %v396 = vmax.f32 %v380, %v388
      %v397 = vmax.f32 %v381, %v389
      %v398 = vmax.f32 %v382, %v390
      %v399 = vmax.f32 %v383, %v391
      %v400 = vmax.f32 %v384, %v392
      %s401 = sld [smem:[#allocation6 + $0x4]]
      %v402 = vstv %s401
      %v403 = vadd.f32 %v393, %v402
      %v404 = vadd.f32 %v394, %v402
      %v405 = vadd.f32 %v395, %v402
      %v406 = vadd.f32 %v396, %v402
      %v407 = vadd.f32 %v397, %v402
      %v408 = vadd.f32 %v398, %v402
      %v409 = vadd.f32 %v399, %v402
      %v410 = vadd.f32 %v400, %v402
      %s411 = sld [smem:[#allocation4 + $0x5]]
      %v412 = vstv %s411
      %v413 = vmul.f32 %v412, %v125
      %v414 = vmul.f32 %v412, %v132
      %v415 = vmul.f32 %v412, %v139
      %v416 = vmul.f32 %v412, %v146
      %v417 = vmul.f32 %v412, %v153
      %v418 = vmul.f32 %v412, %v160
      %v419 = vmul.f32 %v412, %v167
      %v420 = vmul.f32 %v412, %v174
      %v421 = vmul.f32 %v412, %v181
      %v422 = vmul.f32 %v412, %v188
      %v423 = vmul.f32 %v412, %v195
      %v424 = vmul.f32 %v412, %v202
      %v425 = vmul.f32 %v412, %v209
      %v426 = vmul.f32 %v412, %v216
      %v427 = vmul.f32 %v412, %v223
      %v428 = vmul.f32 %v412, %v230
      %v429 = vmax.f32 %v413, %v421
      %v430 = vmax.f32 %v414, %v422
      %v431 = vmax.f32 %v415, %v423
      %v432 = vmax.f32 %v416, %v424
      %v433 = vmax.f32 %v417, %v425
      %v434 = vmax.f32 %v418, %v426
      %v435 = vmax.f32 %v419, %v427
      %v436 = vmax.f32 %v420, %v428
      %s437 = sld [smem:[#allocation6 + $0x5]]
      %v438 = vstv %s437
      %v439 = vadd.f32 %v429, %v438
      %v440 = vadd.f32 %v430, %v438
      %v441 = vadd.f32 %v431, %v438
      %v442 = vadd.f32 %v432, %v438
      %v443 = vadd.f32 %v433, %v438
      %v444 = vadd.f32 %v434, %v438
      %v445 = vadd.f32 %v435, %v438
      %v446 = vadd.f32 %v436, %v438
      %s447 = sld [smem:[#allocation8]]
      %v448 = vstv %s447
      %v449 = vmul.f32 %v448, %v259
      %v450 = vmul.f32 %v448, %v260
      %v451 = vmul.f32 %v448, %v261
      %v452 = vmul.f32 %v448, %v262
      %v453 = vmul.f32 %v448, %v263
      %v454 = vmul.f32 %v448, %v264
      %v455 = vmul.f32 %v448, %v265
      %v456 = vmul.f32 %v448, %v266
      %s457 = sld [smem:[#allocation8 + $0x1]]
      %v458 = vstv %s457
      %v459 = vmul.f32 %v458, %v295
      %v460 = vmul.f32 %v458, %v296
      %v461 = vmul.f32 %v458, %v297
      %v462 = vmul.f32 %v458, %v298
      %v463 = vmul.f32 %v458, %v299
      %v464 = vmul.f32 %v458, %v300
      %v465 = vmul.f32 %v458, %v301
      %v466 = vmul.f32 %v458, %v302
      %v467 = vadd.f32 %v449, %v459
      %v468 = vadd.f32 %v450, %v460
      %v469 = vadd.f32 %v451, %v461
      %v470 = vadd.f32 %v452, %v462
      %v471 = vadd.f32 %v453, %v463
      %v472 = vadd.f32 %v454, %v464
      %v473 = vadd.f32 %v455, %v465
      %v474 = vadd.f32 %v456, %v466
      %s475 = sld [smem:[#allocation8 + $0x2]]
      %v476 = vstv %s475
      %v477 = vmul.f32 %v476, %v331
      %v478 = vmul.f32 %v476, %v332
      %v479 = vmul.f32 %v476, %v333
      %v480 = vmul.f32 %v476, %v334
      %v481 = vmul.f32 %v476, %v335
      %v482 = vmul.f32 %v476, %v336
      %v483 = vmul.f32 %v476, %v337
      %v484 = vmul.f32 %v476, %v338
      %v485 = vadd.f32 %v467, %v477
      %v486 = vadd.f32 %v468, %v478
      %v487 = vadd.f32 %v469, %v479
      %v488 = vadd.f32 %v470, %v480
      %v489 = vadd.f32 %v471, %v481
      %v490 = vadd.f32 %v472, %v482
      %v491 = vadd.f32 %v473, %v483
      %v492 = vadd.f32 %v474, %v484
      %s493 = sld [smem:[#allocation8 + $0x3]]
      %v494 = vstv %s493
      %v495 = vmul.f32 %v494, %v367
      %v496 = vmul.f32 %v494, %v368
      %v497 = vmul.f32 %v494, %v369
      %v498 = vmul.f32 %v494, %v370
      %v499 = vmul.f32 %v494, %v371
      %v500 = vmul.f32 %v494, %v372
      %v501 = vmul.f32 %v494, %v373
      %v502 = vmul.f32 %v494, %v374
      %v503 = vadd.f32 %v485, %v495
      %v504 = vadd.f32 %v486, %v496
      %v505 = vadd.f32 %v487, %v497
      %v506 = vadd.f32 %v488, %v498
      %v507 = vadd.f32 %v489, %v499
      %v508 = vadd.f32 %v490, %v500
      %v509 = vadd.f32 %v491, %v501
      %v510 = vadd.f32 %v492, %v502
      %s511 = sld [smem:[#allocation8 + $0x4]]
      %v512 = vstv %s511
      %v513 = vmul.f32 %v512, %v403
      %v514 = vmul.f32 %v512, %v404
      %v515 = vmul.f32 %v512, %v405
      %v516 = vmul.f32 %v512, %v406
      %v517 = vmul.f32 %v512, %v407
      %v518 = vmul.f32 %v512, %v408
      %v519 = vmul.f32 %v512, %v409
      %v520 = vmul.f32 %v512, %v410
      %v521 = vadd.f32 %v503, %v513
      %v522 = vadd.f32 %v504, %v514
      %v523 = vadd.f32 %v505, %v515
      %v524 = vadd.f32 %v506, %v516
      %v525 = vadd.f32 %v507, %v517
      %v526 = vadd.f32 %v508, %v518
      %v527 = vadd.f32 %v509, %v519
      %v528 = vadd.f32 %v510, %v520
      %s529 = sld [smem:[#allocation8 + $0x5]]
      %v530 = vstv %s529
      %v531 = vmul.f32 %v530, %v439
      %v532 = vmul.f32 %v530, %v440
      %v533 = vmul.f32 %v530, %v441
      %v534 = vmul.f32 %v530, %v442
      %v535 = vmul.f32 %v530, %v443
      %v536 = vmul.f32 %v530, %v444
      %v537 = vmul.f32 %v530, %v445
      %v538 = vmul.f32 %v530, %v446
      %v539 = vadd.f32 %v521, %v531
      %v540 = vadd.f32 %v522, %v532
      %v541 = vadd.f32 %v523, %v533
      %v542 = vadd.f32 %v524, %v534
      %v543 = vadd.f32 %v525, %v535
      %v544 = vadd.f32 %v526, %v536
      %v545 = vadd.f32 %v527, %v537
      %v546 = vadd.f32 %v528, %v538
      %s547 = sld [smem:[#allocation9]]
      %v548 = vstv %s547
      %v549 = vadd.f32 %v539, %v548
      %v550 = vadd.f32 %v540, %v548
      %v551 = vadd.f32 %v541, %v548
      %v552 = vadd.f32 %v542, %v548
      %v553 = vadd.f32 %v543, %v548
      %v554 = vadd.f32 %v544, %v548
      %v555 = vadd.f32 %v545, %v548
      %v556 = vadd.f32 %v546, %v548
      %v557 = vsel %vm118, %v549, -inf
      %v558 = vsel %vm118, %v551, -inf
      %v559 = vsel %vm118, %v553, -inf
      %v560 = vmax.f32 %v557, %v559
      %v561 = vsel %vm118, %v555, -inf
      %v562 = vmax.f32 %v558, %v561
      %v563 = vmax.f32 %v560, %v562
      %v564 = vsel %vm118, %v550, -inf
      %v565 = vsel %vm118, %v552, -inf
      %v566 = vsel %vm118, %v554, -inf
      %v567 = vmax.f32 %v564, %v566
      %v568 = vsel %vm118, %v556, -inf
      %v569 = vmax.f32 %v565, %v568
      %v570 = vmax.f32 %v567, %v569
      %571 = vst.msk [vmem:[#allocation2] sm:$0xff] %vm118, %v563
      %572 = vst.msk [vmem:[#allocation2 + $0x8] sm:$0xff] %vm118, %v570
      %s573 = sld [smem:[#allocation8 + $0x80]]
      %v574 = vstv %s573
      %v575 = vmul.f32 %v574, %v259
      %v576 = vmul.f32 %v574, %v260
      %v577 = vmul.f32 %v574, %v261
      %v578 = vmul.f32 %v574, %v262
      %v579 = vmul.f32 %v574, %v263
      %v580 = vmul.f32 %v574, %v264
      %v581 = vmul.f32 %v574, %v265
      %v582 = vmul.f32 %v574, %v266
      %s583 = sld [smem:[#allocation8 + $0x81]]
      %v584 = vstv %s583
      %v585 = vmul.f32 %v584, %v295
      %v586 = vmul.f32 %v584, %v296
      %v587 = vmul.f32 %v584, %v297
      %v588 = vmul.f32 %v584, %v298
      %v589 = vmul.f32 %v584, %v299
      %v590 = vmul.f32 %v584, %v300
      %v591 = vmul.f32 %v584, %v301
      %v592 = vmul.f32 %v584, %v302
      %v593 = vadd.f32 %v575, %v585
      %v594 = vadd.f32 %v576, %v586
      %v595 = vadd.f32 %v577, %v587
      %v596 = vadd.f32 %v578, %v588
      %v597 = vadd.f32 %v579, %v589
      %v598 = vadd.f32 %v580, %v590
      %v599 = vadd.f32 %v581, %v591
      %v600 = vadd.f32 %v582, %v592
      %s601 = sld [smem:[#allocation8 + $0x82]]
      %v602 = vstv %s601
      %v603 = vmul.f32 %v602, %v331
      %v604 = vmul.f32 %v602, %v332
      %v605 = vmul.f32 %v602, %v333
      %v606 = vmul.f32 %v602, %v334
      %v607 = vmul.f32 %v602, %v335
      %v608 = vmul.f32 %v602, %v336
      %v609 = vmul.f32 %v602, %v337
      %v610 = vmul.f32 %v602, %v338
      %v611 = vadd.f32 %v593, %v603
      %v612 = vadd.f32 %v594, %v604
      %v613 = vadd.f32 %v595, %v605
      %v614 = vadd.f32 %v596, %v606
      %v615 = vadd.f32 %v597, %v607
      %v616 = vadd.f32 %v598, %v608
      %v617 = vadd.f32 %v599, %v609
      %v618 = vadd.f32 %v600, %v610
      %s619 = sld [smem:[#allocation8 + $0x83]]
      %v620 = vstv %s619
      %v621 = vmul.f32 %v620, %v367
      %v622 = vmul.f32 %v620, %v368
      %v623 = vmul.f32 %v620, %v369
      %v624 = vmul.f32 %v620, %v370
      %v625 = vmul.f32 %v620, %v371
      %v626 = vmul.f32 %v620, %v372
      %v627 = vmul.f32 %v620, %v373
      %v628 = vmul.f32 %v620, %v374
      %v629 = vadd.f32 %v611, %v621
      %v630 = vadd.f32 %v612, %v622
      %v631 = vadd.f32 %v613, %v623
      %v632 = vadd.f32 %v614, %v624
      %v633 = vadd.f32 %v615, %v625
      %v634 = vadd.f32 %v616, %v626
      %v635 = vadd.f32 %v617, %v627
      %v636 = vadd.f32 %v618, %v628
      %s637 = sld [smem:[#allocation8 + $0x84]]
      %v638 = vstv %s637
      %v639 = vmul.f32 %v638, %v403
      %v640 = vmul.f32 %v638, %v404
      %v641 = vmul.f32 %v638, %v405
      %v642 = vmul.f32 %v638, %v406
      %v643 = vmul.f32 %v638, %v407
      %v644 = vmul.f32 %v638, %v408
      %v645 = vmul.f32 %v638, %v409
      %v646 = vmul.f32 %v638, %v410
      %v647 = vadd.f32 %v629, %v639
      %v648 = vadd.f32 %v630, %v640
      %v649 = vadd.f32 %v631, %v641
      %v650 = vadd.f32 %v632, %v642
      %v651 = vadd.f32 %v633, %v643
      %v652 = vadd.f32 %v634, %v644
      %v653 = vadd.f32 %v635, %v645
      %v654 = vadd.f32 %v636, %v646
      %s655 = sld [smem:[#allocation8 + $0x85]]
      %v656 = vstv %s655
      %v657 = vmul.f32 %v656, %v439
      %v658 = vmul.f32 %v656, %v440
      %v659 = vmul.f32 %v656, %v441
      %v660 = vmul.f32 %v656, %v442
      %v661 = vmul.f32 %v656, %v443
      %v662 = vmul.f32 %v656, %v444
      %v663 = vmul.f32 %v656, %v445
      %v664 = vmul.f32 %v656, %v446
      %v665 = vadd.f32 %v647, %v657
      %v666 = vadd.f32 %v648, %v658
      %v667 = vadd.f32 %v649, %v659
      %v668 = vadd.f32 %v650, %v660
      %v669 = vadd.f32 %v651, %v661
      %v670 = vadd.f32 %v652, %v662
      %v671 = vadd.f32 %v653, %v663
      %v672 = vadd.f32 %v654, %v664
      %s673 = sld [smem:[#allocation9 + $0x1]]
      %v674 = vstv %s673
      %v675 = vadd.f32 %v665, %v674
      %v676 = vadd.f32 %v666, %v674
      %v677 = vadd.f32 %v667, %v674
      %v678 = vadd.f32 %v668, %v674
      %v679 = vadd.f32 %v669, %v674
      %v680 = vadd.f32 %v670, %v674
      %v681 = vadd.f32 %v671, %v674
      %v682 = vadd.f32 %v672, %v674
      %v683 = vsel %vm118, %v675, -inf
      %v684 = vsel %vm118, %v677, -inf
      %v685 = vsel %vm118, %v679, -inf
      %v686 = vmax.f32 %v683, %v685
      %v687 = vsel %vm118, %v681, -inf
      %v688 = vmax.f32 %v684, %v687
      %v689 = vmax.f32 %v686, %v688
      %v690 = vsel %vm118, %v676, -inf
      %v691 = vsel %vm118, %v678, -inf
      %v692 = vsel %vm118, %v680, -inf
      %v693 = vmax.f32 %v690, %v692
      %v694 = vsel %vm118, %v682, -inf
      %v695 = vmax.f32 %v691, %v694
      %v696 = vmax.f32 %v693, %v695
      %697 = vst.msk [vmem:[#allocation2 + $0x10] sm:$0xff] %vm118, %v689
      %698 = vst.msk [vmem:[#allocation2 + $0x18] sm:$0xff] %vm118, %v696
      %s699 = sld [smem:[#allocation8 + $0x100]]
      %v700 = vstv %s699
      %v701 = vmul.f32 %v700, %v259
      %v702 = vmul.f32 %v700, %v260
      %v703 = vmul.f32 %v700, %v261
      %v704 = vmul.f32 %v700, %v262
      %v705 = vmul.f32 %v700, %v263
      %v706 = vmul.f32 %v700, %v264
      %v707 = vmul.f32 %v700, %v265
      %v708 = vmul.f32 %v700, %v266
      %s709 = sld [smem:[#allocation8 + $0x101]]
      %v710 = vstv %s709
      %v711 = vmul.f32 %v710, %v295
      %v712 = vmul.f32 %v710, %v296
      %v713 = vmul.f32 %v710, %v297
      %v714 = vmul.f32 %v710, %v298
      %v715 = vmul.f32 %v710, %v299
      %v716 = vmul.f32 %v710, %v300
      %v717 = vmul.f32 %v710, %v301
      %v718 = vmul.f32 %v710, %v302
      %v719 = vadd.f32 %v701, %v711
      %v720 = vadd.f32 %v702, %v712
      %v721 = vadd.f32 %v703, %v713
      %v722 = vadd.f32 %v704, %v714
      %v723 = vadd.f32 %v705, %v715
      %v724 = vadd.f32 %v706, %v716
      %v725 = vadd.f32 %v707, %v717
      %v726 = vadd.f32 %v708, %v718
      %s727 = sld [smem:[#allocation8 + $0x102]]
      %v728 = vstv %s727
      %v729 = vmul.f32 %v728, %v331
      %v730 = vmul.f32 %v728, %v332
      %v731 = vmul.f32 %v728, %v333
      %v732 = vmul.f32 %v728, %v334
      %v733 = vmul.f32 %v728, %v335
      %v734 = vmul.f32 %v728, %v336
      %v735 = vmul.f32 %v728, %v337
      %v736 = vmul.f32 %v728, %v338
      %v737 = vadd.f32 %v719, %v729
      %v738 = vadd.f32 %v720, %v730
      %v739 = vadd.f32 %v721, %v731
      %v740 = vadd.f32 %v722, %v732
      %v741 = vadd.f32 %v723, %v733
      %v742 = vadd.f32 %v724, %v734
      %v743 = vadd.f32 %v725, %v735
      %v744 = vadd.f32 %v726, %v736
      %s745 = sld [smem:[#allocation8 + $0x103]]
      %v746 = vstv %s745
      %v747 = vmul.f32 %v746, %v367
      %v748 = vmul.f32 %v746, %v368
      %v749 = vmul.f32 %v746, %v369
      %v750 = vmul.f32 %v746, %v370
      %v751 = vmul.f32 %v746, %v371
      %v752 = vmul.f32 %v746, %v372
      %v753 = vmul.f32 %v746, %v373
      %v754 = vmul.f32 %v746, %v374
      %v755 = vadd.f32 %v737, %v747
      %v756 = vadd.f32 %v738, %v748
      %v757 = vadd.f32 %v739, %v749
      %v758 = vadd.f32 %v740, %v750
      %v759 = vadd.f32 %v741, %v751
      %v760 = vadd.f32 %v742, %v752
      %v761 = vadd.f32 %v743, %v753
      %v762 = vadd.f32 %v744, %v754
      %s763 = sld [smem:[#allocation8 + $0x104]]
      %v764 = vstv %s763
      %v765 = vmul.f32 %v764, %v403
      %v766 = vmul.f32 %v764, %v404
      %v767 = vmul.f32 %v764, %v405
      %v768 = vmul.f32 %v764, %v406
      %v769 = vmul.f32 %v764, %v407
      %v770 = vmul.f32 %v764, %v408
      %v771 = vmul.f32 %v764, %v409
      %v772 = vmul.f32 %v764, %v410
      %v773 = vadd.f32 %v755, %v765
      %v774 = vadd.f32 %v756, %v766
      %v775 = vadd.f32 %v757, %v767
      %v776 = vadd.f32 %v758, %v768
      %v777 = vadd.f32 %v759, %v769
      %v778 = vadd.f32 %v760, %v770
      %v779 = vadd.f32 %v761, %v771
      %v780 = vadd.f32 %v762, %v772
      %s781 = sld [smem:[#allocation8 + $0x105]]
      %v782 = vstv %s781
      %v783 = vmul.f32 %v782, %v439
      %v784 = vmul.f32 %v782, %v440
      %v785 = vmul.f32 %v782, %v441
      %v786 = vmul.f32 %v782, %v442
      %v787 = vmul.f32 %v782, %v443
      %v788 = vmul.f32 %v782, %v444
      %v789 = vmul.f32 %v782, %v445
      %v790 = vmul.f32 %v782, %v446
      %v791 = vadd.f32 %v773, %v783
      %v792 = vadd.f32 %v774, %v784
      %v793 = vadd.f32 %v775, %v785
      %v794 = vadd.f32 %v776, %v786
      %v795 = vadd.f32 %v777, %v787
      %v796 = vadd.f32 %v778, %v788
      %v797 = vadd.f32 %v779, %v789
      %v798 = vadd.f32 %v780, %v790
      %s799 = sld [smem:[#allocation9 + $0x2]]
      %v800 = vstv %s799
      %v801 = vadd.f32 %v791, %v800
      %v802 = vadd.f32 %v792, %v800
      %v803 = vadd.f32 %v793, %v800
      %v804 = vadd.f32 %v794, %v800
      %v805 = vadd.f32 %v795, %v800
      %v806 = vadd.f32 %v796, %v800
      %v807 = vadd.f32 %v797, %v800
      %v808 = vadd.f32 %v798, %v800
      %v809 = vsel %vm118, %v801, -inf
      %v810 = vsel %vm118, %v803, -inf
      %v811 = vsel %vm118, %v805, -inf
      %v812 = vmax.f32 %v809, %v811
      %v813 = vsel %vm118, %v807, -inf
      %v814 = vmax.f32 %v810, %v813
      %v815 = vmax.f32 %v812, %v814
      %v816 = vsel %vm118, %v802, -inf
      %v817 = vsel %vm118, %v804, -inf
      %v818 = vsel %vm118, %v806, -inf
      %v819 = vmax.f32 %v816, %v818
      %v820 = vsel %vm118, %v808, -inf
      %v821 = vmax.f32 %v817, %v820
      %v822 = vmax.f32 %v819, %v821
      %823 = vst.msk [vmem:[#allocation2 + $0x20] sm:$0xff] %vm118, %v815
      %824 = vst.msk [vmem:[#allocation2 + $0x28] sm:$0xff] %vm118, %v822
      %s825 = sld [smem:[#allocation8 + $0x180]]
      %v826 = vstv %s825
      %v827 = vmul.f32 %v826, %v259
      %v828 = vmul.f32 %v826, %v260
      %v829 = vmul.f32 %v826, %v261
      %v830 = vmul.f32 %v826, %v262
      %v831 = vmul.f32 %v826, %v263
      %v832 = vmul.f32 %v826, %v264
      %v833 = vmul.f32 %v826, %v265
      %v834 = vmul.f32 %v826, %v266
      %s835 = sld [smem:[#allocation8 + $0x181]]
      %v836 = vstv %s835
      %v837 = vmul.f32 %v836, %v295
      %v838 = vmul.f32 %v836, %v296
      %v839 = vmul.f32 %v836, %v297
      %v840 = vmul.f32 %v836, %v298
      %v841 = vmul.f32 %v836, %v299
      %v842 = vmul.f32 %v836, %v300
      %v843 = vmul.f32 %v836, %v301
      %v844 = vmul.f32 %v836, %v302
      %v845 = vadd.f32 %v827, %v837
      %v846 = vadd.f32 %v828, %v838
      %v847 = vadd.f32 %v829, %v839
      %v848 = vadd.f32 %v830, %v840
      %v849 = vadd.f32 %v831, %v841
      %v850 = vadd.f32 %v832, %v842
      %v851 = vadd.f32 %v833, %v843
      %v852 = vadd.f32 %v834, %v844
      %s853 = sld [smem:[#allocation8 + $0x182]]
      %v854 = vstv %s853
      %v855 = vmul.f32 %v854, %v331
      %v856 = vmul.f32 %v854, %v332
      %v857 = vmul.f32 %v854, %v333
      %v858 = vmul.f32 %v854, %v334
      %v859 = vmul.f32 %v854, %v335
      %v860 = vmul.f32 %v854, %v336
      %v861 = vmul.f32 %v854, %v337
      %v862 = vmul.f32 %v854, %v338
      %v863 = vadd.f32 %v845, %v855
      %v864 = vadd.f32 %v846, %v856
      %v865 = vadd.f32 %v847, %v857
      %v866 = vadd.f32 %v848, %v858
      %v867 = vadd.f32 %v849, %v859
      %v868 = vadd.f32 %v850, %v860
      %v869 = vadd.f32 %v851, %v861
      %v870 = vadd.f32 %v852, %v862
      %s871 = sld [smem:[#allocation8 + $0x183]]
      %v872 = vstv %s871
      %v873 = vmul.f32 %v872, %v367
      %v874 = vmul.f32 %v872, %v368
      %v875 = vmul.f32 %v872, %v369
      %v876 = vmul.f32 %v872, %v370
      %v877 = vmul.f32 %v872, %v371
      %v878 = vmul.f32 %v872, %v372
      %v879 = vmul.f32 %v872, %v373
      %v880 = vmul.f32 %v872, %v374
      %v881 = vadd.f32 %v863, %v873
      %v882 = vadd.f32 %v864, %v874
      %v883 = vadd.f32 %v865, %v875
      %v884 = vadd.f32 %v866, %v876
      %v885 = vadd.f32 %v867, %v877
      %v886 = vadd.f32 %v868, %v878
      %v887 = vadd.f32 %v869, %v879
      %v888 = vadd.f32 %v870, %v880
      %s889 = sld [smem:[#allocation8 + $0x184]]
      %v890 = vstv %s889
      %v891 = vmul.f32 %v890, %v403
      %v892 = vmul.f32 %v890, %v404
      %v893 = vmul.f32 %v890, %v405
      %v894 = vmul.f32 %v890, %v406
      %v895 = vmul.f32 %v890, %v407
      %v896 = vmul.f32 %v890, %v408
      %v897 = vmul.f32 %v890, %v409
      %v898 = vmul.f32 %v890, %v410
      %v899 = vadd.f32 %v881, %v891
      %v900 = vadd.f32 %v882, %v892
      %v901 = vadd.f32 %v883, %v893
      %v902 = vadd.f32 %v884, %v894
      %v903 = vadd.f32 %v885, %v895
      %v904 = vadd.f32 %v886, %v896
      %v905 = vadd.f32 %v887, %v897
      %v906 = vadd.f32 %v888, %v898
      %s907 = sld [smem:[#allocation8 + $0x185]]
      %v908 = vstv %s907
      %v909 = vmul.f32 %v908, %v439
      %v910 = vmul.f32 %v908, %v440
      %v911 = vmul.f32 %v908, %v441
      %v912 = vmul.f32 %v908, %v442
      %v913 = vmul.f32 %v908, %v443
      %v914 = vmul.f32 %v908, %v444
      %v915 = vmul.f32 %v908, %v445
      %v916 = vmul.f32 %v908, %v446
      %v917 = vadd.f32 %v899, %v909
      %v918 = vadd.f32 %v900, %v910
      %v919 = vadd.f32 %v901, %v911
      %v920 = vadd.f32 %v902, %v912
      %v921 = vadd.f32 %v903, %v913
      %v922 = vadd.f32 %v904, %v914
      %v923 = vadd.f32 %v905, %v915
      %v924 = vadd.f32 %v906, %v916
      %s925 = sld [smem:[#allocation9 + $0x3]]
      %v926 = vstv %s925
      %v927 = vadd.f32 %v917, %v926
      %v928 = vadd.f32 %v918, %v926
      %v929 = vadd.f32 %v919, %v926
      %v930 = vadd.f32 %v920, %v926
      %v931 = vadd.f32 %v921, %v926
      %v932 = vadd.f32 %v922, %v926
      %v933 = vadd.f32 %v923, %v926
      %v934 = vadd.f32 %v924, %v926
      %v935 = vsel %vm118, %v927, -inf
      %v936 = vsel %vm118, %v929, -inf
      %v937 = vsel %vm118, %v931, -inf
      %v938 = vmax.f32 %v935, %v937
      %v939 = vsel %vm118, %v933, -inf
      %v940 = vmax.f32 %v936, %v939
      %v941 = vmax.f32 %v938, %v940
      %v942 = vsel %vm118, %v928, -inf
      %v943 = vsel %vm118, %v930, -inf
      %v944 = vsel %vm118, %v932, -inf
      %v945 = vmax.f32 %v942, %v944
      %v946 = vsel %vm118, %v934, -inf
      %v947 = vmax.f32 %v943, %v946
      %v948 = vmax.f32 %v945, %v947
      %949 = vst.msk [vmem:[#allocation2 + $0x30] sm:$0xff] %vm118, %v941
      %950 = vst.msk [vmem:[#allocation2 + $0x38] sm:$0xff] %vm118, %v948
      %s951 = sld [smem:[#allocation8 + $0x200]]
      %v952 = vstv %s951
      %v953 = vmul.f32 %v952, %v259
      %v954 = vmul.f32 %v952, %v260
      %v955 = vmul.f32 %v952, %v261
      %v956 = vmul.f32 %v952, %v262
      %v957 = vmul.f32 %v952, %v263
      %v958 = vmul.f32 %v952, %v264
      %v959 = vmul.f32 %v952, %v265
      %v960 = vmul.f32 %v952, %v266
      %s961 = sld [smem:[#allocation8 + $0x201]]
      %v962 = vstv %s961
      %v963 = vmul.f32 %v962, %v295
      %v964 = vmul.f32 %v962, %v296
      %v965 = vmul.f32 %v962, %v297
      %v966 = vmul.f32 %v962, %v298
      %v967 = vmul.f32 %v962, %v299
      %v968 = vmul.f32 %v962, %v300
      %v969 = vmul.f32 %v962, %v301
      %v970 = vmul.f32 %v962, %v302
      %v971 = vadd.f32 %v953, %v963
      %v972 = vadd.f32 %v954, %v964
      %v973 = vadd.f32 %v955, %v965
      %v974 = vadd.f32 %v956, %v966
      %v975 = vadd.f32 %v957, %v967
      %v976 = vadd.f32 %v958, %v968
      %v977 = vadd.f32 %v959, %v969
      %v978 = vadd.f32 %v960, %v970
      %s979 = sld [smem:[#allocation8 + $0x202]]
      %v980 = vstv %s979
      %v981 = vmul.f32 %v980, %v331
      %v982 = vmul.f32 %v980, %v332
      %v983 = vmul.f32 %v980, %v333
      %v984 = vmul.f32 %v980, %v334
      %v985 = vmul.f32 %v980, %v335
      %v986 = vmul.f32 %v980, %v336
      %v987 = vmul.f32 %v980, %v337
      %v988 = vmul.f32 %v980, %v338
      %v989 = vadd.f32 %v971, %v981
      %v990 = vadd.f32 %v972, %v982
      %v991 = vadd.f32 %v973, %v983
      %v992 = vadd.f32 %v974, %v984
      %v993 = vadd.f32 %v975, %v985
      %v994 = vadd.f32 %v976, %v986
      %v995 = vadd.f32 %v977, %v987
      %v996 = vadd.f32 %v978, %v988
      %s997 = sld [smem:[#allocation8 + $0x203]]
      %v998 = vstv %s997
      %v999 = vmul.f32 %v998, %v367
      %v1000 = vmul.f32 %v998, %v368
      %v1001 = vmul.f32 %v998, %v369
      %v1002 = vmul.f32 %v998, %v370
      %v1003 = vmul.f32 %v998, %v371
      %v1004 = vmul.f32 %v998, %v372
      %v1005 = vmul.f32 %v998, %v373
      %v1006 = vmul.f32 %v998, %v374
      %v1007 = vadd.f32 %v989, %v999
      %v1008 = vadd.f32 %v990, %v1000
      %v1009 = vadd.f32 %v991, %v1001
      %v1010 = vadd.f32 %v992, %v1002
      %v1011 = vadd.f32 %v993, %v1003
      %v1012 = vadd.f32 %v994, %v1004
      %v1013 = vadd.f32 %v995, %v1005
      %v1014 = vadd.f32 %v996, %v1006
      %s1015 = sld [smem:[#allocation8 + $0x204]]
      %v1016 = vstv %s1015
      %v1017 = vmul.f32 %v1016, %v403
      %v1018 = vmul.f32 %v1016, %v404
      %v1019 = vmul.f32 %v1016, %v405
      %v1020 = vmul.f32 %v1016, %v406
      %v1021 = vmul.f32 %v1016, %v407
      %v1022 = vmul.f32 %v1016, %v408
      %v1023 = vmul.f32 %v1016, %v409
      %v1024 = vmul.f32 %v1016, %v410
      %v1025 = vadd.f32 %v1007, %v1017
      %v1026 = vadd.f32 %v1008, %v1018
      %v1027 = vadd.f32 %v1009, %v1019
      %v1028 = vadd.f32 %v1010, %v1020
      %v1029 = vadd.f32 %v1011, %v1021
      %v1030 = vadd.f32 %v1012, %v1022
      %v1031 = vadd.f32 %v1013, %v1023
      %v1032 = vadd.f32 %v1014, %v1024
      %s1033 = sld [smem:[#allocation8 + $0x205]]
      %v1034 = vstv %s1033
      %v1035 = vmul.f32 %v1034, %v439
      %v1036 = vmul.f32 %v1034, %v440
      %v1037 = vmul.f32 %v1034, %v441
      %v1038 = vmul.f32 %v1034, %v442
      %v1039 = vmul.f32 %v1034, %v443
      %v1040 = vmul.f32 %v1034, %v444
      %v1041 = vmul.f32 %v1034, %v445
      %v1042 = vmul.f32 %v1034, %v446
      %v1043 = vadd.f32 %v1025, %v1035
      %v1044 = vadd.f32 %v1026, %v1036
      %v1045 = vadd.f32 %v1027, %v1037
      %v1046 = vadd.f32 %v1028, %v1038
      %v1047 = vadd.f32 %v1029, %v1039
      %v1048 = vadd.f32 %v1030, %v1040
      %v1049 = vadd.f32 %v1031, %v1041
      %v1050 = vadd.f32 %v1032, %v1042
      %s1051 = sld [smem:[#allocation9 + $0x4]]
      %v1052 = vstv %s1051
      %v1053 = vadd.f32 %v1043, %v1052
      %v1054 = vadd.f32 %v1044, %v1052
      %v1055 = vadd.f32 %v1045, %v1052
      %v1056 = vadd.f32 %v1046, %v1052
      %v1057 = vadd.f32 %v1047, %v1052
      %v1058 = vadd.f32 %v1048, %v1052
      %v1059 = vadd.f32 %v1049, %v1052
      %v1060 = vadd.f32 %v1050, %v1052
      %v1061 = vsel %vm118, %v1053, -inf
      %v1062 = vsel %vm118, %v1055, -inf
      %v1063 = vsel %vm118, %v1057, -inf
      %v1064 = vmax.f32 %v1061, %v1063
      %v1065 = vsel %vm118, %v1059, -inf
      %v1066 = vmax.f32 %v1062, %v1065
      %v1067 = vmax.f32 %v1064, %v1066
      %v1068 = vsel %vm118, %v1054, -inf
      %v1069 = vsel %vm118, %v1056, -inf
      %v1070 = vsel %vm118, %v1058, -inf
      %v1071 = vmax.f32 %v1068, %v1070
      %v1072 = vsel %vm118, %v1060, -inf
      %v1073 = vmax.f32 %v1069, %v1072
      %v1074 = vmax.f32 %v1071, %v1073
      %1075 = vst.msk [vmem:[#allocation2 + $0x40] sm:$0xff] %vm118, %v1067
      %1076 = vst.msk [vmem:[#allocation2 + $0x48] sm:$0xff] %vm118, %v1074
      %s1077 = sld [smem:[#allocation8 + $0x280]]
      %v1078 = vstv %s1077
      %v1079 = vmul.f32 %v1078, %v259
      %v1080 = vmul.f32 %v1078, %v260
      %v1081 = vmul.f32 %v1078, %v261
      %v1082 = vmul.f32 %v1078, %v262
      %v1083 = vmul.f32 %v1078, %v263
      %v1084 = vmul.f32 %v1078, %v264
      %v1085 = vmul.f32 %v1078, %v265
      %v1086 = vmul.f32 %v1078, %v266
      %s1087 = sld [smem:[#allocation8 + $0x281]]
      %v1088 = vstv %s1087
      %v1089 = vmul.f32 %v1088, %v295
      %v1090 = vmul.f32 %v1088, %v296
      %v1091 = vmul.f32 %v1088, %v297
      %v1092 = vmul.f32 %v1088, %v298
      %v1093 = vmul.f32 %v1088, %v299
      %v1094 = vmul.f32 %v1088, %v300
      %v1095 = vmul.f32 %v1088, %v301
      %v1096 = vmul.f32 %v1088, %v302
      %v1097 = vadd.f32 %v1079, %v1089
      %v1098 = vadd.f32 %v1080, %v1090
      %v1099 = vadd.f32 %v1081, %v1091
      %v1100 = vadd.f32 %v1082, %v1092
      %v1101 = vadd.f32 %v1083, %v1093
      %v1102 = vadd.f32 %v1084, %v1094
      %v1103 = vadd.f32 %v1085, %v1095
      %v1104 = vadd.f32 %v1086, %v1096
      %s1105 = sld [smem:[#allocation8 + $0x282]]
      %v1106 = vstv %s1105
      %v1107 = vmul.f32 %v1106, %v331
      %v1108 = vmul.f32 %v1106, %v332
      %v1109 = vmul.f32 %v1106, %v333
      %v1110 = vmul.f32 %v1106, %v334
      %v1111 = vmul.f32 %v1106, %v335
      %v1112 = vmul.f32 %v1106, %v336
      %v1113 = vmul.f32 %v1106, %v337
      %v1114 = vmul.f32 %v1106, %v338
      %v1115 = vadd.f32 %v1097, %v1107
      %v1116 = vadd.f32 %v1098, %v1108
      %v1117 = vadd.f32 %v1099, %v1109
      %v1118 = vadd.f32 %v1100, %v1110
      %v1119 = vadd.f32 %v1101, %v1111
      %v1120 = vadd.f32 %v1102, %v1112
      %v1121 = vadd.f32 %v1103, %v1113
      %v1122 = vadd.f32 %v1104, %v1114
      %s1123 = sld [smem:[#allocation8 + $0x283]]
      %v1124 = vstv %s1123
      %v1125 = vmul.f32 %v1124, %v367
      %v1126 = vmul.f32 %v1124, %v368
      %v1127 = vmul.f32 %v1124, %v369
      %v1128 = vmul.f32 %v1124, %v370
      %v1129 = vmul.f32 %v1124, %v371
      %v1130 = vmul.f32 %v1124, %v372
      %v1131 = vmul.f32 %v1124, %v373
      %v1132 = vmul.f32 %v1124, %v374
      %v1133 = vadd.f32 %v1115, %v1125
      %v1134 = vadd.f32 %v1116, %v1126
      %v1135 = vadd.f32 %v1117, %v1127
      %v1136 = vadd.f32 %v1118, %v1128
      %v1137 = vadd.f32 %v1119, %v1129
      %v1138 = vadd.f32 %v1120, %v1130
      %v1139 = vadd.f32 %v1121, %v1131
      %v1140 = vadd.f32 %v1122, %v1132
      %s1141 = sld [smem:[#allocation8 + $0x284]]
      %v1142 = vstv %s1141
      %v1143 = vmul.f32 %v1142, %v403
      %v1144 = vmul.f32 %v1142, %v404
      %v1145 = vmul.f32 %v1142, %v405
      %v1146 = vmul.f32 %v1142, %v406
      %v1147 = vmul.f32 %v1142, %v407
      %v1148 = vmul.f32 %v1142, %v408
      %v1149 = vmul.f32 %v1142, %v409
      %v1150 = vmul.f32 %v1142, %v410
      %v1151 = vadd.f32 %v1133, %v1143
      %v1152 = vadd.f32 %v1134, %v1144
      %v1153 = vadd.f32 %v1135, %v1145
      %v1154 = vadd.f32 %v1136, %v1146
      %v1155 = vadd.f32 %v1137, %v1147
      %v1156 = vadd.f32 %v1138, %v1148
      %v1157 = vadd.f32 %v1139, %v1149
      %v1158 = vadd.f32 %v1140, %v1150
      %s1159 = sld [smem:[#allocation8 + $0x285]]
      %v1160 = vstv %s1159
      %v1161 = vmul.f32 %v1160, %v439
      %v1162 = vmul.f32 %v1160, %v440
      %v1163 = vmul.f32 %v1160, %v441
      %v1164 = vmul.f32 %v1160, %v442
      %v1165 = vmul.f32 %v1160, %v443
      %v1166 = vmul.f32 %v1160, %v444
      %v1167 = vmul.f32 %v1160, %v445
      %v1168 = vmul.f32 %v1160, %v446
      %v1169 = vadd.f32 %v1151, %v1161
      %v1170 = vadd.f32 %v1152, %v1162
      %v1171 = vadd.f32 %v1153, %v1163
      %v1172 = vadd.f32 %v1154, %v1164
      %v1173 = vadd.f32 %v1155, %v1165
      %v1174 = vadd.f32 %v1156, %v1166
      %v1175 = vadd.f32 %v1157, %v1167
      %v1176 = vadd.f32 %v1158, %v1168
      %s1177 = sld [smem:[#allocation9 + $0x5]]
      %v1178 = vstv %s1177
      %v1179 = vadd.f32 %v1169, %v1178
      %v1180 = vadd.f32 %v1170, %v1178
      %v1181 = vadd.f32 %v1171, %v1178
      %v1182 = vadd.f32 %v1172, %v1178
      %v1183 = vadd.f32 %v1173, %v1178
      %v1184 = vadd.f32 %v1174, %v1178
      %v1185 = vadd.f32 %v1175, %v1178
      %v1186 = vadd.f32 %v1176, %v1178
      %v1187 = vsel %vm118, %v1179, -inf
      %v1188 = vsel %vm118, %v1181, -inf
      %v1189 = vsel %vm118, %v1183, -inf
      %v1190 = vmax.f32 %v1187, %v1189
      %v1191 = vsel %vm118, %v1185, -inf
      %v1192 = vmax.f32 %v1188, %v1191
      %v1193 = vmax.f32 %v1190, %v1192
      %v1194 = vsel %vm118, %v1180, -inf
      %v1195 = vsel %vm118, %v1182, -inf
      %v1196 = vsel %vm118, %v1184, -inf
      %v1197 = vmax.f32 %v1194, %v1196
      %v1198 = vsel %vm118, %v1186, -inf
      %v1199 = vmax.f32 %v1195, %v1198
      %v1200 = vmax.f32 %v1197, %v1199
      %1201 = vst.msk [vmem:[#allocation2 + $0x50] sm:$0xff] %vm118, %v1193
      %1202 = vst.msk [vmem:[#allocation2 + $0x58] sm:$0xff] %vm118, %v1200
      %s1203 = sld [smem:[#allocation8 + $0x300]]
      %v1204 = vstv %s1203
      %v1205 = vmul.f32 %v1204, %v259
      %v1206 = vmul.f32 %v1204, %v260
      %v1207 = vmul.f32 %v1204, %v261
      %v1208 = vmul.f32 %v1204, %v262
      %v1209 = vmul.f32 %v1204, %v263
      %v1210 = vmul.f32 %v1204, %v264
      %v1211 = vmul.f32 %v1204, %v265
      %v1212 = vmul.f32 %v1204, %v266
      %s1213 = sld [smem:[#allocation8 + $0x301]]
      %v1214 = vstv %s1213
      %v1215 = vmul.f32 %v1214, %v295
      %v1216 = vmul.f32 %v1214, %v296
      %v1217 = vmul.f32 %v1214, %v297
      %v1218 = vmul.f32 %v1214, %v298
      %v1219 = vmul.f32 %v1214, %v299
      %v1220 = vmul.f32 %v1214, %v300
      %v1221 = vmul.f32 %v1214, %v301
      %v1222 = vmul.f32 %v1214, %v302
      %v1223 = vadd.f32 %v1205, %v1215
      %v1224 = vadd.f32 %v1206, %v1216
      %v1225 = vadd.f32 %v1207, %v1217
      %v1226 = vadd.f32 %v1208, %v1218
      %v1227 = vadd.f32 %v1209, %v1219
      %v1228 = vadd.f32 %v1210, %v1220
      %v1229 = vadd.f32 %v1211, %v1221
      %v1230 = vadd.f32 %v1212, %v1222
      %s1231 = sld [smem:[#allocation8 + $0x302]]
      %v1232 = vstv %s1231
      %v1233 = vmul.f32 %v1232, %v331
      %v1234 = vmul.f32 %v1232, %v332
      %v1235 = vmul.f32 %v1232, %v333
      %v1236 = vmul.f32 %v1232, %v334
      %v1237 = vmul.f32 %v1232, %v335
      %v1238 = vmul.f32 %v1232, %v336
      %v1239 = vmul.f32 %v1232, %v337
      %v1240 = vmul.f32 %v1232, %v338
      %v1241 = vadd.f32 %v1223, %v1233
      %v1242 = vadd.f32 %v1224, %v1234
      %v1243 = vadd.f32 %v1225, %v1235
      %v1244 = vadd.f32 %v1226, %v1236
      %v1245 = vadd.f32 %v1227, %v1237
      %v1246 = vadd.f32 %v1228, %v1238
      %v1247 = vadd.f32 %v1229, %v1239
      %v1248 = vadd.f32 %v1230, %v1240
      %s1249 = sld [smem:[#allocation8 + $0x303]]
      %v1250 = vstv %s1249
      %v1251 = vmul.f32 %v1250, %v367
      %v1252 = vmul.f32 %v1250, %v368
      %v1253 = vmul.f32 %v1250, %v369
      %v1254 = vmul.f32 %v1250, %v370
      %v1255 = vmul.f32 %v1250, %v371
      %v1256 = vmul.f32 %v1250, %v372
      %v1257 = vmul.f32 %v1250, %v373
      %v1258 = vmul.f32 %v1250, %v374
      %v1259 = vadd.f32 %v1241, %v1251
      %v1260 = vadd.f32 %v1242, %v1252
      %v1261 = vadd.f32 %v1243, %v1253
      %v1262 = vadd.f32 %v1244, %v1254
      %v1263 = vadd.f32 %v1245, %v1255
      %v1264 = vadd.f32 %v1246, %v1256
      %v1265 = vadd.f32 %v1247, %v1257
      %v1266 = vadd.f32 %v1248, %v1258
      %s1267 = sld [smem:[#allocation8 + $0x304]]
      %v1268 = vstv %s1267
      %v1269 = vmul.f32 %v1268, %v403
      %v1270 = vmul.f32 %v1268, %v404
      %v1271 = vmul.f32 %v1268, %v405
      %v1272 = vmul.f32 %v1268, %v406
      %v1273 = vmul.f32 %v1268, %v407
      %v1274 = vmul.f32 %v1268, %v408
      %v1275 = vmul.f32 %v1268, %v409
      %v1276 = vmul.f32 %v1268, %v410
      %v1277 = vadd.f32 %v1259, %v1269
      %v1278 = vadd.f32 %v1260, %v1270
      %v1279 = vadd.f32 %v1261, %v1271
      %v1280 = vadd.f32 %v1262, %v1272
      %v1281 = vadd.f32 %v1263, %v1273
      %v1282 = vadd.f32 %v1264, %v1274
      %v1283 = vadd.f32 %v1265, %v1275
      %v1284 = vadd.f32 %v1266, %v1276
      %s1285 = sld [smem:[#allocation8 + $0x305]]
      %v1286 = vstv %s1285
      %v1287 = vmul.f32 %v1286, %v439
      %v1288 = vmul.f32 %v1286, %v440
      %v1289 = vmul.f32 %v1286, %v441
      %v1290 = vmul.f32 %v1286, %v442
      %v1291 = vmul.f32 %v1286, %v443
      %v1292 = vmul.f32 %v1286, %v444
      %v1293 = vmul.f32 %v1286, %v445
      %v1294 = vmul.f32 %v1286, %v446
      %v1295 = vadd.f32 %v1277, %v1287
      %v1296 = vadd.f32 %v1278, %v1288
      %v1297 = vadd.f32 %v1279, %v1289
      %v1298 = vadd.f32 %v1280, %v1290
      %v1299 = vadd.f32 %v1281, %v1291
      %v1300 = vadd.f32 %v1282, %v1292
      %v1301 = vadd.f32 %v1283, %v1293
      %v1302 = vadd.f32 %v1284, %v1294
      %s1303 = sld [smem:[#allocation9 + $0x6]]
      %v1304 = vstv %s1303
      %v1305 = vadd.f32 %v1295, %v1304
      %v1306 = vadd.f32 %v1296, %v1304
      %v1307 = vadd.f32 %v1297, %v1304
      %v1308 = vadd.f32 %v1298, %v1304
      %v1309 = vadd.f32 %v1299, %v1304
      %v1310 = vadd.f32 %v1300, %v1304
      %v1311 = vadd.f32 %v1301, %v1304
      %v1312 = vadd.f32 %v1302, %v1304
      %v1313 = vsel %vm118, %v1305, -inf
      %v1314 = vsel %vm118, %v1307, -inf
      %v1315 = vsel %vm118, %v1309, -inf
      %v1316 = vmax.f32 %v1313, %v1315
      %v1317 = vsel %vm118, %v1311, -inf
      %v1318 = vmax.f32 %v1314, %v1317
      %v1319 = vmax.f32 %v1316, %v1318
      %v1320 = vsel %vm118, %v1306, -inf
      %v1321 = vsel %vm118, %v1308, -inf
      %v1322 = vsel %vm118, %v1310, -inf
      %v1323 = vmax.f32 %v1320, %v1322
      %v1324 = vsel %vm118, %v1312, -inf
      %v1325 = vmax.f32 %v1321, %v1324
      %v1326 = vmax.f32 %v1323, %v1325
      %1327 = vst.msk [vmem:[#allocation2 + $0x60] sm:$0xff] %vm118, %v1319
      %1328 = vst.msk [vmem:[#allocation2 + $0x68] sm:$0xff] %vm118, %v1326
      %s1329 = sld [smem:[#allocation8 + $0x380]]
      %v1330 = vstv %s1329
      %v1331 = vmul.f32 %v1330, %v259
      %v1332 = vmul.f32 %v1330, %v260
      %v1333 = vmul.f32 %v1330, %v261
      %v1334 = vmul.f32 %v1330, %v262
      %v1335 = vmul.f32 %v1330, %v263
      %v1336 = vmul.f32 %v1330, %v264
      %v1337 = vmul.f32 %v1330, %v265
      %v1338 = vmul.f32 %v1330, %v266
      %s1339 = sld [smem:[#allocation8 + $0x381]]
      %v1340 = vstv %s1339
      %v1341 = vmul.f32 %v1340, %v295
      %v1342 = vmul.f32 %v1340, %v296
      %v1343 = vmul.f32 %v1340, %v297
      %v1344 = vmul.f32 %v1340, %v298
      %v1345 = vmul.f32 %v1340, %v299
      %v1346 = vmul.f32 %v1340, %v300
      %v1347 = vmul.f32 %v1340, %v301
      %v1348 = vmul.f32 %v1340, %v302
      %v1349 = vadd.f32 %v1331, %v1341
      %v1350 = vadd.f32 %v1332, %v1342
      %v1351 = vadd.f32 %v1333, %v1343
      %v1352 = vadd.f32 %v1334, %v1344
      %v1353 = vadd.f32 %v1335, %v1345
      %v1354 = vadd.f32 %v1336, %v1346
      %v1355 = vadd.f32 %v1337, %v1347
      %v1356 = vadd.f32 %v1338, %v1348
      %s1357 = sld [smem:[#allocation8 + $0x382]]
      %v1358 = vstv %s1357
      %v1359 = vmul.f32 %v1358, %v331
      %v1360 = vmul.f32 %v1358, %v332
      %v1361 = vmul.f32 %v1358, %v333
      %v1362 = vmul.f32 %v1358, %v334
      %v1363 = vmul.f32 %v1358, %v335
      %v1364 = vmul.f32 %v1358, %v336
      %v1365 = vmul.f32 %v1358, %v337
      %v1366 = vmul.f32 %v1358, %v338
      %v1367 = vadd.f32 %v1349, %v1359
      %v1368 = vadd.f32 %v1350, %v1360
      %v1369 = vadd.f32 %v1351, %v1361
      %v1370 = vadd.f32 %v1352, %v1362
      %v1371 = vadd.f32 %v1353, %v1363
      %v1372 = vadd.f32 %v1354, %v1364
      %v1373 = vadd.f32 %v1355, %v1365
      %v1374 = vadd.f32 %v1356, %v1366
      %s1375 = sld [smem:[#allocation8 + $0x383]]
      %v1376 = vstv %s1375
      %v1377 = vmul.f32 %v1376, %v367
      %v1378 = vmul.f32 %v1376, %v368
      %v1379 = vmul.f32 %v1376, %v369
      %v1380 = vmul.f32 %v1376, %v370
      %v1381 = vmul.f32 %v1376, %v371
      %v1382 = vmul.f32 %v1376, %v372
      %v1383 = vmul.f32 %v1376, %v373
      %v1384 = vmul.f32 %v1376, %v374
      %v1385 = vadd.f32 %v1367, %v1377
      %v1386 = vadd.f32 %v1368, %v1378
      %v1387 = vadd.f32 %v1369, %v1379
      %v1388 = vadd.f32 %v1370, %v1380
      %v1389 = vadd.f32 %v1371, %v1381
      %v1390 = vadd.f32 %v1372, %v1382
      %v1391 = vadd.f32 %v1373, %v1383
      %v1392 = vadd.f32 %v1374, %v1384
      %s1393 = sld [smem:[#allocation8 + $0x384]]
      %v1394 = vstv %s1393
      %v1395 = vmul.f32 %v1394, %v403
      %v1396 = vmul.f32 %v1394, %v404
      %v1397 = vmul.f32 %v1394, %v405
      %v1398 = vmul.f32 %v1394, %v406
      %v1399 = vmul.f32 %v1394, %v407
      %v1400 = vmul.f32 %v1394, %v408
      %v1401 = vmul.f32 %v1394, %v409
      %v1402 = vmul.f32 %v1394, %v410
      %v1403 = vadd.f32 %v1385, %v1395
      %v1404 = vadd.f32 %v1386, %v1396
      %v1405 = vadd.f32 %v1387, %v1397
      %v1406 = vadd.f32 %v1388, %v1398
      %v1407 = vadd.f32 %v1389, %v1399
      %v1408 = vadd.f32 %v1390, %v1400
      %v1409 = vadd.f32 %v1391, %v1401
      %v1410 = vadd.f32 %v1392, %v1402
      %s1411 = sld [smem:[#allocation8 + $0x385]]
      %v1412 = vstv %s1411
      %v1413 = vmul.f32 %v1412, %v439
      %v1414 = vmul.f32 %v1412, %v440
      %v1415 = vmul.f32 %v1412, %v441
      %v1416 = vmul.f32 %v1412, %v442
      %v1417 = vmul.f32 %v1412, %v443
      %v1418 = vmul.f32 %v1412, %v444
      %v1419 = vmul.f32 %v1412, %v445
      %v1420 = vmul.f32 %v1412, %v446
      %v1421 = vadd.f32 %v1403, %v1413
      %v1422 = vadd.f32 %v1404, %v1414
      %v1423 = vadd.f32 %v1405, %v1415
      %v1424 = vadd.f32 %v1406, %v1416
      %v1425 = vadd.f32 %v1407, %v1417
      %v1426 = vadd.f32 %v1408, %v1418
      %v1427 = vadd.f32 %v1409, %v1419
      %v1428 = vadd.f32 %v1410, %v1420
      %s1429 = sld [smem:[#allocation9 + $0x7]]
      %v1430 = vstv %s1429
      %v1431 = vadd.f32 %v1421, %v1430
      %v1432 = vadd.f32 %v1422, %v1430
      %v1433 = vadd.f32 %v1423, %v1430
      %v1434 = vadd.f32 %v1424, %v1430
      %v1435 = vadd.f32 %v1425, %v1430
      %v1436 = vadd.f32 %v1426, %v1430
      %v1437 = vadd.f32 %v1427, %v1430
      %v1438 = vadd.f32 %v1428, %v1430
      %v1439 = vsel %vm118, %v1431, -inf
      %v1440 = vsel %vm118, %v1433, -inf
      %v1441 = vsel %vm118, %v1435, -inf
      %v1442 = vmax.f32 %v1439, %v1441
      %v1443 = vsel %vm118, %v1437, -inf
      %v1444 = vmax.f32 %v1440, %v1443
      %v1445 = vmax.f32 %v1442, %v1444
      %v1446 = vsel %vm118, %v1432, -inf
      %v1447 = vsel %vm118, %v1434, -inf
      %v1448 = vsel %vm118, %v1436, -inf
      %v1449 = vmax.f32 %v1446, %v1448
      %v1450 = vsel %vm118, %v1438, -inf
      %v1451 = vmax.f32 %v1447, %v1450
      %v1452 = vmax.f32 %v1449, %v1451
      %1453 = vst.msk [vmem:[#allocation2 + $0x70] sm:$0xff] %vm118, %v1445
      %1454 = vst.msk [vmem:[#allocation2 + $0x78] sm:$0xff] %vm118, %v1452
      %s1455 = sld [smem:[#allocation8 + $0x400]]
      %v1456 = vstv %s1455
      %v1457 = vmul.f32 %v1456, %v259
      %v1458 = vmul.f32 %v1456, %v260
      %v1459 = vmul.f32 %v1456, %v261
      %v1460 = vmul.f32 %v1456, %v262
      %v1461 = vmul.f32 %v1456, %v263
      %v1462 = vmul.f32 %v1456, %v264
      %v1463 = vmul.f32 %v1456, %v265
      %v1464 = vmul.f32 %v1456, %v266
      %s1465 = sld [smem:[#allocation8 + $0x401]]
      %v1466 = vstv %s1465
      %v1467 = vmul.f32 %v1466, %v295
      %v1468 = vmul.f32 %v1466, %v296
      %v1469 = vmul.f32 %v1466, %v297
      %v1470 = vmul.f32 %v1466, %v298
      %v1471 = vmul.f32 %v1466, %v299
      %v1472 = vmul.f32 %v1466, %v300
      %v1473 = vmul.f32 %v1466, %v301
      %v1474 = vmul.f32 %v1466, %v302
      %v1475 = vadd.f32 %v1457, %v1467
      %v1476 = vadd.f32 %v1458, %v1468
      %v1477 = vadd.f32 %v1459, %v1469
      %v1478 = vadd.f32 %v1460, %v1470
      %v1479 = vadd.f32 %v1461, %v1471
      %v1480 = vadd.f32 %v1462, %v1472
      %v1481 = vadd.f32 %v1463, %v1473
      %v1482 = vadd.f32 %v1464, %v1474
      %s1483 = sld [smem:[#allocation8 + $0x402]]
      %v1484 = vstv %s1483
      %v1485 = vmul.f32 %v1484, %v331
      %v1486 = vmul.f32 %v1484, %v332
      %v1487 = vmul.f32 %v1484, %v333
      %v1488 = vmul.f32 %v1484, %v334
      %v1489 = vmul.f32 %v1484, %v335
      %v1490 = vmul.f32 %v1484, %v336
      %v1491 = vmul.f32 %v1484, %v337
      %v1492 = vmul.f32 %v1484, %v338
      %v1493 = vadd.f32 %v1475, %v1485
      %v1494 = vadd.f32 %v1476, %v1486
      %v1495 = vadd.f32 %v1477, %v1487
      %v1496 = vadd.f32 %v1478, %v1488
      %v1497 = vadd.f32 %v1479, %v1489
      %v1498 = vadd.f32 %v1480, %v1490
      %v1499 = vadd.f32 %v1481, %v1491
      %v1500 = vadd.f32 %v1482, %v1492
      %s1501 = sld [smem:[#allocation8 + $0x403]]
      %v1502 = vstv %s1501
      %v1503 = vmul.f32 %v1502, %v367
      %v1504 = vmul.f32 %v1502, %v368
      %v1505 = vmul.f32 %v1502, %v369
      %v1506 = vmul.f32 %v1502, %v370
      %v1507 = vmul.f32 %v1502, %v371
      %v1508 = vmul.f32 %v1502, %v372
      %v1509 = vmul.f32 %v1502, %v373
      %v1510 = vmul.f32 %v1502, %v374
      %v1511 = vadd.f32 %v1493, %v1503
      %v1512 = vadd.f32 %v1494, %v1504
      %v1513 = vadd.f32 %v1495, %v1505
      %v1514 = vadd.f32 %v1496, %v1506
      %v1515 = vadd.f32 %v1497, %v1507
      %v1516 = vadd.f32 %v1498, %v1508
      %v1517 = vadd.f32 %v1499, %v1509
      %v1518 = vadd.f32 %v1500, %v1510
      %s1519 = sld [smem:[#allocation8 + $0x404]]
      %v1520 = vstv %s1519
      %v1521 = vmul.f32 %v1520, %v403
      %v1522 = vmul.f32 %v1520, %v404
      %v1523 = vmul.f32 %v1520, %v405
      %v1524 = vmul.f32 %v1520, %v406
      %v1525 = vmul.f32 %v1520, %v407
      %v1526 = vmul.f32 %v1520, %v408
      %v1527 = vmul.f32 %v1520, %v409
      %v1528 = vmul.f32 %v1520, %v410
      %v1529 = vadd.f32 %v1511, %v1521
      %v1530 = vadd.f32 %v1512, %v1522
      %v1531 = vadd.f32 %v1513, %v1523
      %v1532 = vadd.f32 %v1514, %v1524
      %v1533 = vadd.f32 %v1515, %v1525
      %v1534 = vadd.f32 %v1516, %v1526
      %v1535 = vadd.f32 %v1517, %v1527
      %v1536 = vadd.f32 %v1518, %v1528
      %s1537 = sld [smem:[#allocation8 + $0x405]]
      %v1538 = vstv %s1537
      %v1539 = vmul.f32 %v1538, %v439
      %v1540 = vmul.f32 %v1538, %v440
      %v1541 = vmul.f32 %v1538, %v441
      %v1542 = vmul.f32 %v1538, %v442
      %v1543 = vmul.f32 %v1538, %v443
      %v1544 = vmul.f32 %v1538, %v444
      %v1545 = vmul.f32 %v1538, %v445
      %v1546 = vmul.f32 %v1538, %v446
      %v1547 = vadd.f32 %v1529, %v1539
      %v1548 = vadd.f32 %v1530, %v1540
      %v1549 = vadd.f32 %v1531, %v1541
      %v1550 = vadd.f32 %v1532, %v1542
      %v1551 = vadd.f32 %v1533, %v1543
      %v1552 = vadd.f32 %v1534, %v1544
      %v1553 = vadd.f32 %v1535, %v1545
      %v1554 = vadd.f32 %v1536, %v1546
      %s1555 = sld [smem:[#allocation9 + $0x8]]
      %v1556 = vstv %s1555
      %v1557 = vadd.f32 %v1547, %v1556
      %v1558 = vadd.f32 %v1548, %v1556
      %v1559 = vadd.f32 %v1549, %v1556
      %v1560 = vadd.f32 %v1550, %v1556
      %v1561 = vadd.f32 %v1551, %v1556
      %v1562 = vadd.f32 %v1552, %v1556
      %v1563 = vadd.f32 %v1553, %v1556
      %v1564 = vadd.f32 %v1554, %v1556
      %v1565 = vsel %vm118, %v1557, -inf
      %v1566 = vsel %vm118, %v1559, -inf
      %v1567 = vsel %vm118, %v1561, -inf
      %v1568 = vmax.f32 %v1565, %v1567
      %v1569 = vsel %vm118, %v1563, -inf
      %v1570 = vmax.f32 %v1566, %v1569
      %v1571 = vmax.f32 %v1568, %v1570
      %v1572 = vsel %vm118, %v1558, -inf
      %v1573 = vsel %vm118, %v1560, -inf
      %v1574 = vsel %vm118, %v1562, -inf
      %v1575 = vmax.f32 %v1572, %v1574
      %v1576 = vsel %vm118, %v1564, -inf
      %v1577 = vmax.f32 %v1573, %v1576
      %v1578 = vmax.f32 %v1575, %v1577
      %1579 = vst.msk [vmem:[#allocation2 + $0x80] sm:$0xff] %vm118, %v1571
      %1580 = vst.msk [vmem:[#allocation2 + $0x88] sm:$0xff] %vm118, %v1578
      %s1581 = sld [smem:[#allocation8 + $0x480]]
      %v1582 = vstv %s1581
      %v1583 = vmul.f32 %v1582, %v259
      %v1584 = vmul.f32 %v1582, %v260
      %v1585 = vmul.f32 %v1582, %v261
      %v1586 = vmul.f32 %v1582, %v262
      %v1587 = vmul.f32 %v1582, %v263
      %v1588 = vmul.f32 %v1582, %v264
      %v1589 = vmul.f32 %v1582, %v265
      %v1590 = vmul.f32 %v1582, %v266
      %s1591 = sld [smem:[#allocation8 + $0x481]]
      %v1592 = vstv %s1591
      %v1593 = vmul.f32 %v1592, %v295
      %v1594 = vmul.f32 %v1592, %v296
      %v1595 = vmul.f32 %v1592, %v297
      %v1596 = vmul.f32 %v1592, %v298
      %v1597 = vmul.f32 %v1592, %v299
      %v1598 = vmul.f32 %v1592, %v300
      %v1599 = vmul.f32 %v1592, %v301
      %v1600 = vmul.f32 %v1592, %v302
      %v1601 = vadd.f32 %v1583, %v1593
      %v1602 = vadd.f32 %v1584, %v1594
      %v1603 = vadd.f32 %v1585, %v1595
      %v1604 = vadd.f32 %v1586, %v1596
      %v1605 = vadd.f32 %v1587, %v1597
      %v1606 = vadd.f32 %v1588, %v1598
      %v1607 = vadd.f32 %v1589, %v1599
      %v1608 = vadd.f32 %v1590, %v1600
      %s1609 = sld [smem:[#allocation8 + $0x482]]
      %v1610 = vstv %s1609
      %v1611 = vmul.f32 %v1610, %v331
      %v1612 = vmul.f32 %v1610, %v332
      %v1613 = vmul.f32 %v1610, %v333
      %v1614 = vmul.f32 %v1610, %v334
      %v1615 = vmul.f32 %v1610, %v335
      %v1616 = vmul.f32 %v1610, %v336
      %v1617 = vmul.f32 %v1610, %v337
      %v1618 = vmul.f32 %v1610, %v338
      %v1619 = vadd.f32 %v1601, %v1611
      %v1620 = vadd.f32 %v1602, %v1612
      %v1621 = vadd.f32 %v1603, %v1613
      %v1622 = vadd.f32 %v1604, %v1614
      %v1623 = vadd.f32 %v1605, %v1615
      %v1624 = vadd.f32 %v1606, %v1616
      %v1625 = vadd.f32 %v1607, %v1617
      %v1626 = vadd.f32 %v1608, %v1618
      %s1627 = sld [smem:[#allocation8 + $0x483]]
      %v1628 = vstv %s1627
      %v1629 = vmul.f32 %v1628, %v367
      %v1630 = vmul.f32 %v1628, %v368
      %v1631 = vmul.f32 %v1628, %v369
      %v1632 = vmul.f32 %v1628, %v370
      %v1633 = vmul.f32 %v1628, %v371
      %v1634 = vmul.f32 %v1628, %v372
      %v1635 = vmul.f32 %v1628, %v373
      %v1636 = vmul.f32 %v1628, %v374
      %v1637 = vadd.f32 %v1619, %v1629
      %v1638 = vadd.f32 %v1620, %v1630
      %v1639 = vadd.f32 %v1621, %v1631
      %v1640 = vadd.f32 %v1622, %v1632
      %v1641 = vadd.f32 %v1623, %v1633
      %v1642 = vadd.f32 %v1624, %v1634
      %v1643 = vadd.f32 %v1625, %v1635
      %v1644 = vadd.f32 %v1626, %v1636
      %s1645 = sld [smem:[#allocation8 + $0x484]]
      %v1646 = vstv %s1645
      %v1647 = vmul.f32 %v1646, %v403
      %v1648 = vmul.f32 %v1646, %v404
      %v1649 = vmul.f32 %v1646, %v405
      %v1650 = vmul.f32 %v1646, %v406
      %v1651 = vmul.f32 %v1646, %v407
      %v1652 = vmul.f32 %v1646, %v408
      %v1653 = vmul.f32 %v1646, %v409
      %v1654 = vmul.f32 %v1646, %v410
      %v1655 = vadd.f32 %v1637, %v1647
      %v1656 = vadd.f32 %v1638, %v1648
      %v1657 = vadd.f32 %v1639, %v1649
      %v1658 = vadd.f32 %v1640, %v1650
      %v1659 = vadd.f32 %v1641, %v1651
      %v1660 = vadd.f32 %v1642, %v1652
      %v1661 = vadd.f32 %v1643, %v1653
      %v1662 = vadd.f32 %v1644, %v1654
      %s1663 = sld [smem:[#allocation8 + $0x485]]
      %v1664 = vstv %s1663
      %v1665 = vmul.f32 %v1664, %v439
      %v1666 = vmul.f32 %v1664, %v440
      %v1667 = vmul.f32 %v1664, %v441
      %v1668 = vmul.f32 %v1664, %v442
      %v1669 = vmul.f32 %v1664, %v443
      %v1670 = vmul.f32 %v1664, %v444
      %v1671 = vmul.f32 %v1664, %v445
      %v1672 = vmul.f32 %v1664, %v446
      %v1673 = vadd.f32 %v1655, %v1665
      %v1674 = vadd.f32 %v1656, %v1666
      %v1675 = vadd.f32 %v1657, %v1667
      %v1676 = vadd.f32 %v1658, %v1668
      %v1677 = vadd.f32 %v1659, %v1669
      %v1678 = vadd.f32 %v1660, %v1670
      %v1679 = vadd.f32 %v1661, %v1671
      %v1680 = vadd.f32 %v1662, %v1672
      %s1681 = sld [smem:[#allocation9 + $0x9]]
      %v1682 = vstv %s1681
      %v1683 = vadd.f32 %v1673, %v1682
      %v1684 = vadd.f32 %v1674, %v1682
      %v1685 = vadd.f32 %v1675, %v1682
      %v1686 = vadd.f32 %v1676, %v1682
      %v1687 = vadd.f32 %v1677, %v1682
      %v1688 = vadd.f32 %v1678, %v1682
      %v1689 = vadd.f32 %v1679, %v1682
      %v1690 = vadd.f32 %v1680, %v1682
      %v1691 = vsel %vm118, %v1683, -inf
      %v1692 = vsel %vm118, %v1685, -inf
      %v1693 = vsel %vm118, %v1687, -inf
      %v1694 = vmax.f32 %v1691, %v1693
      %v1695 = vsel %vm118, %v1689, -inf
      %v1696 = vmax.f32 %v1692, %v1695
      %v1697 = vmax.f32 %v1694, %v1696
      %v1698 = vsel %vm118, %v1684, -inf
      %v1699 = vsel %vm118, %v1686, -inf
      %v1700 = vsel %vm118, %v1688, -inf
      %v1701 = vmax.f32 %v1698, %v1700
      %v1702 = vsel %vm118, %v1690, -inf
      %v1703 = vmax.f32 %v1699, %v1702
      %v1704 = vmax.f32 %v1701, %v1703
      %1705 = vst.msk [vmem:[#allocation2 + $0x90] sm:$0xff] %vm118, %v1697
      %1706 = vst.msk [vmem:[#allocation2 + $0x98] sm:$0xff] %vm118, %v1704
      %s1707 = sld [smem:[#allocation8 + $0x500]]
      %v1708 = vstv %s1707
      %v1709 = vmul.f32 %v1708, %v259
      %v1710 = vmul.f32 %v1708, %v260
      %v1711 = vmul.f32 %v1708, %v261
      %v1712 = vmul.f32 %v1708, %v262
      %v1713 = vmul.f32 %v1708, %v263
      %v1714 = vmul.f32 %v1708, %v264
      %v1715 = vmul.f32 %v1708, %v265
      %v1716 = vmul.f32 %v1708, %v266
      %s1717 = sld [smem:[#allocation8 + $0x501]]
      %v1718 = vstv %s1717
      %v1719 = vmul.f32 %v1718, %v295
      %v1720 = vmul.f32 %v1718, %v296
      %v1721 = vmul.f32 %v1718, %v297
      %v1722 = vmul.f32 %v1718, %v298
      %v1723 = vmul.f32 %v1718, %v299
      %v1724 = vmul.f32 %v1718, %v300
      %v1725 = vmul.f32 %v1718, %v301
      %v1726 = vmul.f32 %v1718, %v302
      %v1727 = vadd.f32 %v1709, %v1719
      %v1728 = vadd.f32 %v1710, %v1720
      %v1729 = vadd.f32 %v1711, %v1721
      %v1730 = vadd.f32 %v1712, %v1722
      %v1731 = vadd.f32 %v1713, %v1723
      %v1732 = vadd.f32 %v1714, %v1724
      %v1733 = vadd.f32 %v1715, %v1725
      %v1734 = vadd.f32 %v1716, %v1726
      %s1735 = sld [smem:[#allocation8 + $0x502]]
      %v1736 = vstv %s1735
      %v1737 = vmul.f32 %v1736, %v331
      %v1738 = vmul.f32 %v1736, %v332
      %v1739 = vmul.f32 %v1736, %v333
      %v1740 = vmul.f32 %v1736, %v334
      %v1741 = vmul.f32 %v1736, %v335
      %v1742 = vmul.f32 %v1736, %v336
      %v1743 = vmul.f32 %v1736, %v337
      %v1744 = vmul.f32 %v1736, %v338
      %v1745 = vadd.f32 %v1727, %v1737
      %v1746 = vadd.f32 %v1728, %v1738
      %v1747 = vadd.f32 %v1729, %v1739
      %v1748 = vadd.f32 %v1730, %v1740
      %v1749 = vadd.f32 %v1731, %v1741
      %v1750 = vadd.f32 %v1732, %v1742
      %v1751 = vadd.f32 %v1733, %v1743
      %v1752 = vadd.f32 %v1734, %v1744
      %s1753 = sld [smem:[#allocation8 + $0x503]]
      %v1754 = vstv %s1753
      %v1755 = vmul.f32 %v1754, %v367
      %v1756 = vmul.f32 %v1754, %v368
      %v1757 = vmul.f32 %v1754, %v369
      %v1758 = vmul.f32 %v1754, %v370
      %v1759 = vmul.f32 %v1754, %v371
      %v1760 = vmul.f32 %v1754, %v372
      %v1761 = vmul.f32 %v1754, %v373
      %v1762 = vmul.f32 %v1754, %v374
      %v1763 = vadd.f32 %v1745, %v1755
      %v1764 = vadd.f32 %v1746, %v1756
      %v1765 = vadd.f32 %v1747, %v1757
      %v1766 = vadd.f32 %v1748, %v1758
      %v1767 = vadd.f32 %v1749, %v1759
      %v1768 = vadd.f32 %v1750, %v1760
      %v1769 = vadd.f32 %v1751, %v1761
      %v1770 = vadd.f32 %v1752, %v1762
      %s1771 = sld [smem:[#allocation8 + $0x504]]
      %v1772 = vstv %s1771
      %v1773 = vmul.f32 %v1772, %v403
      %v1774 = vmul.f32 %v1772, %v404
      %v1775 = vmul.f32 %v1772, %v405
      %v1776 = vmul.f32 %v1772, %v406
      %v1777 = vmul.f32 %v1772, %v407
      %v1778 = vmul.f32 %v1772, %v408
      %v1779 = vmul.f32 %v1772, %v409
      %v1780 = vmul.f32 %v1772, %v410
      %v1781 = vadd.f32 %v1763, %v1773
      %v1782 = vadd.f32 %v1764, %v1774
      %v1783 = vadd.f32 %v1765, %v1775
      %v1784 = vadd.f32 %v1766, %v1776
      %v1785 = vadd.f32 %v1767, %v1777
      %v1786 = vadd.f32 %v1768, %v1778
      %v1787 = vadd.f32 %v1769, %v1779
      %v1788 = vadd.f32 %v1770, %v1780
      %s1789 = sld [smem:[#allocation8 + $0x505]]
      %v1790 = vstv %s1789
      %v1791 = vmul.f32 %v1790, %v439
      %v1792 = vmul.f32 %v1790, %v440
      %v1793 = vmul.f32 %v1790, %v441
      %v1794 = vmul.f32 %v1790, %v442
      %v1795 = vmul.f32 %v1790, %v443
      %v1796 = vmul.f32 %v1790, %v444
      %v1797 = vmul.f32 %v1790, %v445
      %v1798 = vmul.f32 %v1790, %v446
      %v1799 = vadd.f32 %v1781, %v1791
      %v1800 = vadd.f32 %v1782, %v1792
      %v1801 = vadd.f32 %v1783, %v1793
      %v1802 = vadd.f32 %v1784, %v1794
      %v1803 = vadd.f32 %v1785, %v1795
      %v1804 = vadd.f32 %v1786, %v1796
      %v1805 = vadd.f32 %v1787, %v1797
      %v1806 = vadd.f32 %v1788, %v1798
      %s1807 = sld [smem:[#allocation9 + $0xa]]
      %v1808 = vstv %s1807
      %v1809 = vadd.f32 %v1799, %v1808
      %v1810 = vadd.f32 %v1800, %v1808
      %v1811 = vadd.f32 %v1801, %v1808
      %v1812 = vadd.f32 %v1802, %v1808
      %v1813 = vadd.f32 %v1803, %v1808
      %v1814 = vadd.f32 %v1804, %v1808
      %v1815 = vadd.f32 %v1805, %v1808
      %v1816 = vadd.f32 %v1806, %v1808
      %v1817 = vsel %vm118, %v1809, -inf
      %v1818 = vsel %vm118, %v1811, -inf
      %v1819 = vsel %vm118, %v1813, -inf
      %v1820 = vmax.f32 %v1817, %v1819
      %v1821 = vsel %vm118, %v1815, -inf
      %v1822 = vmax.f32 %v1818, %v1821
      %v1823 = vmax.f32 %v1820, %v1822
      %v1824 = vsel %vm118, %v1810, -inf
      %v1825 = vsel %vm118, %v1812, -inf
      %v1826 = vsel %vm118, %v1814, -inf
      %v1827 = vmax.f32 %v1824, %v1826
      %v1828 = vsel %vm118, %v1816, -inf
      %v1829 = vmax.f32 %v1825, %v1828
      %v1830 = vmax.f32 %v1827, %v1829
      %1831 = vst.msk [vmem:[#allocation2 + $0xa0] sm:$0xff] %vm118, %v1823
      %1832 = vst.msk [vmem:[#allocation2 + $0xa8] sm:$0xff] %vm118, %v1830
      %s1833 = sld [smem:[#allocation8 + $0x580]]
      %v1834 = vstv %s1833
      %v1835 = vmul.f32 %v1834, %v259
      %v1836 = vmul.f32 %v1834, %v260
      %v1837 = vmul.f32 %v1834, %v261
      %v1838 = vmul.f32 %v1834, %v262
      %v1839 = vmul.f32 %v1834, %v263
      %v1840 = vmul.f32 %v1834, %v264
      %v1841 = vmul.f32 %v1834, %v265
      %v1842 = vmul.f32 %v1834, %v266
      %s1843 = sld [smem:[#allocation8 + $0x581]]
      %v1844 = vstv %s1843
      %v1845 = vmul.f32 %v1844, %v295
      %v1846 = vmul.f32 %v1844, %v296
      %v1847 = vmul.f32 %v1844, %v297
      %v1848 = vmul.f32 %v1844, %v298
      %v1849 = vmul.f32 %v1844, %v299
      %v1850 = vmul.f32 %v1844, %v300
      %v1851 = vmul.f32 %v1844, %v301
      %v1852 = vmul.f32 %v1844, %v302
      %v1853 = vadd.f32 %v1835, %v1845
      %v1854 = vadd.f32 %v1836, %v1846
      %v1855 = vadd.f32 %v1837, %v1847
      %v1856 = vadd.f32 %v1838, %v1848
      %v1857 = vadd.f32 %v1839, %v1849
      %v1858 = vadd.f32 %v1840, %v1850
      %v1859 = vadd.f32 %v1841, %v1851
      %v1860 = vadd.f32 %v1842, %v1852
      %s1861 = sld [smem:[#allocation8 + $0x582]]
      %v1862 = vstv %s1861
      %v1863 = vmul.f32 %v1862, %v331
      %v1864 = vmul.f32 %v1862, %v332
      %v1865 = vmul.f32 %v1862, %v333
      %v1866 = vmul.f32 %v1862, %v334
      %v1867 = vmul.f32 %v1862, %v335
      %v1868 = vmul.f32 %v1862, %v336
      %v1869 = vmul.f32 %v1862, %v337
      %v1870 = vmul.f32 %v1862, %v338
      %v1871 = vadd.f32 %v1853, %v1863
      %v1872 = vadd.f32 %v1854, %v1864
      %v1873 = vadd.f32 %v1855, %v1865
      %v1874 = vadd.f32 %v1856, %v1866
      %v1875 = vadd.f32 %v1857, %v1867
      %v1876 = vadd.f32 %v1858, %v1868
      %v1877 = vadd.f32 %v1859, %v1869
      %v1878 = vadd.f32 %v1860, %v1870
      %s1879 = sld [smem:[#allocation8 + $0x583]]
      %v1880 = vstv %s1879
      %v1881 = vmul.f32 %v1880, %v367
      %v1882 = vmul.f32 %v1880, %v368
      %v1883 = vmul.f32 %v1880, %v369
      %v1884 = vmul.f32 %v1880, %v370
      %v1885 = vmul.f32 %v1880, %v371
      %v1886 = vmul.f32 %v1880, %v372
      %v1887 = vmul.f32 %v1880, %v373
      %v1888 = vmul.f32 %v1880, %v374
      %v1889 = vadd.f32 %v1871, %v1881
      %v1890 = vadd.f32 %v1872, %v1882
      %v1891 = vadd.f32 %v1873, %v1883
      %v1892 = vadd.f32 %v1874, %v1884
      %v1893 = vadd.f32 %v1875, %v1885
      %v1894 = vadd.f32 %v1876, %v1886
      %v1895 = vadd.f32 %v1877, %v1887
      %v1896 = vadd.f32 %v1878, %v1888
      %s1897 = sld [smem:[#allocation8 + $0x584]]
      %v1898 = vstv %s1897
      %v1899 = vmul.f32 %v1898, %v403
      %v1900 = vmul.f32 %v1898, %v404
      %v1901 = vmul.f32 %v1898, %v405
      %v1902 = vmul.f32 %v1898, %v406
      %v1903 = vmul.f32 %v1898, %v407
      %v1904 = vmul.f32 %v1898, %v408
      %v1905 = vmul.f32 %v1898, %v409
      %v1906 = vmul.f32 %v1898, %v410
      %v1907 = vadd.f32 %v1889, %v1899
      %v1908 = vadd.f32 %v1890, %v1900
      %v1909 = vadd.f32 %v1891, %v1901
      %v1910 = vadd.f32 %v1892, %v1902
      %v1911 = vadd.f32 %v1893, %v1903
      %v1912 = vadd.f32 %v1894, %v1904
      %v1913 = vadd.f32 %v1895, %v1905
      %v1914 = vadd.f32 %v1896, %v1906
      %s1915 = sld [smem:[#allocation8 + $0x585]]
      %v1916 = vstv %s1915
      %v1917 = vmul.f32 %v1916, %v439
      %v1918 = vmul.f32 %v1916, %v440
      %v1919 = vmul.f32 %v1916, %v441
      %v1920 = vmul.f32 %v1916, %v442
      %v1921 = vmul.f32 %v1916, %v443
      %v1922 = vmul.f32 %v1916, %v444
      %v1923 = vmul.f32 %v1916, %v445
      %v1924 = vmul.f32 %v1916, %v446
      %v1925 = vadd.f32 %v1907, %v1917
      %v1926 = vadd.f32 %v1908, %v1918
      %v1927 = vadd.f32 %v1909, %v1919
      %v1928 = vadd.f32 %v1910, %v1920
      %v1929 = vadd.f32 %v1911, %v1921
      %v1930 = vadd.f32 %v1912, %v1922
      %v1931 = vadd.f32 %v1913, %v1923
      %v1932 = vadd.f32 %v1914, %v1924
      %s1933 = sld [smem:[#allocation9 + $0xb]]
      %v1934 = vstv %s1933
      %v1935 = vadd.f32 %v1925, %v1934
      %v1936 = vadd.f32 %v1926, %v1934
      %v1937 = vadd.f32 %v1927, %v1934
      %v1938 = vadd.f32 %v1928, %v1934
      %v1939 = vadd.f32 %v1929, %v1934
      %v1940 = vadd.f32 %v1930, %v1934
      %v1941 = vadd.f32 %v1931, %v1934
      %v1942 = vadd.f32 %v1932, %v1934
      %v1943 = vsel %vm118, %v1935, -inf
      %v1944 = vsel %vm118, %v1937, -inf
      %v1945 = vsel %vm118, %v1939, -inf
      %v1946 = vmax.f32 %v1943, %v1945
      %v1947 = vsel %vm118, %v1941, -inf
      %v1948 = vmax.f32 %v1944, %v1947
      %v1949 = vmax.f32 %v1946, %v1948
      %v1950 = vsel %vm118, %v1936, -inf
      %v1951 = vsel %vm118, %v1938, -inf
      %v1952 = vsel %vm118, %v1940, -inf
      %v1953 = vmax.f32 %v1950, %v1952
      %v1954 = vsel %vm118, %v1942, -inf
      %v1955 = vmax.f32 %v1951, %v1954
      %v1956 = vmax.f32 %v1953, %v1955
      %1957 = vst.msk [vmem:[#allocation2 + $0xb0] sm:$0xff] %vm118, %v1949
      %1958 = vst.msk [vmem:[#allocation2 + $0xb8] sm:$0xff] %vm118, %v1956
      %s1959 = sld [smem:[#allocation8 + $0x600]]
      %v1960 = vstv %s1959
      %v1961 = vmul.f32 %v1960, %v259
      %v1962 = vmul.f32 %v1960, %v260
      %v1963 = vmul.f32 %v1960, %v261
      %v1964 = vmul.f32 %v1960, %v262
      %v1965 = vmul.f32 %v1960, %v263
      %v1966 = vmul.f32 %v1960, %v264
      %v1967 = vmul.f32 %v1960, %v265
      %v1968 = vmul.f32 %v1960, %v266
      %s1969 = sld [smem:[#allocation8 + $0x601]]
      %v1970 = vstv %s1969
      %v1971 = vmul.f32 %v1970, %v295
      %v1972 = vmul.f32 %v1970, %v296
      %v1973 = vmul.f32 %v1970, %v297
      %v1974 = vmul.f32 %v1970, %v298
      %v1975 = vmul.f32 %v1970, %v299
      %v1976 = vmul.f32 %v1970, %v300
      %v1977 = vmul.f32 %v1970, %v301
      %v1978 = vmul.f32 %v1970, %v302
      %v1979 = vadd.f32 %v1961, %v1971
      %v1980 = vadd.f32 %v1962, %v1972
      %v1981 = vadd.f32 %v1963, %v1973
      %v1982 = vadd.f32 %v1964, %v1974
      %v1983 = vadd.f32 %v1965, %v1975
      %v1984 = vadd.f32 %v1966, %v1976
      %v1985 = vadd.f32 %v1967, %v1977
      %v1986 = vadd.f32 %v1968, %v1978
      %s1987 = sld [smem:[#allocation8 + $0x602]]
      %v1988 = vstv %s1987
      %v1989 = vmul.f32 %v1988, %v331
      %v1990 = vmul.f32 %v1988, %v332
      %v1991 = vmul.f32 %v1988, %v333
      %v1992 = vmul.f32 %v1988, %v334
      %v1993 = vmul.f32 %v1988, %v335
      %v1994 = vmul.f32 %v1988, %v336
      %v1995 = vmul.f32 %v1988, %v337
      %v1996 = vmul.f32 %v1988, %v338
      %v1997 = vadd.f32 %v1979, %v1989
      %v1998 = vadd.f32 %v1980, %v1990
      %v1999 = vadd.f32 %v1981, %v1991
      %v2000 = vadd.f32 %v1982, %v1992
      %v2001 = vadd.f32 %v1983, %v1993
      %v2002 = vadd.f32 %v1984, %v1994
      %v2003 = vadd.f32 %v1985, %v1995
      %v2004 = vadd.f32 %v1986, %v1996
      %s2005 = sld [smem:[#allocation8 + $0x603]]
      %v2006 = vstv %s2005
      %v2007 = vmul.f32 %v2006, %v367
      %v2008 = vmul.f32 %v2006, %v368
      %v2009 = vmul.f32 %v2006, %v369
      %v2010 = vmul.f32 %v2006, %v370
      %v2011 = vmul.f32 %v2006, %v371
      %v2012 = vmul.f32 %v2006, %v372
      %v2013 = vmul.f32 %v2006, %v373
      %v2014 = vmul.f32 %v2006, %v374
      %v2015 = vadd.f32 %v1997, %v2007
      %v2016 = vadd.f32 %v1998, %v2008
      %v2017 = vadd.f32 %v1999, %v2009
      %v2018 = vadd.f32 %v2000, %v2010
      %v2019 = vadd.f32 %v2001, %v2011
      %v2020 = vadd.f32 %v2002, %v2012
      %v2021 = vadd.f32 %v2003, %v2013
      %v2022 = vadd.f32 %v2004, %v2014
      %s2023 = sld [smem:[#allocation8 + $0x604]]
      %v2024 = vstv %s2023
      %v2025 = vmul.f32 %v2024, %v403
      %v2026 = vmul.f32 %v2024, %v404
      %v2027 = vmul.f32 %v2024, %v405
      %v2028 = vmul.f32 %v2024, %v406
      %v2029 = vmul.f32 %v2024, %v407
      %v2030 = vmul.f32 %v2024, %v408
      %v2031 = vmul.f32 %v2024, %v409
      %v2032 = vmul.f32 %v2024, %v410
      %v2033 = vadd.f32 %v2015, %v2025
      %v2034 = vadd.f32 %v2016, %v2026
      %v2035 = vadd.f32 %v2017, %v2027
      %v2036 = vadd.f32 %v2018, %v2028
      %v2037 = vadd.f32 %v2019, %v2029
      %v2038 = vadd.f32 %v2020, %v2030
      %v2039 = vadd.f32 %v2021, %v2031
      %v2040 = vadd.f32 %v2022, %v2032
      %s2041 = sld [smem:[#allocation8 + $0x605]]
      %v2042 = vstv %s2041
      %v2043 = vmul.f32 %v2042, %v439
      %v2044 = vmul.f32 %v2042, %v440
      %v2045 = vmul.f32 %v2042, %v441
      %v2046 = vmul.f32 %v2042, %v442
      %v2047 = vmul.f32 %v2042, %v443
      %v2048 = vmul.f32 %v2042, %v444
      %v2049 = vmul.f32 %v2042, %v445
      %v2050 = vmul.f32 %v2042, %v446
      %v2051 = vadd.f32 %v2033, %v2043
      %v2052 = vadd.f32 %v2034, %v2044
      %v2053 = vadd.f32 %v2035, %v2045
      %v2054 = vadd.f32 %v2036, %v2046
      %v2055 = vadd.f32 %v2037, %v2047
      %v2056 = vadd.f32 %v2038, %v2048
      %v2057 = vadd.f32 %v2039, %v2049
      %v2058 = vadd.f32 %v2040, %v2050
      %s2059 = sld [smem:[#allocation9 + $0xc]]
      %v2060 = vstv %s2059
      %v2061 = vadd.f32 %v2051, %v2060
      %v2062 = vadd.f32 %v2052, %v2060
      %v2063 = vadd.f32 %v2053, %v2060
      %v2064 = vadd.f32 %v2054, %v2060
      %v2065 = vadd.f32 %v2055, %v2060
      %v2066 = vadd.f32 %v2056, %v2060
      %v2067 = vadd.f32 %v2057, %v2060
      %v2068 = vadd.f32 %v2058, %v2060
      %v2069 = vsel %vm118, %v2061, -inf
      %v2070 = vsel %vm118, %v2063, -inf
      %v2071 = vsel %vm118, %v2065, -inf
      %v2072 = vmax.f32 %v2069, %v2071
      %v2073 = vsel %vm118, %v2067, -inf
      %v2074 = vmax.f32 %v2070, %v2073
      %v2075 = vmax.f32 %v2072, %v2074
      %v2076 = vsel %vm118, %v2062, -inf
      %v2077 = vsel %vm118, %v2064, -inf
      %v2078 = vsel %vm118, %v2066, -inf
      %v2079 = vmax.f32 %v2076, %v2078
      %v2080 = vsel %vm118, %v2068, -inf
      %v2081 = vmax.f32 %v2077, %v2080
      %v2082 = vmax.f32 %v2079, %v2081
      %2083 = vst.msk [vmem:[#allocation2 + $0xc0] sm:$0xff] %vm118, %v2075
      %2084 = vst.msk [vmem:[#allocation2 + $0xc8] sm:$0xff] %vm118, %v2082
      %s2085 = sld [smem:[#allocation8 + $0x680]]
      %v2086 = vstv %s2085
      %v2087 = vmul.f32 %v2086, %v259
      %v2088 = vmul.f32 %v2086, %v260
      %v2089 = vmul.f32 %v2086, %v261
      %v2090 = vmul.f32 %v2086, %v262
      %v2091 = vmul.f32 %v2086, %v263
      %v2092 = vmul.f32 %v2086, %v264
      %v2093 = vmul.f32 %v2086, %v265
      %v2094 = vmul.f32 %v2086, %v266
      %s2095 = sld [smem:[#allocation8 + $0x681]]
      %v2096 = vstv %s2095
      %v2097 = vmul.f32 %v2096, %v295
      %v2098 = vmul.f32 %v2096, %v296
      %v2099 = vmul.f32 %v2096, %v297
      %v2100 = vmul.f32 %v2096, %v298
      %v2101 = vmul.f32 %v2096, %v299
      %v2102 = vmul.f32 %v2096, %v300
      %v2103 = vmul.f32 %v2096, %v301
      %v2104 = vmul.f32 %v2096, %v302
      %v2105 = vadd.f32 %v2087, %v2097
      %v2106 = vadd.f32 %v2088, %v2098
      %v2107 = vadd.f32 %v2089, %v2099
      %v2108 = vadd.f32 %v2090, %v2100
      %v2109 = vadd.f32 %v2091, %v2101
      %v2110 = vadd.f32 %v2092, %v2102
      %v2111 = vadd.f32 %v2093, %v2103
      %v2112 = vadd.f32 %v2094, %v2104
      %s2113 = sld [smem:[#allocation8 + $0x682]]
      %v2114 = vstv %s2113
      %v2115 = vmul.f32 %v2114, %v331
      %v2116 = vmul.f32 %v2114, %v332
      %v2117 = vmul.f32 %v2114, %v333
      %v2118 = vmul.f32 %v2114, %v334
      %v2119 = vmul.f32 %v2114, %v335
      %v2120 = vmul.f32 %v2114, %v336
      %v2121 = vmul.f32 %v2114, %v337
      %v2122 = vmul.f32 %v2114, %v338
      %v2123 = vadd.f32 %v2105, %v2115
      %v2124 = vadd.f32 %v2106, %v2116
      %v2125 = vadd.f32 %v2107, %v2117
      %v2126 = vadd.f32 %v2108, %v2118
      %v2127 = vadd.f32 %v2109, %v2119
      %v2128 = vadd.f32 %v2110, %v2120
      %v2129 = vadd.f32 %v2111, %v2121
      %v2130 = vadd.f32 %v2112, %v2122
      %s2131 = sld [smem:[#allocation8 + $0x683]]
      %v2132 = vstv %s2131
      %v2133 = vmul.f32 %v2132, %v367
      %v2134 = vmul.f32 %v2132, %v368
      %v2135 = vmul.f32 %v2132, %v369
      %v2136 = vmul.f32 %v2132, %v370
      %v2137 = vmul.f32 %v2132, %v371
      %v2138 = vmul.f32 %v2132, %v372
      %v2139 = vmul.f32 %v2132, %v373
      %v2140 = vmul.f32 %v2132, %v374
      %v2141 = vadd.f32 %v2123, %v2133
      %v2142 = vadd.f32 %v2124, %v2134
      %v2143 = vadd.f32 %v2125, %v2135
      %v2144 = vadd.f32 %v2126, %v2136
      %v2145 = vadd.f32 %v2127, %v2137
      %v2146 = vadd.f32 %v2128, %v2138
      %v2147 = vadd.f32 %v2129, %v2139
      %v2148 = vadd.f32 %v2130, %v2140
      %s2149 = sld [smem:[#allocation8 + $0x684]]
      %v2150 = vstv %s2149
      %v2151 = vmul.f32 %v2150, %v403
      %v2152 = vmul.f32 %v2150, %v404
      %v2153 = vmul.f32 %v2150, %v405
      %v2154 = vmul.f32 %v2150, %v406
      %v2155 = vmul.f32 %v2150, %v407
      %v2156 = vmul.f32 %v2150, %v408
      %v2157 = vmul.f32 %v2150, %v409
      %v2158 = vmul.f32 %v2150, %v410
      %v2159 = vadd.f32 %v2141, %v2151
      %v2160 = vadd.f32 %v2142, %v2152
      %v2161 = vadd.f32 %v2143, %v2153
      %v2162 = vadd.f32 %v2144, %v2154
      %v2163 = vadd.f32 %v2145, %v2155
      %v2164 = vadd.f32 %v2146, %v2156
      %v2165 = vadd.f32 %v2147, %v2157
      %v2166 = vadd.f32 %v2148, %v2158
      %s2167 = sld [smem:[#allocation8 + $0x685]]
      %v2168 = vstv %s2167
      %v2169 = vmul.f32 %v2168, %v439
      %v2170 = vmul.f32 %v2168, %v440
      %v2171 = vmul.f32 %v2168, %v441
      %v2172 = vmul.f32 %v2168, %v442
      %v2173 = vmul.f32 %v2168, %v443
      %v2174 = vmul.f32 %v2168, %v444
      %v2175 = vmul.f32 %v2168, %v445
      %v2176 = vmul.f32 %v2168, %v446
      %v2177 = vadd.f32 %v2159, %v2169
      %v2178 = vadd.f32 %v2160, %v2170
      %v2179 = vadd.f32 %v2161, %v2171
      %v2180 = vadd.f32 %v2162, %v2172
      %v2181 = vadd.f32 %v2163, %v2173
      %v2182 = vadd.f32 %v2164, %v2174
      %v2183 = vadd.f32 %v2165, %v2175
      %v2184 = vadd.f32 %v2166, %v2176
      %s2185 = sld [smem:[#allocation9 + $0xd]]
      %v2186 = vstv %s2185
      %v2187 = vadd.f32 %v2177, %v2186
      %v2188 = vadd.f32 %v2178, %v2186
      %v2189 = vadd.f32 %v2179, %v2186
      %v2190 = vadd.f32 %v2180, %v2186
      %v2191 = vadd.f32 %v2181, %v2186
      %v2192 = vadd.f32 %v2182, %v2186
      %v2193 = vadd.f32 %v2183, %v2186
      %v2194 = vadd.f32 %v2184, %v2186
      %v2195 = vsel %vm118, %v2187, -inf
      %v2196 = vsel %vm118, %v2189, -inf
      %v2197 = vsel %vm118, %v2191, -inf
      %v2198 = vmax.f32 %v2195, %v2197
      %v2199 = vsel %vm118, %v2193, -inf
      %v2200 = vmax.f32 %v2196, %v2199
      %v2201 = vmax.f32 %v2198, %v2200
      %v2202 = vsel %vm118, %v2188, -inf
      %v2203 = vsel %vm118, %v2190, -inf
      %v2204 = vsel %vm118, %v2192, -inf
      %v2205 = vmax.f32 %v2202, %v2204
      %v2206 = vsel %vm118, %v2194, -inf
      %v2207 = vmax.f32 %v2203, %v2206
      %v2208 = vmax.f32 %v2205, %v2207
      %2209 = vst.msk [vmem:[#allocation2 + $0xd0] sm:$0xff] %vm118, %v2201
      %2210 = vst.msk [vmem:[#allocation2 + $0xd8] sm:$0xff] %vm118, %v2208
      %s2211 = sld [smem:[#allocation8 + $0x700]]
      %v2212 = vstv %s2211
      %v2213 = vmul.f32 %v2212, %v259
      %v2214 = vmul.f32 %v2212, %v260
      %v2215 = vmul.f32 %v2212, %v261
      %v2216 = vmul.f32 %v2212, %v262
      %v2217 = vmul.f32 %v2212, %v263
      %v2218 = vmul.f32 %v2212, %v264
      %v2219 = vmul.f32 %v2212, %v265
      %v2220 = vmul.f32 %v2212, %v266
      %s2221 = sld [smem:[#allocation8 + $0x701]]
      %v2222 = vstv %s2221
      %v2223 = vmul.f32 %v2222, %v295
      %v2224 = vmul.f32 %v2222, %v296
      %v2225 = vmul.f32 %v2222, %v297
      %v2226 = vmul.f32 %v2222, %v298
      %v2227 = vmul.f32 %v2222, %v299
      %v2228 = vmul.f32 %v2222, %v300
      %v2229 = vmul.f32 %v2222, %v301
      %v2230 = vmul.f32 %v2222, %v302
      %v2231 = vadd.f32 %v2213, %v2223
      %v2232 = vadd.f32 %v2214, %v2224
      %v2233 = vadd.f32 %v2215, %v2225
      %v2234 = vadd.f32 %v2216, %v2226
      %v2235 = vadd.f32 %v2217, %v2227
      %v2236 = vadd.f32 %v2218, %v2228
      %v2237 = vadd.f32 %v2219, %v2229
      %v2238 = vadd.f32 %v2220, %v2230
      %s2239 = sld [smem:[#allocation8 + $0x702]]
      %v2240 = vstv %s2239
      %v2241 = vmul.f32 %v2240, %v331
      %v2242 = vmul.f32 %v2240, %v332
      %v2243 = vmul.f32 %v2240, %v333
      %v2244 = vmul.f32 %v2240, %v334
      %v2245 = vmul.f32 %v2240, %v335
      %v2246 = vmul.f32 %v2240, %v336
      %v2247 = vmul.f32 %v2240, %v337
      %v2248 = vmul.f32 %v2240, %v338
      %v2249 = vadd.f32 %v2231, %v2241
      %v2250 = vadd.f32 %v2232, %v2242
      %v2251 = vadd.f32 %v2233, %v2243
      %v2252 = vadd.f32 %v2234, %v2244
      %v2253 = vadd.f32 %v2235, %v2245
      %v2254 = vadd.f32 %v2236, %v2246
      %v2255 = vadd.f32 %v2237, %v2247
      %v2256 = vadd.f32 %v2238, %v2248
      %s2257 = sld [smem:[#allocation8 + $0x703]]
      %v2258 = vstv %s2257
      %v2259 = vmul.f32 %v2258, %v367
      %v2260 = vmul.f32 %v2258, %v368
      %v2261 = vmul.f32 %v2258, %v369
      %v2262 = vmul.f32 %v2258, %v370
      %v2263 = vmul.f32 %v2258, %v371
      %v2264 = vmul.f32 %v2258, %v372
      %v2265 = vmul.f32 %v2258, %v373
      %v2266 = vmul.f32 %v2258, %v374
      %v2267 = vadd.f32 %v2249, %v2259
      %v2268 = vadd.f32 %v2250, %v2260
      %v2269 = vadd.f32 %v2251, %v2261
      %v2270 = vadd.f32 %v2252, %v2262
      %v2271 = vadd.f32 %v2253, %v2263
      %v2272 = vadd.f32 %v2254, %v2264
      %v2273 = vadd.f32 %v2255, %v2265
      %v2274 = vadd.f32 %v2256, %v2266
      %s2275 = sld [smem:[#allocation8 + $0x704]]
      %v2276 = vstv %s2275
      %v2277 = vmul.f32 %v2276, %v403
      %v2278 = vmul.f32 %v2276, %v404
      %v2279 = vmul.f32 %v2276, %v405
      %v2280 = vmul.f32 %v2276, %v406
      %v2281 = vmul.f32 %v2276, %v407
      %v2282 = vmul.f32 %v2276, %v408
      %v2283 = vmul.f32 %v2276, %v409
      %v2284 = vmul.f32 %v2276, %v410
      %v2285 = vadd.f32 %v2267, %v2277
      %v2286 = vadd.f32 %v2268, %v2278
      %v2287 = vadd.f32 %v2269, %v2279
      %v2288 = vadd.f32 %v2270, %v2280
      %v2289 = vadd.f32 %v2271, %v2281
      %v2290 = vadd.f32 %v2272, %v2282
      %v2291 = vadd.f32 %v2273, %v2283
      %v2292 = vadd.f32 %v2274, %v2284
      %s2293 = sld [smem:[#allocation8 + $0x705]]
      %v2294 = vstv %s2293
      %v2295 = vmul.f32 %v2294, %v439
      %v2296 = vmul.f32 %v2294, %v440
      %v2297 = vmul.f32 %v2294, %v441
      %v2298 = vmul.f32 %v2294, %v442
      %v2299 = vmul.f32 %v2294, %v443
      %v2300 = vmul.f32 %v2294, %v444
      %v2301 = vmul.f32 %v2294, %v445
      %v2302 = vmul.f32 %v2294, %v446
      %v2303 = vadd.f32 %v2285, %v2295
      %v2304 = vadd.f32 %v2286, %v2296
      %v2305 = vadd.f32 %v2287, %v2297
      %v2306 = vadd.f32 %v2288, %v2298
      %v2307 = vadd.f32 %v2289, %v2299
      %v2308 = vadd.f32 %v2290, %v2300
      %v2309 = vadd.f32 %v2291, %v2301
      %v2310 = vadd.f32 %v2292, %v2302
      %s2311 = sld [smem:[#allocation9 + $0xe]]
      %v2312 = vstv %s2311
      %v2313 = vadd.f32 %v2303, %v2312
      %v2314 = vadd.f32 %v2304, %v2312
      %v2315 = vadd.f32 %v2305, %v2312
      %v2316 = vadd.f32 %v2306, %v2312
      %v2317 = vadd.f32 %v2307, %v2312
      %v2318 = vadd.f32 %v2308, %v2312
      %v2319 = vadd.f32 %v2309, %v2312
      %v2320 = vadd.f32 %v2310, %v2312
      %v2321 = vsel %vm118, %v2313, -inf
      %v2322 = vsel %vm118, %v2315, -inf
      %v2323 = vsel %vm118, %v2317, -inf
      %v2324 = vmax.f32 %v2321, %v2323
      %v2325 = vsel %vm118, %v2319, -inf
      %v2326 = vmax.f32 %v2322, %v2325
      %v2327 = vmax.f32 %v2324, %v2326
      %v2328 = vsel %vm118, %v2314, -inf
      %v2329 = vsel %vm118, %v2316, -inf
      %v2330 = vsel %vm118, %v2318, -inf
      %v2331 = vmax.f32 %v2328, %v2330
      %v2332 = vsel %vm118, %v2320, -inf
      %v2333 = vmax.f32 %v2329, %v2332
      %v2334 = vmax.f32 %v2331, %v2333
      %2335 = vst.msk [vmem:[#allocation2 + $0xe0] sm:$0xff] %vm118, %v2327
      %2336 = vst.msk [vmem:[#allocation2 + $0xe8] sm:$0xff] %vm118, %v2334
      %s2337 = sld [smem:[#allocation8 + $0x780]]
      %v2338 = vstv %s2337
      %v2339 = vmul.f32 %v2338, %v259
      %v2340 = vmul.f32 %v2338, %v260
      %v2341 = vmul.f32 %v2338, %v261
      %v2342 = vmul.f32 %v2338, %v262
      %v2343 = vmul.f32 %v2338, %v263
      %v2344 = vmul.f32 %v2338, %v264
      %v2345 = vmul.f32 %v2338, %v265
      %v2346 = vmul.f32 %v2338, %v266
      %s2347 = sld [smem:[#allocation8 + $0x781]]
      %v2348 = vstv %s2347
      %v2349 = vmul.f32 %v2348, %v295
      %v2350 = vmul.f32 %v2348, %v296
      %v2351 = vmul.f32 %v2348, %v297
      %v2352 = vmul.f32 %v2348, %v298
      %v2353 = vmul.f32 %v2348, %v299
      %v2354 = vmul.f32 %v2348, %v300
      %v2355 = vmul.f32 %v2348, %v301
      %v2356 = vmul.f32 %v2348, %v302
      %v2357 = vadd.f32 %v2339, %v2349
      %v2358 = vadd.f32 %v2340, %v2350
      %v2359 = vadd.f32 %v2341, %v2351
      %v2360 = vadd.f32 %v2342, %v2352
      %v2361 = vadd.f32 %v2343, %v2353
      %v2362 = vadd.f32 %v2344, %v2354
      %v2363 = vadd.f32 %v2345, %v2355
      %v2364 = vadd.f32 %v2346, %v2356
      %s2365 = sld [smem:[#allocation8 + $0x782]]
      %v2366 = vstv %s2365
      %v2367 = vmul.f32 %v2366, %v331
      %v2368 = vmul.f32 %v2366, %v332
      %v2369 = vmul.f32 %v2366, %v333
      %v2370 = vmul.f32 %v2366, %v334
      %v2371 = vmul.f32 %v2366, %v335
      %v2372 = vmul.f32 %v2366, %v336
      %v2373 = vmul.f32 %v2366, %v337
      %v2374 = vmul.f32 %v2366, %v338
      %v2375 = vadd.f32 %v2357, %v2367
      %v2376 = vadd.f32 %v2358, %v2368
      %v2377 = vadd.f32 %v2359, %v2369
      %v2378 = vadd.f32 %v2360, %v2370
      %v2379 = vadd.f32 %v2361, %v2371
      %v2380 = vadd.f32 %v2362, %v2372
      %v2381 = vadd.f32 %v2363, %v2373
      %v2382 = vadd.f32 %v2364, %v2374
      %s2383 = sld [smem:[#allocation8 + $0x783]]
      %v2384 = vstv %s2383
      %v2385 = vmul.f32 %v2384, %v367
      %v2386 = vmul.f32 %v2384, %v368
      %v2387 = vmul.f32 %v2384, %v369
      %v2388 = vmul.f32 %v2384, %v370
      %v2389 = vmul.f32 %v2384, %v371
      %v2390 = vmul.f32 %v2384, %v372
      %v2391 = vmul.f32 %v2384, %v373
      %v2392 = vmul.f32 %v2384, %v374
      %v2393 = vadd.f32 %v2375, %v2385
      %v2394 = vadd.f32 %v2376, %v2386
      %v2395 = vadd.f32 %v2377, %v2387
      %v2396 = vadd.f32 %v2378, %v2388
      %v2397 = vadd.f32 %v2379, %v2389
      %v2398 = vadd.f32 %v2380, %v2390
      %v2399 = vadd.f32 %v2381, %v2391
      %v2400 = vadd.f32 %v2382, %v2392
      %s2401 = sld [smem:[#allocation8 + $0x784]]
      %v2402 = vstv %s2401
      %v2403 = vmul.f32 %v2402, %v403
      %v2404 = vmul.f32 %v2402, %v404
      %v2405 = vmul.f32 %v2402, %v405
      %v2406 = vmul.f32 %v2402, %v406
      %v2407 = vmul.f32 %v2402, %v407
      %v2408 = vmul.f32 %v2402, %v408
      %v2409 = vmul.f32 %v2402, %v409
      %v2410 = vmul.f32 %v2402, %v410
      %v2411 = vadd.f32 %v2393, %v2403
      %v2412 = vadd.f32 %v2394, %v2404
      %v2413 = vadd.f32 %v2395, %v2405
      %v2414 = vadd.f32 %v2396, %v2406
      %v2415 = vadd.f32 %v2397, %v2407
      %v2416 = vadd.f32 %v2398, %v2408
      %v2417 = vadd.f32 %v2399, %v2409
      %v2418 = vadd.f32 %v2400, %v2410
      %s2419 = sld [smem:[#allocation8 + $0x785]]
      %v2420 = vstv %s2419
      %v2421 = vmul.f32 %v2420, %v439
      %v2422 = vmul.f32 %v2420, %v440
      %v2423 = vmul.f32 %v2420, %v441
      %v2424 = vmul.f32 %v2420, %v442
      %v2425 = vmul.f32 %v2420, %v443
      %v2426 = vmul.f32 %v2420, %v444
      %v2427 = vmul.f32 %v2420, %v445
      %v2428 = vmul.f32 %v2420, %v446
      %v2429 = vadd.f32 %v2411, %v2421
      %v2430 = vadd.f32 %v2412, %v2422
      %v2431 = vadd.f32 %v2413, %v2423
      %v2432 = vadd.f32 %v2414, %v2424
      %v2433 = vadd.f32 %v2415, %v2425
      %v2434 = vadd.f32 %v2416, %v2426
      %v2435 = vadd.f32 %v2417, %v2427
      %v2436 = vadd.f32 %v2418, %v2428
      %s2437 = sld [smem:[#allocation9 + $0xf]]
      %v2438 = vstv %s2437
      %v2439 = vadd.f32 %v2429, %v2438
      %v2440 = vadd.f32 %v2430, %v2438
      %v2441 = vadd.f32 %v2431, %v2438
      %v2442 = vadd.f32 %v2432, %v2438
      %v2443 = vadd.f32 %v2433, %v2438
      %v2444 = vadd.f32 %v2434, %v2438
      %v2445 = vadd.f32 %v2435, %v2438
      %v2446 = vadd.f32 %v2436, %v2438
      %v2447 = vsel %vm118, %v2439, -inf
      %v2448 = vsel %vm118, %v2441, -inf
      %v2449 = vsel %vm118, %v2443, -inf
      %v2450 = vmax.f32 %v2447, %v2449
      %v2451 = vsel %vm118, %v2445, -inf
      %v2452 = vmax.f32 %v2448, %v2451
      %v2453 = vmax.f32 %v2450, %v2452
      %v2454 = vsel %vm118, %v2440, -inf
      %v2455 = vsel %vm118, %v2442, -inf
      %v2456 = vsel %vm118, %v2444, -inf
      %v2457 = vmax.f32 %v2454, %v2456
      %v2458 = vsel %vm118, %v2446, -inf
      %v2459 = vmax.f32 %v2455, %v2458
      %v2460 = vmax.f32 %v2457, %v2459
      %2461 = vst.msk [vmem:[#allocation2 + $0xf0] sm:$0xff] %vm118, %v2453
      %2462 = vst.msk [vmem:[#allocation2 + $0xf8] sm:$0xff] %vm118, %v2460
      %vm2463 = vcmask 11264
      %2464 = vst.msk [vmem:[#allocation3] sm:$0xf] %vm2463, 0.0
    $region57: #{_lambda_.1} parent=1 // pred_fallthru
      _
    %v2465 = vld [vmem:[#allocation3] sm:$0xf]
    %v2466 = vld [vmem:[%s5] sm:$0xff]
    %s2467 = smul.u32 0, 256
    %s2468 = scalar_lea.vmem [#allocation2], %s2467
    %v2469 = vld [vmem:[%s2468] sm:$0xff]
    %v2470 = vld [vmem:[%s2468 + $0x8] sm:$0xff]
    %v2471 = vld [vmem:[%s2468 + $0x10] sm:$0xff]
    %v2472 = vld [vmem:[%s2468 + $0x18] sm:$0xff]
    %v2473 = vld [vmem:[%s2468 + $0x20] sm:$0xff]
    %v2474 = vld [vmem:[%s2468 + $0x28] sm:$0xff]
    %v2475 = vld [vmem:[%s2468 + $0x30] sm:$0xff]
    %v2476 = vld [vmem:[%s2468 + $0x38] sm:$0xff]
    %v2477 = vld [vmem:[%s2468 + $0x40] sm:$0xff]
    %v2478 = vld [vmem:[%s2468 + $0x48] sm:$0xff]
    %v2479 = vld [vmem:[%s2468 + $0x50] sm:$0xff]
    %v2480 = vld [vmem:[%s2468 + $0x58] sm:$0xff]
    %v2481 = vld [vmem:[%s2468 + $0x60] sm:$0xff]
    %v2482 = vld [vmem:[%s2468 + $0x68] sm:$0xff]
    %v2483 = vld [vmem:[%s2468 + $0x70] sm:$0xff]
    %v2484 = vld [vmem:[%s2468 + $0x78] sm:$0xff]
    %v2485 = vld [vmem:[%s2468 + $0x80] sm:$0xff]
    %v2486 = vld [vmem:[%s2468 + $0x88] sm:$0xff]
    %v2487 = vld [vmem:[%s2468 + $0x90] sm:$0xff]
    %v2488 = vld [vmem:[%s2468 + $0x98] sm:$0xff]
    %v2489 = vld [vmem:[%s2468 + $0xa0] sm:$0xff]
    %v2490 = vld [vmem:[%s2468 + $0xa8] sm:$0xff]
    %v2491 = vld [vmem:[%s2468 + $0xb0] sm:$0xff]
    %v2492 = vld [vmem:[%s2468 + $0xb8] sm:$0xff]
    %v2493 = vld [vmem:[%s2468 + $0xc0] sm:$0xff]
    %v2494 = vld [vmem:[%s2468 + $0xc8] sm:$0xff]
    %v2495 = vld [vmem:[%s2468 + $0xd0] sm:$0xff]
    %v2496 = vld [vmem:[%s2468 + $0xd8] sm:$0xff]
    %v2497 = vld [vmem:[%s2468 + $0xe0] sm:$0xff]
    %v2498 = vld [vmem:[%s2468 + $0xe8] sm:$0xff]
    %v2499 = vld [vmem:[%s2468 + $0xf0] sm:$0xff]
    %v2500 = vld [vmem:[%s2468 + $0xf8] sm:$0xff]
    %2502 = vst [vmem:[#allocation1] ss:$2 sm:$0xff] %v2466
    %v2503 = vld.sshfl [vmem:[#allocation1] sm:$0xff pattern:$0x75316420]
    %v2504 = vld.sshfl [vmem:[#allocation1 + $0x8] sm:$0xff pattern:$0x75316420]
    %2507 = vmatpush.msra.mxu0 %v2484
    %2508 = vmatpush.msra.mxu0 %v2483
    %2509 = vmatpush.msra.mxu0 %v2482
    %2510 = vmatpush.msra.mxu0 %v2481
    %2511 = vmatpush.msra.mxu0 %v2480
    %2512 = vmatpush.msra.mxu0 %v2479
    %2513 = vmatpush.msra.mxu0 %v2478
    %2514 = vmatpush.msra.mxu0 %v2477
    %2515 = vmatpush.msra.mxu0 %v2476
    %2516 = vmatpush.msra.mxu0 %v2475
    %2517 = vmatpush.msra.mxu0 %v2474
    %2518 = vmatpush.msra.mxu0 %v2473
    %2519 = vmatpush.msra.mxu0 %v2472
    %2520 = vmatpush.msra.mxu0 %v2471
    %2521 = vmatpush.msra.mxu0 %v2470
    %2522 = vmatpush.msra.mxu0 %v2469
    %2523 = vmatmul.f32.gmra.mxu0 %v2503
    %v2524 = vpop.f32.mrf.mxu0
    %v2525 = vadd.f32 0.0, %v2524
    %2526 = vdwg.mxu0
    %2527 = vmatpush.msra.mxu0 %v2500
    %2528 = vmatpush.msra.mxu0 %v2499
    %2529 = vmatpush.msra.mxu0 %v2498
    %2530 = vmatpush.msra.mxu0 %v2497
    %2531 = vmatpush.msra.mxu0 %v2496
    %2532 = vmatpush.msra.mxu0 %v2495
    %2533 = vmatpush.msra.mxu0 %v2494
    %2534 = vmatpush.msra.mxu0 %v2493
    %2535 = vmatpush.msra.mxu0 %v2492
    %2536 = vmatpush.msra.mxu0 %v2491
    %2537 = vmatpush.msra.mxu0 %v2490
    %2538 = vmatpush.msra.mxu0 %v2489
    %2539 = vmatpush.msra.mxu0 %v2488
    %2540 = vmatpush.msra.mxu0 %v2487
    %2541 = vmatpush.msra.mxu0 %v2486
    %2542 = vmatpush.msra.mxu0 %v2485
    %2543 = vmatmul.f32.gmra.mxu0 %v2504
    %v2544 = vpop.f32.mrf.mxu0
    %v2545 = vadd.f32 %v2525, %v2544
    %2546 = vdwg.mxu0
    %v2547 = vadd.f32 %v2465, %v2545
    %vm2548 = vcmask 11264
    %2549 = vst.msk [vmem:[#allocation3] sm:$0xf] %vm2548, %v2547
    // Predicated region
    $region58: #{_lambda_.1} parent=1 // pred_check
      %p2550 = pneg %p82
    $region59: #{_lambda_.1} parent=1 // pred_check_branch
      %2552 = sbr.rel (%p2550) target = $region61
    $region60: #{_lambda_.1} parent=1 // pred_region
      %v2553 = vld [vmem:[#allocation3] sm:$0xf]
      %v2554 = vld [vmem:[%s6] sm:$0xf]
      %2556 = vset.pattern.permute.xlu0 0
      %2557 = vperm.xlu0 %2556, %v2554
      %v2558 = vpop.permute.xlu0 %2557
      %v2560 = vadd.f32 %v2553, %v2558
      %v2561 = vmax.f32 %v2560, 0.0
      %v2562 = vld [vmem:[%s7] sm:$0xff]
      %v2563 = vld [vmem:[%s8] sm:$0xff]
      %2565 = vset.pattern.permute.xlu0 0
      %2566 = vperm.xlu0 %2565, %v2563
      %v2567 = vpop.permute.xlu0 %2566
      %vm2569 = vcmask 31744
      %v2571 = vsel %vm2569, %v2562, 0
      %vm2573 = vcmask 1043456
      %v2575 = vsel %vm2573, %v2561, 0
      %2577 = vmatpush.msra.mxu0 0.0
      %2578 = vmatpush.msra.mxu0 0.0
      %2579 = vmatpush.msra.mxu0 0.0
      %2580 = vmatpush.msra.mxu0 0.0
      %2581 = vmatpush.msra.mxu0 0.0
      %2582 = vmatpush.msra.mxu0 0.0
      %2583 = vmatpush.msra.mxu0 0.0
      %2584 = vmatpush.msra.mxu0 0.0
      %2585 = vmatpush.msra.mxu0 0.0
      %2586 = vmatpush.msra.mxu0 0.0
      %2587 = vmatpush.msra.mxu0 0.0
      %2588 = vmatpush.msra.mxu0 0.0
      %2589 = vmatpush.msra.mxu0 0.0
      %2590 = vmatpush.msra.mxu0 0.0
      %2591 = vmatpush.msra.mxu0 0.0
      %2592 = vmatpush.msra.mxu0 %v2575
      %2593 = vmatmul.f32.gmra.mxu0 %v2571
      %v2594 = vpop.f32.mrf.mxu0
      %v2595 = vadd.f32 %v2567, %v2594
      %2596 = vdwg.mxu0
      %vm2597 = vcmask 15360
      %2598 = vst.msk [vmem:[%s9] sm:$0xff] %vm2597, %v2595
    $region61: #{_lambda_.1} parent=1 // pred_fallthru
      _
    // Predicated region
    $region62: #{_lambda_.1} parent=1 // pred_check
      _
    $region63: #{_lambda_.1} parent=1 // pred_check_branch
      %2600 = sbr.rel (0) target = $region65
    $region64: #{_lambda_.1} parent=1 // pred_region
      _
    $region65: #{_lambda_.1} parent=1 // pred_fallthru
      _
    // Predicated region
    $region66: #{_lambda_.1} parent=1 // pred_check
      _
    $region67: #{_lambda_.1} parent=1 // pred_check_branch
      %2602 = sbr.rel (0) target = $region69
    $region68: #{_lambda_.1} parent=1 // pred_region
      _
    $region69: #{_lambda_.1} parent=1 // pred_fallthru
      _
    %2603 = vsyncpa [#allocation5], 1
    %2604 = vsyncpa [#allocation7], 1
    %2605 = vsyncpa [#allocation10], 1

</llo_original>
